<compile_context>
chip_gen: v6e
topology: v6e:2x2x1
jax: 0.10.0
libtpu: 0.0.40
codegen_flags: <defaults>
</compile_context>

<pallas_src>
import functools

import jax
import jax.numpy as jnp
from jax.experimental import pallas as pl
from jax.experimental.pallas import tpu as pltpu

K = 5  # conv kernel size (both layers of the module)


def fused_convnet_kernel(p1_ref, w1_ref, b1_ref, w2_ref, b2_ref, o_ref,
                         *, H1, W1p, H2, W2):
    """relu(conv2(relu(conv1(x)))) for one image, all intermediates in vregs.

    p1_ref: (1, H1*W1p, K*K)   conv1 im2col patches (width padded W1 -> W1p)
    w1_ref: (K*K, C1)          conv1 weights, im2col layout
    b1_ref: (1, C1)
    w2_ref: (K*K, C1, C2)      conv2 weights, one (C1, C2) matrix per tap
    b2_ref: (1, C2)
    o_ref : (1, C2, H2*W2)     output, NCHW-flat per image (spatial on lanes)
    """
    KK, C1 = w1_ref.shape
    C2 = w2_ref.shape[-1]
    M2 = H2 * W2

    # ---- conv1 + ReLU: ONE im2col matmul on the MXU ------------------------
    p1 = p1_ref[0]                                            # (H1*W1p, KK)
    h1 = jnp.dot(p1, w1_ref[...], preferred_element_type=jnp.float32)
    h1 = jnp.maximum(h1 + b1_ref[...], 0.0)                   # (H1*W1p, C1)
    # Free reinterpretation: W1p % 8 == 0, so splitting the sublane axis into
    # (H1, W1p) groups of whole 8-row tiles needs no relayout.
    h1 = h1.reshape(H1, W1p, C1)

    # ---- conv2 + ReLU: 25 accumulating (M2, C1) @ (C1, C2) MXU matmuls -----
    # Windows are taken straight from the h1 value: no im2col scratch (no
    # lane-unaligned 20-wide column stores) and no h1 VMEM round trip.
    # The kw sublane realign is hoisted out of the kh loop (5, not 25).
    acc = jnp.zeros((M2, C2), jnp.float32)
    for kw in range(K):
        h1_kw = h1[:, kw:kw + W2, :]                          # (H1, W2, C1)
        for kh in range(K):
            win = h1_kw[kh:kh + H2].reshape(M2, C1)           # free 8-aligned merge
            acc = acc + jnp.dot(win, w2_ref[kh * K + kw],
                                preferred_element_type=jnp.float32)
    out = jnp.maximum(acc + b2_ref[...], 0.0)                 # (M2, C2)

    # NCHW-flat store: one small in-kernel transpose so the lane axis of the
    # output is H2*W2 = 64 (review: keep spatial on lanes, wrapper reshape free).
    o_ref[...] = jnp.transpose(out, (1, 0))[None].astype(o_ref.dtype)


def my_model_forward_impl(x_nchw, w1, b1, w2, b2):
    """x_nchw: (N, 1, H, W); w*: (KH, KW, Cin, Cout) HWIO; b*: (1, Cout)."""
    N, Cin, H, W = x_nchw.shape
    assert Cin == 1, "module is Conv2d(1, 20, 5)"
    KH, KW, _, C1 = w1.shape
    C2 = w2.shape[-1]
    H1, W1 = H - KH + 1, W - KW + 1
    H2, W2 = H1 - KH + 1, W1 - KW + 1
    W1p = ((W1 + 7) // 8) * 8      # pad conv1-output width to a sublane multiple

    # Cin == 1 -> squeezing the channel is a free reshape (review item 1).
    x2 = x_nchw.reshape(N, H, W)

    # conv1 im2col on the XLA side (review item 2): (N, H1, W1, KH*KW),
    # width-padded to W1p so the in-kernel reshape to (H1, W1p, C1) is free.
    patches = jnp.stack(
        [x2[:, kh:kh + H1, kw:kw + W1]
         for kh in range(KH) for kw in range(KW)], axis=-1)
    patches = jnp.pad(patches, ((0, 0), (0, 0), (0, W1p - W1), (0, 0)))
    p1 = patches.reshape(N, H1 * W1p, KH * KW)                # (N, 192, 25)

    # Metadata-only reshapes into the kernel's weight layouts.
    w1_col = w1.reshape(KH * KW, C1)                          # (25, 20)
    w2_tap = w2.reshape(KH * KW, C1, C2)                      # (25, 20, 20)

    kernel = functools.partial(fused_convnet_kernel,
                               H1=H1, W1p=W1p, H2=H2, W2=W2)

    out_flat = pl.pallas_call(
        kernel,
        out_shape=jax.ShapeDtypeStruct((N, C2, H2 * W2), x_nchw.dtype),
        grid=(N,),
        in_specs=[
            pl.BlockSpec((1, H1 * W1p, KH * KW), lambda n: (n, 0, 0)),
            pl.BlockSpec((KH * KW, C1), lambda n: (0, 0)),
            pl.BlockSpec((1, C1), lambda n: (0, 0)),
            pl.BlockSpec((KH * KW, C1, C2), lambda n: (0, 0, 0)),
            pl.BlockSpec((1, C2), lambda n: (0, 0)),
        ],
        out_specs=pl.BlockSpec((1, C2, H2 * W2), lambda n: (n, 0, 0)),
        compiler_params=pltpu.CompilerParams(
            dimension_semantics=("parallel",)),   # 2 images -> 2 v7x TCs
    )(p1, w1_col, b1, w2_tap, b2)

    # Free reshape: (N, C2, H2*W2) -> (N, C2, H2, W2) == NCHW.
    return out_flat.reshape(N, C2, H2, W2)


my_model_forward = jax.jit(my_model_forward_impl)


def init_params(key):
    """Deterministic parameter init matching the PyTorch module's shapes.

    conv1: weight (20, 1, 5, 5), bias (20,)   -> stored as HWIO (5, 5, 1, 20)
    conv2: weight (20, 20, 5, 5), bias (20,)  -> stored as HWIO (5, 5, 20, 20)
    NOTE: real PyTorch OIHW weights must be permuted (2,3,1,0) -> HWIO first.
    """
    k1, k2, k3, k4 = jax.random.split(key, 4)
    w1 = jax.random.normal(k1, (5, 5, 1, 20), jnp.float32) * 0.1
    b1 = jax.random.normal(k2, (1, 20), jnp.float32) * 0.1
    w2 = jax.random.normal(k3, (5, 5, 20, 20), jnp.float32) * 0.05
    b2 = jax.random.normal(k4, (1, 20), jnp.float32) * 0.1
    return (w1, b1), (w2, b2)


def _reference_forward(x_nchw, w1, b1, w2, b2):
    """Pure-JAX reference (lax conv) for correctness checking."""
    def conv(x, w, b):
        y = jax.lax.conv_general_dilated(
            x, w, window_strides=(1, 1), padding="VALID",
            dimension_numbers=("NCHW", "HWIO", "NCHW"))
        return jnp.maximum(y + b.reshape(1, -1, 1, 1), 0.0)
    return conv(conv(x_nchw, w1, b1), w2, b2)


if __name__ == "__main__":
    key = jax.random.PRNGKey(0)
    kx, kp = jax.random.split(key)

    # Input consistent with Conv2d(1, 20, 5): 1 input channel, spatial >= 9.
    x = jax.random.normal(kx, (2, 1, 16, 16), jnp.float32)   # NCHW
    (w1, b1), (w2, b2) = init_params(kp)

    out = my_model_forward(x, w1, b1, w2, b2)
    out = jax.block_until_ready(out)

    assert out.shape == (2, 20, 8, 8), out.shape

    ref = _reference_forward(x, w1, b1, w2, b2)
    assert jnp.allclose(out, ref, atol=1e-4, rtol=1e-4), "mismatch vs reference"

    print("KERNEL_OK")
</pallas_src>

<mosaic_0001>
module attributes {stable_mosaic.version = 11 : i64} {
  func.func @fused_convnet_kernel(%arg0: i32, %arg1: memref<1x192x25xf32, #tpu.memory_space<vmem>>, %arg2: memref<25x20xf32, #tpu.memory_space<vmem>>, %arg3: memref<1x20xf32, #tpu.memory_space<vmem>>, %arg4: memref<25x20x20xf32, #tpu.memory_space<vmem>>, %arg5: memref<1x20xf32, #tpu.memory_space<vmem>>, %arg6: memref<1x20x64xf32, #tpu.memory_space<vmem>>) attributes {dimension_semantics = [#tpu.dimension_semantics<parallel>], iteration_bounds = array<i64: 2>, scalar_prefetch = 0 : i64, scratch_operands = 0 : i64, tpu.core_type = #tpu.core_type<tc>, window_params = [{transform_indices = @transform_0, window_bounds = array<i64: 1, 192, 25>}, {pipeline_mode = #tpu.pipeline_mode<synchronous>, transform_indices = @transform_1, window_bounds = array<i64: 25, 20>}, {pipeline_mode = #tpu.pipeline_mode<synchronous>, transform_indices = @transform_2, window_bounds = array<i64: 1, 20>}, {pipeline_mode = #tpu.pipeline_mode<synchronous>, transform_indices = @transform_3, window_bounds = array<i64: 25, 20, 20>}, {pipeline_mode = #tpu.pipeline_mode<synchronous>, transform_indices = @transform_4, window_bounds = array<i64: 1, 20>}, {transform_indices = @transform_5, window_bounds = array<i64: 1, 20, 64>}]} {
    %c0 = arith.constant 0 : index
    %c0_0 = arith.constant 0 : index
    %c0_1 = arith.constant 0 : index
    %0 = vector.load %arg1[%c0, %c0_0, %c0_1] : memref<1x192x25xf32, #tpu.memory_space<vmem>>, vector<1x192x25xf32>
    %1 = vector.shape_cast %0 : vector<1x192x25xf32> to vector<192x25xf32>
    %c0_2 = arith.constant 0 : index
    %c0_3 = arith.constant 0 : index
    %2 = vector.load %arg2[%c0_2, %c0_3] : memref<25x20xf32, #tpu.memory_space<vmem>>, vector<25x20xf32>
    %cst = arith.constant dense<0.000000e+00> : vector<192x20xf32>
    %3 = tpu.matmul %1, %2, %cst {dimension_numbers = #tpu.dot_dimension_numbers<[1], [0], [0], [1], [0, 0, 1, 1], [], []>} : vector<192x25xf32>, vector<25x20xf32>, vector<192x20xf32> -> vector<192x20xf32>
    %c0_4 = arith.constant 0 : index
    %c0_5 = arith.constant 0 : index
    %4 = vector.load %arg3[%c0_4, %c0_5] : memref<1x20xf32, #tpu.memory_space<vmem>>, vector<1x20xf32>
    %5 = vector.broadcast %4 : vector<1x20xf32> to vector<192x20xf32>
    %6 = arith.addf %3, %5 : vector<192x20xf32>
    %cst_6 = arith.constant 0.000000e+00 : f32
    %7 = vector.broadcast %cst_6 : f32 to vector<192x20xf32>
    %8 = arith.maximumf %6, %7 : vector<192x20xf32>
    %9 = vector.shape_cast %8 : vector<192x20xf32> to vector<12x16x20xf32>
    %cst_7 = arith.constant 0.000000e+00 : f32
    %10 = vector.broadcast %cst_7 : f32 to vector<64x20xf32>
    %11 = vector.extract_strided_slice %9 {offsets = [0, 0, 0], sizes = [12, 8, 20], strides = [1, 1, 1]} : vector<12x16x20xf32> to vector<12x8x20xf32>
    %12 = vector.extract_strided_slice %11 {offsets = [0, 0, 0], sizes = [8, 8, 20], strides = [1, 1, 1]} : vector<12x8x20xf32> to vector<8x8x20xf32>
    %13 = vector.shape_cast %12 : vector<8x8x20xf32> to vector<64x20xf32>
    %c0_8 = arith.constant 0 : index
    %c0_9 = arith.constant 0 : index
    %c0_10 = arith.constant 0 : index
    %14 = vector.load %arg4[%c0_8, %c0_9, %c0_10] : memref<25x20x20xf32, #tpu.memory_space<vmem>>, vector<1x20x20xf32>
    %15 = vector.shape_cast %14 : vector<1x20x20xf32> to vector<20x20xf32>
    %cst_11 = arith.constant dense<0.000000e+00> : vector<64x20xf32>
    %16 = tpu.matmul %13, %15, %cst_11 {dimension_numbers = #tpu.dot_dimension_numbers<[1], [0], [0], [1], [0, 0, 1, 1], [], []>} : vector<64x20xf32>, vector<20x20xf32>, vector<64x20xf32> -> vector<64x20xf32>
    %17 = arith.addf %10, %16 : vector<64x20xf32>
    %18 = vector.extract_strided_slice %11 {offsets = [1, 0, 0], sizes = [8, 8, 20], strides = [1, 1, 1]} : vector<12x8x20xf32> to vector<8x8x20xf32>
    %19 = vector.shape_cast %18 : vector<8x8x20xf32> to vector<64x20xf32>
    %c5 = arith.constant 5 : index
    %c0_12 = arith.constant 0 : index
    %c0_13 = arith.constant 0 : index
    %20 = vector.load %arg4[%c5, %c0_12, %c0_13] : memref<25x20x20xf32, #tpu.memory_space<vmem>>, vector<1x20x20xf32>
    %21 = vector.shape_cast %20 : vector<1x20x20xf32> to vector<20x20xf32>
    %cst_14 = arith.constant dense<0.000000e+00> : vector<64x20xf32>
    %22 = tpu.matmul %19, %21, %cst_14 {dimension_numbers = #tpu.dot_dimension_numbers<[1], [0], [0], [1], [0, 0, 1, 1], [], []>} : vector<64x20xf32>, vector<20x20xf32>, vector<64x20xf32> -> vector<64x20xf32>
    %23 = arith.addf %17, %22 : vector<64x20xf32>
    %24 = vector.extract_strided_slice %11 {offsets = [2, 0, 0], sizes = [8, 8, 20], strides = [1, 1, 1]} : vector<12x8x20xf32> to vector<8x8x20xf32>
    %25 = vector.shape_cast %24 : vector<8x8x20xf32> to vector<64x20xf32>
    %c10 = arith.constant 10 : index
    %c0_15 = arith.constant 0 : index
    %c0_16 = arith.constant 0 : index
    %26 = vector.load %arg4[%c10, %c0_15, %c0_16] : memref<25x20x20xf32, #tpu.memory_space<vmem>>, vector<1x20x20xf32>
    %27 = vector.shape_cast %26 : vector<1x20x20xf32> to vector<20x20xf32>
    %cst_17 = arith.constant dense<0.000000e+00> : vector<64x20xf32>
    %28 = tpu.matmul %25, %27, %cst_17 {dimension_numbers = #tpu.dot_dimension_numbers<[1], [0], [0], [1], [0, 0, 1, 1], [], []>} : vector<64x20xf32>, vector<20x20xf32>, vector<64x20xf32> -> vector<64x20xf32>
    %29 = arith.addf %23, %28 : vector<64x20xf32>
    %30 = vector.extract_strided_slice %11 {offsets = [3, 0, 0], sizes = [8, 8, 20], strides = [1, 1, 1]} : vector<12x8x20xf32> to vector<8x8x20xf32>
    %31 = vector.shape_cast %30 : vector<8x8x20xf32> to vector<64x20xf32>
    %c15 = arith.constant 15 : index
    %c0_18 = arith.constant 0 : index
    %c0_19 = arith.constant 0 : index
    %32 = vector.load %arg4[%c15, %c0_18, %c0_19] : memref<25x20x20xf32, #tpu.memory_space<vmem>>, vector<1x20x20xf32>
    %33 = vector.shape_cast %32 : vector<1x20x20xf32> to vector<20x20xf32>
    %cst_20 = arith.constant dense<0.000000e+00> : vector<64x20xf32>
    %34 = tpu.matmul %31, %33, %cst_20 {dimension_numbers = #tpu.dot_dimension_numbers<[1], [0], [0], [1], [0, 0, 1, 1], [], []>} : vector<64x20xf32>, vector<20x20xf32>, vector<64x20xf32> -> vector<64x20xf32>
    %35 = arith.addf %29, %34 : vector<64x20xf32>
    %36 = vector.extract_strided_slice %11 {offsets = [4, 0, 0], sizes = [8, 8, 20], strides = [1, 1, 1]} : vector<12x8x20xf32> to vector<8x8x20xf32>
    %37 = vector.shape_cast %36 : vector<8x8x20xf32> to vector<64x20xf32>
    %c20 = arith.constant 20 : index
    %c0_21 = arith.constant 0 : index
    %c0_22 = arith.constant 0 : index
    %38 = vector.load %arg4[%c20, %c0_21, %c0_22] : memref<25x20x20xf32, #tpu.memory_space<vmem>>, vector<1x20x20xf32>
    %39 = vector.shape_cast %38 : vector<1x20x20xf32> to vector<20x20xf32>
    %cst_23 = arith.constant dense<0.000000e+00> : vector<64x20xf32>
    %40 = tpu.matmul %37, %39, %cst_23 {dimension_numbers = #tpu.dot_dimension_numbers<[1], [0], [0], [1], [0, 0, 1, 1], [], []>} : vector<64x20xf32>, vector<20x20xf32>, vector<64x20xf32> -> vector<64x20xf32>
    %41 = arith.addf %35, %40 : vector<64x20xf32>
    %42 = vector.extract_strided_slice %9 {offsets = [0, 1, 0], sizes = [12, 8, 20], strides = [1, 1, 1]} : vector<12x16x20xf32> to vector<12x8x20xf32>
    %43 = vector.extract_strided_slice %42 {offsets = [0, 0, 0], sizes = [8, 8, 20], strides = [1, 1, 1]} : vector<12x8x20xf32> to vector<8x8x20xf32>
    %44 = vector.shape_cast %43 : vector<8x8x20xf32> to vector<64x20xf32>
    %c1 = arith.constant 1 : index
    %c0_24 = arith.constant 0 : index
    %c0_25 = arith.constant 0 : index
    %45 = vector.load %arg4[%c1, %c0_24, %c0_25] : memref<25x20x20xf32, #tpu.memory_space<vmem>>, vector<1x20x20xf32>
    %46 = vector.shape_cast %45 : vector<1x20x20xf32> to vector<20x20xf32>
    %cst_26 = arith.constant dense<0.000000e+00> : vector<64x20xf32>
    %47 = tpu.matmul %44, %46, %cst_26 {dimension_numbers = #tpu.dot_dimension_numbers<[1], [0], [0], [1], [0, 0, 1, 1], [], []>} : vector<64x20xf32>, vector<20x20xf32>, vector<64x20xf32> -> vector<64x20xf32>
    %48 = arith.addf %41, %47 : vector<64x20xf32>
    %49 = vector.extract_strided_slice %42 {offsets = [1, 0, 0], sizes = [8, 8, 20], strides = [1, 1, 1]} : vector<12x8x20xf32> to vector<8x8x20xf32>
    %50 = vector.shape_cast %49 : vector<8x8x20xf32> to vector<64x20xf32>
    %c6 = arith.constant 6 : index
    %c0_27 = arith.constant 0 : index
    %c0_28 = arith.constant 0 : index
    %51 = vector.load %arg4[%c6, %c0_27, %c0_28] : memref<25x20x20xf32, #tpu.memory_space<vmem>>, vector<1x20x20xf32>
    %52 = vector.shape_cast %51 : vector<1x20x20xf32> to vector<20x20xf32>
    %cst_29 = arith.constant dense<0.000000e+00> : vector<64x20xf32>
    %53 = tpu.matmul %50, %52, %cst_29 {dimension_numbers = #tpu.dot_dimension_numbers<[1], [0], [0], [1], [0, 0, 1, 1], [], []>} : vector<64x20xf32>, vector<20x20xf32>, vector<64x20xf32> -> vector<64x20xf32>
    %54 = arith.addf %48, %53 : vector<64x20xf32>
    %55 = vector.extract_strided_slice %42 {offsets = [2, 0, 0], sizes = [8, 8, 20], strides = [1, 1, 1]} : vector<12x8x20xf32> to vector<8x8x20xf32>
    %56 = vector.shape_cast %55 : vector<8x8x20xf32> to vector<64x20xf32>
    %c11 = arith.constant 11 : index
    %c0_30 = arith.constant 0 : index
    %c0_31 = arith.constant 0 : index
    %57 = vector.load %arg4[%c11, %c0_30, %c0_31] : memref<25x20x20xf32, #tpu.memory_space<vmem>>, vector<1x20x20xf32>
    %58 = vector.shape_cast %57 : vector<1x20x20xf32> to vector<20x20xf32>
    %cst_32 = arith.constant dense<0.000000e+00> : vector<64x20xf32>
    %59 = tpu.matmul %56, %58, %cst_32 {dimension_numbers = #tpu.dot_dimension_numbers<[1], [0], [0], [1], [0, 0, 1, 1], [], []>} : vector<64x20xf32>, vector<20x20xf32>, vector<64x20xf32> -> vector<64x20xf32>
    %60 = arith.addf %54, %59 : vector<64x20xf32>
    %61 = vector.extract_strided_slice %42 {offsets = [3, 0, 0], sizes = [8, 8, 20], strides = [1, 1, 1]} : vector<12x8x20xf32> to vector<8x8x20xf32>
    %62 = vector.shape_cast %61 : vector<8x8x20xf32> to vector<64x20xf32>
    %c16 = arith.constant 16 : index
    %c0_33 = arith.constant 0 : index
    %c0_34 = arith.constant 0 : index
    %63 = vector.load %arg4[%c16, %c0_33, %c0_34] : memref<25x20x20xf32, #tpu.memory_space<vmem>>, vector<1x20x20xf32>
    %64 = vector.shape_cast %63 : vector<1x20x20xf32> to vector<20x20xf32>
    %cst_35 = arith.constant dense<0.000000e+00> : vector<64x20xf32>
    %65 = tpu.matmul %62, %64, %cst_35 {dimension_numbers = #tpu.dot_dimension_numbers<[1], [0], [0], [1], [0, 0, 1, 1], [], []>} : vector<64x20xf32>, vector<20x20xf32>, vector<64x20xf32> -> vector<64x20xf32>
    %66 = arith.addf %60, %65 : vector<64x20xf32>
    %67 = vector.extract_strided_slice %42 {offsets = [4, 0, 0], sizes = [8, 8, 20], strides = [1, 1, 1]} : vector<12x8x20xf32> to vector<8x8x20xf32>
    %68 = vector.shape_cast %67 : vector<8x8x20xf32> to vector<64x20xf32>
    %c21 = arith.constant 21 : index
    %c0_36 = arith.constant 0 : index
    %c0_37 = arith.constant 0 : index
    %69 = vector.load %arg4[%c21, %c0_36, %c0_37] : memref<25x20x20xf32, #tpu.memory_space<vmem>>, vector<1x20x20xf32>
    %70 = vector.shape_cast %69 : vector<1x20x20xf32> to vector<20x20xf32>
    %cst_38 = arith.constant dense<0.000000e+00> : vector<64x20xf32>
    %71 = tpu.matmul %68, %70, %cst_38 {dimension_numbers = #tpu.dot_dimension_numbers<[1], [0], [0], [1], [0, 0, 1, 1], [], []>} : vector<64x20xf32>, vector<20x20xf32>, vector<64x20xf32> -> vector<64x20xf32>
    %72 = arith.addf %66, %71 : vector<64x20xf32>
    %73 = vector.extract_strided_slice %9 {offsets = [0, 2, 0], sizes = [12, 8, 20], strides = [1, 1, 1]} : vector<12x16x20xf32> to vector<12x8x20xf32>
    %74 = vector.extract_strided_slice %73 {offsets = [0, 0, 0], sizes = [8, 8, 20], strides = [1, 1, 1]} : vector<12x8x20xf32> to vector<8x8x20xf32>
    %75 = vector.shape_cast %74 : vector<8x8x20xf32> to vector<64x20xf32>
    %c2 = arith.constant 2 : index
    %c0_39 = arith.constant 0 : index
    %c0_40 = arith.constant 0 : index
    %76 = vector.load %arg4[%c2, %c0_39, %c0_40] : memref<25x20x20xf32, #tpu.memory_space<vmem>>, vector<1x20x20xf32>
    %77 = vector.shape_cast %76 : vector<1x20x20xf32> to vector<20x20xf32>
    %cst_41 = arith.constant dense<0.000000e+00> : vector<64x20xf32>
    %78 = tpu.matmul %75, %77, %cst_41 {dimension_numbers = #tpu.dot_dimension_numbers<[1], [0], [0], [1], [0, 0, 1, 1], [], []>} : vector<64x20xf32>, vector<20x20xf32>, vector<64x20xf32> -> vector<64x20xf32>
    %79 = arith.addf %72, %78 : vector<64x20xf32>
    %80 = vector.extract_strided_slice %73 {offsets = [1, 0, 0], sizes = [8, 8, 20], strides = [1, 1, 1]} : vector<12x8x20xf32> to vector<8x8x20xf32>
    %81 = vector.shape_cast %80 : vector<8x8x20xf32> to vector<64x20xf32>
    %c7 = arith.constant 7 : index
    %c0_42 = arith.constant 0 : index
    %c0_43 = arith.constant 0 : index
    %82 = vector.load %arg4[%c7, %c0_42, %c0_43] : memref<25x20x20xf32, #tpu.memory_space<vmem>>, vector<1x20x20xf32>
    %83 = vector.shape_cast %82 : vector<1x20x20xf32> to vector<20x20xf32>
    %cst_44 = arith.constant dense<0.000000e+00> : vector<64x20xf32>
    %84 = tpu.matmul %81, %83, %cst_44 {dimension_numbers = #tpu.dot_dimension_numbers<[1], [0], [0], [1], [0, 0, 1, 1], [], []>} : vector<64x20xf32>, vector<20x20xf32>, vector<64x20xf32> -> vector<64x20xf32>
    %85 = arith.addf %79, %84 : vector<64x20xf32>
    %86 = vector.extract_strided_slice %73 {offsets = [2, 0, 0], sizes = [8, 8, 20], strides = [1, 1, 1]} : vector<12x8x20xf32> to vector<8x8x20xf32>
    %87 = vector.shape_cast %86 : vector<8x8x20xf32> to vector<64x20xf32>
    %c12 = arith.constant 12 : index
    %c0_45 = arith.constant 0 : index
    %c0_46 = arith.constant 0 : index
    %88 = vector.load %arg4[%c12, %c0_45, %c0_46] : memref<25x20x20xf32, #tpu.memory_space<vmem>>, vector<1x20x20xf32>
    %89 = vector.shape_cast %88 : vector<1x20x20xf32> to vector<20x20xf32>
    %cst_47 = arith.constant dense<0.000000e+00> : vector<64x20xf32>
    %90 = tpu.matmul %87, %89, %cst_47 {dimension_numbers = #tpu.dot_dimension_numbers<[1], [0], [0], [1], [0, 0, 1, 1], [], []>} : vector<64x20xf32>, vector<20x20xf32>, vector<64x20xf32> -> vector<64x20xf32>
    %91 = arith.addf %85, %90 : vector<64x20xf32>
    %92 = vector.extract_strided_slice %73 {offsets = [3, 0, 0], sizes = [8, 8, 20], strides = [1, 1, 1]} : vector<12x8x20xf32> to vector<8x8x20xf32>
    %93 = vector.shape_cast %92 : vector<8x8x20xf32> to vector<64x20xf32>
    %c17 = arith.constant 17 : index
    %c0_48 = arith.constant 0 : index
    %c0_49 = arith.constant 0 : index
    %94 = vector.load %arg4[%c17, %c0_48, %c0_49] : memref<25x20x20xf32, #tpu.memory_space<vmem>>, vector<1x20x20xf32>
    %95 = vector.shape_cast %94 : vector<1x20x20xf32> to vector<20x20xf32>
    %cst_50 = arith.constant dense<0.000000e+00> : vector<64x20xf32>
    %96 = tpu.matmul %93, %95, %cst_50 {dimension_numbers = #tpu.dot_dimension_numbers<[1], [0], [0], [1], [0, 0, 1, 1], [], []>} : vector<64x20xf32>, vector<20x20xf32>, vector<64x20xf32> -> vector<64x20xf32>
    %97 = arith.addf %91, %96 : vector<64x20xf32>
    %98 = vector.extract_strided_slice %73 {offsets = [4, 0, 0], sizes = [8, 8, 20], strides = [1, 1, 1]} : vector<12x8x20xf32> to vector<8x8x20xf32>
    %99 = vector.shape_cast %98 : vector<8x8x20xf32> to vector<64x20xf32>
    %c22 = arith.constant 22 : index
    %c0_51 = arith.constant 0 : index
    %c0_52 = arith.constant 0 : index
    %100 = vector.load %arg4[%c22, %c0_51, %c0_52] : memref<25x20x20xf32, #tpu.memory_space<vmem>>, vector<1x20x20xf32>
    %101 = vector.shape_cast %100 : vector<1x20x20xf32> to vector<20x20xf32>
    %cst_53 = arith.constant dense<0.000000e+00> : vector<64x20xf32>
    %102 = tpu.matmul %99, %101, %cst_53 {dimension_numbers = #tpu.dot_dimension_numbers<[1], [0], [0], [1], [0, 0, 1, 1], [], []>} : vector<64x20xf32>, vector<20x20xf32>, vector<64x20xf32> -> vector<64x20xf32>
    %103 = arith.addf %97, %102 : vector<64x20xf32>
    %104 = vector.extract_strided_slice %9 {offsets = [0, 3, 0], sizes = [12, 8, 20], strides = [1, 1, 1]} : vector<12x16x20xf32> to vector<12x8x20xf32>
    %105 = vector.extract_strided_slice %104 {offsets = [0, 0, 0], sizes = [8, 8, 20], strides = [1, 1, 1]} : vector<12x8x20xf32> to vector<8x8x20xf32>
    %106 = vector.shape_cast %105 : vector<8x8x20xf32> to vector<64x20xf32>
    %c3 = arith.constant 3 : index
    %c0_54 = arith.constant 0 : index
    %c0_55 = arith.constant 0 : index
    %107 = vector.load %arg4[%c3, %c0_54, %c0_55] : memref<25x20x20xf32, #tpu.memory_space<vmem>>, vector<1x20x20xf32>
    %108 = vector.shape_cast %107 : vector<1x20x20xf32> to vector<20x20xf32>
    %cst_56 = arith.constant dense<0.000000e+00> : vector<64x20xf32>
    %109 = tpu.matmul %106, %108, %cst_56 {dimension_numbers = #tpu.dot_dimension_numbers<[1], [0], [0], [1], [0, 0, 1, 1], [], []>} : vector<64x20xf32>, vector<20x20xf32>, vector<64x20xf32> -> vector<64x20xf32>
    %110 = arith.addf %103, %109 : vector<64x20xf32>
    %111 = vector.extract_strided_slice %104 {offsets = [1, 0, 0], sizes = [8, 8, 20], strides = [1, 1, 1]} : vector<12x8x20xf32> to vector<8x8x20xf32>
    %112 = vector.shape_cast %111 : vector<8x8x20xf32> to vector<64x20xf32>
    %c8 = arith.constant 8 : index
    %c0_57 = arith.constant 0 : index
    %c0_58 = arith.constant 0 : index
    %113 = vector.load %arg4[%c8, %c0_57, %c0_58] : memref<25x20x20xf32, #tpu.memory_space<vmem>>, vector<1x20x20xf32>
    %114 = vector.shape_cast %113 : vector<1x20x20xf32> to vector<20x20xf32>
    %cst_59 = arith.constant dense<0.000000e+00> : vector<64x20xf32>
    %115 = tpu.matmul %112, %114, %cst_59 {dimension_numbers = #tpu.dot_dimension_numbers<[1], [0], [0], [1], [0, 0, 1, 1], [], []>} : vector<64x20xf32>, vector<20x20xf32>, vector<64x20xf32> -> vector<64x20xf32>
    %116 = arith.addf %110, %115 : vector<64x20xf32>
    %117 = vector.extract_strided_slice %104 {offsets = [2, 0, 0], sizes = [8, 8, 20], strides = [1, 1, 1]} : vector<12x8x20xf32> to vector<8x8x20xf32>
    %118 = vector.shape_cast %117 : vector<8x8x20xf32> to vector<64x20xf32>
    %c13 = arith.constant 13 : index
    %c0_60 = arith.constant 0 : index
    %c0_61 = arith.constant 0 : index
    %119 = vector.load %arg4[%c13, %c0_60, %c0_61] : memref<25x20x20xf32, #tpu.memory_space<vmem>>, vector<1x20x20xf32>
    %120 = vector.shape_cast %119 : vector<1x20x20xf32> to vector<20x20xf32>
    %cst_62 = arith.constant dense<0.000000e+00> : vector<64x20xf32>
    %121 = tpu.matmul %118, %120, %cst_62 {dimension_numbers = #tpu.dot_dimension_numbers<[1], [0], [0], [1], [0, 0, 1, 1], [], []>} : vector<64x20xf32>, vector<20x20xf32>, vector<64x20xf32> -> vector<64x20xf32>
    %122 = arith.addf %116, %121 : vector<64x20xf32>
    %123 = vector.extract_strided_slice %104 {offsets = [3, 0, 0], sizes = [8, 8, 20], strides = [1, 1, 1]} : vector<12x8x20xf32> to vector<8x8x20xf32>
    %124 = vector.shape_cast %123 : vector<8x8x20xf32> to vector<64x20xf32>
    %c18 = arith.constant 18 : index
    %c0_63 = arith.constant 0 : index
    %c0_64 = arith.constant 0 : index
    %125 = vector.load %arg4[%c18, %c0_63, %c0_64] : memref<25x20x20xf32, #tpu.memory_space<vmem>>, vector<1x20x20xf32>
    %126 = vector.shape_cast %125 : vector<1x20x20xf32> to vector<20x20xf32>
    %cst_65 = arith.constant dense<0.000000e+00> : vector<64x20xf32>
    %127 = tpu.matmul %124, %126, %cst_65 {dimension_numbers = #tpu.dot_dimension_numbers<[1], [0], [0], [1], [0, 0, 1, 1], [], []>} : vector<64x20xf32>, vector<20x20xf32>, vector<64x20xf32> -> vector<64x20xf32>
    %128 = arith.addf %122, %127 : vector<64x20xf32>
    %129 = vector.extract_strided_slice %104 {offsets = [4, 0, 0], sizes = [8, 8, 20], strides = [1, 1, 1]} : vector<12x8x20xf32> to vector<8x8x20xf32>
    %130 = vector.shape_cast %129 : vector<8x8x20xf32> to vector<64x20xf32>
    %c23 = arith.constant 23 : index
    %c0_66 = arith.constant 0 : index
    %c0_67 = arith.constant 0 : index
    %131 = vector.load %arg4[%c23, %c0_66, %c0_67] : memref<25x20x20xf32, #tpu.memory_space<vmem>>, vector<1x20x20xf32>
    %132 = vector.shape_cast %131 : vector<1x20x20xf32> to vector<20x20xf32>
    %cst_68 = arith.constant dense<0.000000e+00> : vector<64x20xf32>
    %133 = tpu.matmul %130, %132, %cst_68 {dimension_numbers = #tpu.dot_dimension_numbers<[1], [0], [0], [1], [0, 0, 1, 1], [], []>} : vector<64x20xf32>, vector<20x20xf32>, vector<64x20xf32> -> vector<64x20xf32>
    %134 = arith.addf %128, %133 : vector<64x20xf32>
    %135 = vector.extract_strided_slice %9 {offsets = [0, 4, 0], sizes = [12, 8, 20], strides = [1, 1, 1]} : vector<12x16x20xf32> to vector<12x8x20xf32>
    %136 = vector.extract_strided_slice %135 {offsets = [0, 0, 0], sizes = [8, 8, 20], strides = [1, 1, 1]} : vector<12x8x20xf32> to vector<8x8x20xf32>
    %137 = vector.shape_cast %136 : vector<8x8x20xf32> to vector<64x20xf32>
    %c4 = arith.constant 4 : index
    %c0_69 = arith.constant 0 : index
    %c0_70 = arith.constant 0 : index
    %138 = vector.load %arg4[%c4, %c0_69, %c0_70] : memref<25x20x20xf32, #tpu.memory_space<vmem>>, vector<1x20x20xf32>
    %139 = vector.shape_cast %138 : vector<1x20x20xf32> to vector<20x20xf32>
    %cst_71 = arith.constant dense<0.000000e+00> : vector<64x20xf32>
    %140 = tpu.matmul %137, %139, %cst_71 {dimension_numbers = #tpu.dot_dimension_numbers<[1], [0], [0], [1], [0, 0, 1, 1], [], []>} : vector<64x20xf32>, vector<20x20xf32>, vector<64x20xf32> -> vector<64x20xf32>
    %141 = arith.addf %134, %140 : vector<64x20xf32>
    %142 = vector.extract_strided_slice %135 {offsets = [1, 0, 0], sizes = [8, 8, 20], strides = [1, 1, 1]} : vector<12x8x20xf32> to vector<8x8x20xf32>
    %143 = vector.shape_cast %142 : vector<8x8x20xf32> to vector<64x20xf32>
    %c9 = arith.constant 9 : index
    %c0_72 = arith.constant 0 : index
    %c0_73 = arith.constant 0 : index
    %144 = vector.load %arg4[%c9, %c0_72, %c0_73] : memref<25x20x20xf32, #tpu.memory_space<vmem>>, vector<1x20x20xf32>
    %145 = vector.shape_cast %144 : vector<1x20x20xf32> to vector<20x20xf32>
    %cst_74 = arith.constant dense<0.000000e+00> : vector<64x20xf32>
    %146 = tpu.matmul %143, %145, %cst_74 {dimension_numbers = #tpu.dot_dimension_numbers<[1], [0], [0], [1], [0, 0, 1, 1], [], []>} : vector<64x20xf32>, vector<20x20xf32>, vector<64x20xf32> -> vector<64x20xf32>
    %147 = arith.addf %141, %146 : vector<64x20xf32>
    %148 = vector.extract_strided_slice %135 {offsets = [2, 0, 0], sizes = [8, 8, 20], strides = [1, 1, 1]} : vector<12x8x20xf32> to vector<8x8x20xf32>
    %149 = vector.shape_cast %148 : vector<8x8x20xf32> to vector<64x20xf32>
    %c14 = arith.constant 14 : index
    %c0_75 = arith.constant 0 : index
    %c0_76 = arith.constant 0 : index
    %150 = vector.load %arg4[%c14, %c0_75, %c0_76] : memref<25x20x20xf32, #tpu.memory_space<vmem>>, vector<1x20x20xf32>
    %151 = vector.shape_cast %150 : vector<1x20x20xf32> to vector<20x20xf32>
    %cst_77 = arith.constant dense<0.000000e+00> : vector<64x20xf32>
    %152 = tpu.matmul %149, %151, %cst_77 {dimension_numbers = #tpu.dot_dimension_numbers<[1], [0], [0], [1], [0, 0, 1, 1], [], []>} : vector<64x20xf32>, vector<20x20xf32>, vector<64x20xf32> -> vector<64x20xf32>
    %153 = arith.addf %147, %152 : vector<64x20xf32>
    %154 = vector.extract_strided_slice %135 {offsets = [3, 0, 0], sizes = [8, 8, 20], strides = [1, 1, 1]} : vector<12x8x20xf32> to vector<8x8x20xf32>
    %155 = vector.shape_cast %154 : vector<8x8x20xf32> to vector<64x20xf32>
    %c19 = arith.constant 19 : index
    %c0_78 = arith.constant 0 : index
    %c0_79 = arith.constant 0 : index
    %156 = vector.load %arg4[%c19, %c0_78, %c0_79] : memref<25x20x20xf32, #tpu.memory_space<vmem>>, vector<1x20x20xf32>
    %157 = vector.shape_cast %156 : vector<1x20x20xf32> to vector<20x20xf32>
    %cst_80 = arith.constant dense<0.000000e+00> : vector<64x20xf32>
    %158 = tpu.matmul %155, %157, %cst_80 {dimension_numbers = #tpu.dot_dimension_numbers<[1], [0], [0], [1], [0, 0, 1, 1], [], []>} : vector<64x20xf32>, vector<20x20xf32>, vector<64x20xf32> -> vector<64x20xf32>
    %159 = arith.addf %153, %158 : vector<64x20xf32>
    %160 = vector.extract_strided_slice %135 {offsets = [4, 0, 0], sizes = [8, 8, 20], strides = [1, 1, 1]} : vector<12x8x20xf32> to vector<8x8x20xf32>
    %161 = vector.shape_cast %160 : vector<8x8x20xf32> to vector<64x20xf32>
    %c24 = arith.constant 24 : index
    %c0_81 = arith.constant 0 : index
    %c0_82 = arith.constant 0 : index
    %162 = vector.load %arg4[%c24, %c0_81, %c0_82] : memref<25x20x20xf32, #tpu.memory_space<vmem>>, vector<1x20x20xf32>
    %163 = vector.shape_cast %162 : vector<1x20x20xf32> to vector<20x20xf32>
    %cst_83 = arith.constant dense<0.000000e+00> : vector<64x20xf32>
    %164 = tpu.matmul %161, %163, %cst_83 {dimension_numbers = #tpu.dot_dimension_numbers<[1], [0], [0], [1], [0, 0, 1, 1], [], []>} : vector<64x20xf32>, vector<20x20xf32>, vector<64x20xf32> -> vector<64x20xf32>
    %165 = arith.addf %159, %164 : vector<64x20xf32>
    %c0_84 = arith.constant 0 : index
    %c0_85 = arith.constant 0 : index
    %166 = vector.load %arg5[%c0_84, %c0_85] : memref<1x20xf32, #tpu.memory_space<vmem>>, vector<1x20xf32>
    %167 = vector.broadcast %166 : vector<1x20xf32> to vector<64x20xf32>
    %168 = arith.addf %165, %167 : vector<64x20xf32>
    %cst_86 = arith.constant 0.000000e+00 : f32
    %169 = vector.broadcast %cst_86 : f32 to vector<64x20xf32>
    %170 = arith.maximumf %168, %169 : vector<64x20xf32>
    %171 = tpu.transpose %170, [1, 0] : vector<64x20xf32> -> vector<20x64xf32>
    %172 = vector.shape_cast %171 : vector<20x64xf32> to vector<1x20x64xf32>
    %c0_87 = arith.constant 0 : index
    %c0_88 = arith.constant 0 : index
    %c0_89 = arith.constant 0 : index
    %173 = vector.load %arg6[%c0_87, %c0_88, %c0_89] : memref<1x20x64xf32, #tpu.memory_space<vmem>>, vector<1x20x64xf32>
    tpu.vector_store %arg6[%c0_87, %c0_88, %c0_89], %172 {strides = array<i32>} : memref<1x20x64xf32, #tpu.memory_space<vmem>>, vector<1x20x64xf32>,
    return
  }
  func.func @transform_0(%arg0: i32) -> (i32, i32, i32) {
    %c0_i32 = arith.constant 0 : i32
    %c0_i32_0 = arith.constant 0 : i32
    %c0_i32_1 = arith.constant 0 : i32
    return %arg0, %c0_i32, %c0_i32_0 : i32, i32, i32
  }
  func.func @transform_1(%arg0: i32) -> (i32, i32) {
    %c0_i32 = arith.constant 0 : i32
    %c0_i32_0 = arith.constant 0 : i32
    %c0_i32_1 = arith.constant 0 : i32
    return %c0_i32, %c0_i32_0 : i32, i32
  }
  func.func @transform_2(%arg0: i32) -> (i32, i32) {
    %c0_i32 = arith.constant 0 : i32
    %c0_i32_0 = arith.constant 0 : i32
    %c0_i32_1 = arith.constant 0 : i32
    return %c0_i32, %c0_i32_0 : i32, i32
  }
  func.func @transform_3(%arg0: i32) -> (i32, i32, i32) {
    %c0_i32 = arith.constant 0 : i32
    %c0_i32_0 = arith.constant 0 : i32
    %c0_i32_1 = arith.constant 0 : i32
    %c0_i32_2 = arith.constant 0 : i32
    return %c0_i32, %c0_i32_0, %c0_i32_1 : i32, i32, i32
  }
  func.func @transform_4(%arg0: i32) -> (i32, i32) {
    %c0_i32 = arith.constant 0 : i32
    %c0_i32_0 = arith.constant 0 : i32
    %c0_i32_1 = arith.constant 0 : i32
    return %c0_i32, %c0_i32_0 : i32, i32
  }
  func.func @transform_5(%arg0: i32) -> (i32, i32, i32) {
    %c0_i32 = arith.constant 0 : i32
    %c0_i32_0 = arith.constant 0 : i32
    %c0_i32_1 = arith.constant 0 : i32
    return %arg0, %c0_i32, %c0_i32_0 : i32, i32, i32
  }
}

</mosaic_0001>

<llo_original>
// kernel: my_model_forward_impl.1
$region0: #{my_model_forward_impl.1}
  #allocation0 [shape = 'u32[]', space=smem, size = 0x4, offset = 0x4, fixed_abs, tag = 'smem constant byte address 0x4 - core index']
  #allocation1 [shape = 'u32[144,128]{1,0:T(1,128)}', space=vmem, size = 0x12000, scoped, tag = 'internal scratch']
  %s0 = inlined_call_operand.vmem [shape: f32[2,192,25], index: 0, kind: input, shape index: {}]
  %s1 = inlined_call_operand.vmem [shape: f32[25,20], index: 1, kind: input, shape index: {}]
  %s2 = inlined_call_operand.vmem [shape: f32[1,20], index: 2, kind: input, shape index: {}]
  %s3 = inlined_call_operand.vmem [shape: f32[25,20,20], index: 3, kind: input, shape index: {}]
  %s4 = inlined_call_operand.vmem [shape: f32[1,20], index: 4, kind: input, shape index: {}]
  %s5 = inlined_call_operand.vmem [shape: f32[2,20,64], index: 5, kind: output, shape index: {}]
  %s6 = sld [smem:[#allocation0]]
  $region53: #{my_model_forward_impl.1} parent=0
    _
  %s8 = ssub.s32 1, %s6
  %s9 = scalar_select 0, %s8, %s6
  loop: start=0, step=1, limit=4
  $region2: #{my_model_forward_impl.1} parent=0 // loop_pre_header
    _
  $region3: #{my_model_forward_impl.1} parent=0 // loop_header
    %s11 = sphi 0, %s15
    %p12 = scmp.ge.s32.totalorder %s11, 4
    %s21 = sphi 0, %s23
    %s24 = sphi 0, %s21
    %s25 = sphi 0, %s24
    %s41 = sphi 0, %s25
    %s45 = sphi 0, %s45
    %s47 = sphi 0, %s45
    %s48 = sphi 0, %s47
    %s62 = sphi 0, %s48
    %s66 = sphi 0, %s66
    %s68 = sphi 0, %s66
    %s69 = sphi 0, %s68
    %s83 = sphi 0, %s69
    %s87 = sphi 0, %s87
    %s89 = sphi 0, %s87
    %s90 = sphi 0, %s89
    %s104 = sphi 0, %s90
    %s108 = sphi 0, %s108
    %s110 = sphi 0, %s108
    %s111 = sphi 0, %s110
    %s125 = sphi 0, %s111
    %s131 = sphi 0, %s133
    %s134 = sphi 0, %s131
    %s135 = sphi 0, %s134
    %s151 = sphi 0, %s135
  $region4: #{my_model_forward_impl.1} parent=0 // loop_header_branch
    %14 = sbr.rel (%p12) target = $region8
  $region5: #{my_model_forward_impl.1} parent=0 // loop_body
    %s16 = ssub.s32 %s11, 1
    %s17 = ssub.s32 %s11, 2
    %s18 = sadd.s32 %s11, 1
    %s19 = ssub.s32 %s11, %s18
    %p20 = scmp.eq.s32.totalorder %s19, 0
    %s22 = sadd.s32 %s21, 1
    %s23 = scalar_select %p20, %s21, %s22
    %p26 = pneg %p20
    %p27 = scmp.eq.s32.totalorder %s11, 1
    %p28 = por %p26, %p27
    %p29 = scmp.ne.s32.totalorder %s21, %s24
    %p30 = scmp.eq.s32.totalorder %s11, 0
    %p31 = por %p29, %p30
    %p32 = scmp.ne.s32.totalorder %s21, %s24
    %p33 = scmp.eq.s32.totalorder %s16, 1
    %p34 = por %p32, %p33
    %p35 = scmp.ne.s32.totalorder %s24, %s25
    %p36 = scmp.eq.s32.totalorder %s16, 0
    %p37 = por %p35, %p36
    %p38 = scmp.ne.s32.totalorder %s24, %s25
    %p39 = scmp.eq.s32.totalorder %s17, 1
    %p40 = por %p38, %p39
    %p42 = scmp.ne.s32.totalorder %s25, %s41
    %p43 = scmp.eq.s32.totalorder %s17, 0
    %p44 = por %p42, %p43
    %s46 = sadd.s32 %s45, 1
    %p49 = scmp.eq.s32.totalorder %s11, 1
    %p50 = scmp.ne.s32.totalorder %s45, %s47
    %p51 = scmp.eq.s32.totalorder %s11, 0
    %p52 = por %p50, %p51
    %p53 = scmp.ne.s32.totalorder %s45, %s47
    %p54 = scmp.eq.s32.totalorder %s16, 1
    %p55 = por %p53, %p54
    %p56 = scmp.ne.s32.totalorder %s47, %s48
    %p57 = scmp.eq.s32.totalorder %s16, 0
    %p58 = por %p56, %p57
    %p59 = scmp.ne.s32.totalorder %s47, %s48
    %p60 = scmp.eq.s32.totalorder %s17, 1
    %p61 = por %p59, %p60
    %p63 = scmp.ne.s32.totalorder %s48, %s62
    %p64 = scmp.eq.s32.totalorder %s17, 0
    %p65 = por %p63, %p64
    %s67 = sadd.s32 %s66, 1
    %p70 = scmp.eq.s32.totalorder %s11, 1
    %p71 = scmp.ne.s32.totalorder %s66, %s68
    %p72 = scmp.eq.s32.totalorder %s11, 0
    %p73 = por %p71, %p72
    %p74 = scmp.ne.s32.totalorder %s66, %s68
    %p75 = scmp.eq.s32.totalorder %s16, 1
    %p76 = por %p74, %p75
    %p77 = scmp.ne.s32.totalorder %s68, %s69
    %p78 = scmp.eq.s32.totalorder %s16, 0
    %p79 = por %p77, %p78
    %p80 = scmp.ne.s32.totalorder %s68, %s69
    %p81 = scmp.eq.s32.totalorder %s17, 1
    %p82 = por %p80, %p81
    %p84 = scmp.ne.s32.totalorder %s69, %s83
    %p85 = scmp.eq.s32.totalorder %s17, 0
    %p86 = por %p84, %p85
    %s88 = sadd.s32 %s87, 1
    %p91 = scmp.eq.s32.totalorder %s11, 1
    %p92 = scmp.ne.s32.totalorder %s87, %s89
    %p93 = scmp.eq.s32.totalorder %s11, 0
    %p94 = por %p92, %p93
    %p95 = scmp.ne.s32.totalorder %s87, %s89
    %p96 = scmp.eq.s32.totalorder %s16, 1
    %p97 = por %p95, %p96
    %p98 = scmp.ne.s32.totalorder %s89, %s90
    %p99 = scmp.eq.s32.totalorder %s16, 0
    %p100 = por %p98, %p99
    %p101 = scmp.ne.s32.totalorder %s89, %s90
    %p102 = scmp.eq.s32.totalorder %s17, 1
    %p103 = por %p101, %p102
    %p105 = scmp.ne.s32.totalorder %s90, %s104
    %p106 = scmp.eq.s32.totalorder %s17, 0
    %p107 = por %p105, %p106
    %s109 = sadd.s32 %s108, 1
    %p112 = scmp.eq.s32.totalorder %s11, 1
    %p113 = scmp.ne.s32.totalorder %s108, %s110
    %p114 = scmp.eq.s32.totalorder %s11, 0
    %p115 = por %p113, %p114
    %p116 = scmp.ne.s32.totalorder %s108, %s110
    %p117 = scmp.eq.s32.totalorder %s16, 1
    %p118 = por %p116, %p117
    %p119 = scmp.ne.s32.totalorder %s110, %s111
    %p120 = scmp.eq.s32.totalorder %s16, 0
    %p121 = por %p119, %p120
    %p122 = scmp.ne.s32.totalorder %s110, %s111
    %p123 = scmp.eq.s32.totalorder %s17, 1
    %p124 = por %p122, %p123
    %p126 = scmp.ne.s32.totalorder %s111, %s125
    %p127 = scmp.eq.s32.totalorder %s17, 0
    %p128 = por %p126, %p127
    %s129 = ssub.s32 %s11, %s18
    %p130 = scmp.eq.s32.totalorder %s129, 0
    %s132 = sadd.s32 %s131, 1
    %s133 = scalar_select %p130, %s131, %s132
    %p136 = pneg %p130
    %p137 = scmp.eq.s32.totalorder %s11, 1
    %p138 = por %p136, %p137
    %p139 = scmp.ne.s32.totalorder %s131, %s134
    %p140 = scmp.eq.s32.totalorder %s11, 0
    %p141 = por %p139, %p140
    %p142 = scmp.ne.s32.totalorder %s131, %s134
    %p143 = scmp.eq.s32.totalorder %s16, 1
    %p144 = por %p142, %p143
    %p145 = scmp.ne.s32.totalorder %s134, %s135
    %p146 = scmp.eq.s32.totalorder %s16, 0
    %p147 = por %p145, %p146
    %p148 = scmp.ne.s32.totalorder %s134, %s135
    %p149 = scmp.eq.s32.totalorder %s17, 1
    %p150 = por %p148, %p149
    %p152 = scmp.ne.s32.totalorder %s135, %s151
    %p153 = scmp.eq.s32.totalorder %s17, 0
    %p154 = por %p152, %p153
    %p155 = scmp.le.s32.totalorder 1, %s11
    %p156 = scmp.lt.s32.totalorder %s11, 3
    %p157 = pnand %p155, %p156
    %p158 = pneg %p157
    // Predicated region
    $region9: #{my_model_forward_impl.1} parent=5 // pred_check
      _
    $region10: #{my_model_forward_impl.1} parent=5 // pred_check_branch
      %160 = sbr.rel (%p157) target = $region12
    $region11: #{my_model_forward_impl.1} parent=5 // pred_region
      %s161 = ssub.s32 %s11, 1
      // Predicated region
      $region13: #{my_model_forward_impl.1} parent=11 // pred_check
        %p162 = pneg %p58
      $region14: #{my_model_forward_impl.1} parent=11 // pred_check_branch
        %164 = sbr.rel (%p162) target = $region16
      $region15: #{my_model_forward_impl.1} parent=11 // pred_region
        _
      $region16: #{my_model_forward_impl.1} parent=11 // pred_fallthru
        _
      // Predicated region
      $region17: #{my_model_forward_impl.1} parent=11 // pred_check
        %p165 = pneg %p79
      $region18: #{my_model_forward_impl.1} parent=11 // pred_check_branch
        %167 = sbr.rel (%p165) target = $region20
      $region19: #{my_model_forward_impl.1} parent=11 // pred_region
        _
      $region20: #{my_model_forward_impl.1} parent=11 // pred_fallthru
        _
      // Predicated region
      $region21: #{my_model_forward_impl.1} parent=11 // pred_check
        %p168 = pneg %p100
      $region22: #{my_model_forward_impl.1} parent=11 // pred_check_branch
        %170 = sbr.rel (%p168) target = $region24
      $region23: #{my_model_forward_impl.1} parent=11 // pred_region
        _
      $region24: #{my_model_forward_impl.1} parent=11 // pred_fallthru
        _
      // Predicated region
      $region25: #{my_model_forward_impl.1} parent=11 // pred_check
        %p171 = pneg %p121
      $region26: #{my_model_forward_impl.1} parent=11 // pred_check_branch
        %173 = sbr.rel (%p171) target = $region28
      $region27: #{my_model_forward_impl.1} parent=11 // pred_region
        _
      $region28: #{my_model_forward_impl.1} parent=11 // pred_fallthru
        _
    $region12: #{my_model_forward_impl.1} parent=5 // pred_fallthru
      _
    %p174 = scmp.lt.s32.totalorder %s11, 2
    // Predicated region
    $region29: #{my_model_forward_impl.1} parent=5 // pred_check
      %p175 = pneg %p174
    $region30: #{my_model_forward_impl.1} parent=5 // pred_check_branch
      %177 = sbr.rel (%p175) target = $region32
    $region31: #{my_model_forward_impl.1} parent=5 // pred_region
      // Predicated region
      $region33: #{my_model_forward_impl.1} parent=31 // pred_check
        %p178 = pneg %p31
      $region34: #{my_model_forward_impl.1} parent=31 // pred_check_branch
        %180 = sbr.rel (%p178) target = $region36
      $region35: #{my_model_forward_impl.1} parent=31 // pred_region
        %p181 = scmp.lt.s32.totalorder %s11, 1
        %s182 = scalar_select %p181, %s11, 1
        %s183 = smul.addr %s182, 24
        %s184 = smul.addr %s183, 8
        %s185 = scalar_lea.vmem %s0, %s184
      $region36: #{my_model_forward_impl.1} parent=31 // pred_fallthru
        _
    $region32: #{my_model_forward_impl.1} parent=5 // pred_fallthru
      _
    %p186 = scmp.le.s32.totalorder 1, %s11
    %p187 = scmp.lt.s32.totalorder %s11, 3
    %p188 = pnand %p186, %p187
    %p189 = pneg %p188
    // Predicated region
    $region37: #{my_model_forward_impl.1} parent=5 // pred_check
      _
    $region38: #{my_model_forward_impl.1} parent=5 // pred_check_branch
      %191 = sbr.rel (%p188) target = $region40
    $region39: #{my_model_forward_impl.1} parent=5 // pred_region
      %s192 = ssub.s32 %s11, 1
      %p193 = scmp.lt.s32.totalorder %s16, 1
      %s194 = scalar_select %p193, %s16, 1
      %s195 = smul.addr %s194, 24
      %s196 = smul.addr %s195, 8
      %s197 = scalar_lea.vmem %s0, %s196
      %p198 = pneg %p37
      %p199 = pneg %p34
      %p200 = pneg %p58
      %p201 = pneg %p55
      %p202 = pneg %p79
      %p203 = pneg %p76
      %p204 = pneg %p100
      %p205 = pneg %p97
      %p206 = pneg %p121
      %p207 = pneg %p118
      %p208 = pneg %p147
      %p209 = pneg %p144
      %p210 = scmp.lt.s32.totalorder %s16, 1
      %s211 = scalar_select %p210, %s16, 1
      %s212 = smul.addr %s211, 3
      %s213 = smul.addr %s212, 8
      %s214 = scalar_lea.vmem %s5, %s213
      %p215 = scmp.lt.s32.totalorder %s16, 1
      %s216 = scalar_select %p215, %s16, 1
      %s217 = smul.addr %s216, 24
      %s218 = smul.addr %s217, 8
      %s219 = scalar_lea.vmem %s0, %s218
      %p220 = scmp.lt.s32.totalorder %s16, 1
      %s221 = scalar_select %p220, %s16, 1
      %s222 = smul.addr %s221, 3
      %s223 = smul.addr %s222, 8
      %s224 = scalar_lea.vmem %s5, %s223
      %v225 = vld [vmem:[%s219] sm:$0xff]
      %v226 = vld [vmem:[%s219 + $0x8] sm:$0xff]
      %v227 = vld [vmem:[%s219 + $0x10] sm:$0xff]
      %v228 = vld [vmem:[%s219 + $0x18] sm:$0xff]
      %v229 = vld [vmem:[%s219 + $0x20] sm:$0xff]
      %v230 = vld [vmem:[%s219 + $0x28] sm:$0xff]
      %v231 = vld [vmem:[%s219 + $0x30] sm:$0xff]
      %v232 = vld [vmem:[%s219 + $0x38] sm:$0xff]
      %v233 = vld [vmem:[%s219 + $0x40] sm:$0xff]
      %v234 = vld [vmem:[%s219 + $0x48] sm:$0xff]
      %v235 = vld [vmem:[%s219 + $0x50] sm:$0xff]
      %v236 = vld [vmem:[%s219 + $0x58] sm:$0xff]
      %v237 = vld [vmem:[%s219 + $0x60] sm:$0xff]
      %v238 = vld [vmem:[%s219 + $0x68] sm:$0xff]
      %v239 = vld [vmem:[%s219 + $0x70] sm:$0xff]
      %v240 = vld [vmem:[%s219 + $0x78] sm:$0xff]
      %v241 = vld [vmem:[%s219 + $0x80] sm:$0xff]
      %v242 = vld [vmem:[%s219 + $0x88] sm:$0xff]
      %v243 = vld [vmem:[%s219 + $0x90] sm:$0xff]
      %v244 = vld [vmem:[%s219 + $0x98] sm:$0xff]
      %v245 = vld [vmem:[%s219 + $0xa0] sm:$0xff]
      %v246 = vld [vmem:[%s219 + $0xa8] sm:$0xff]
      %v247 = vld [vmem:[%s219 + $0xb0] sm:$0xff]
      %v248 = vld [vmem:[%s219 + $0xb8] sm:$0xff]
      %v249 = vld [vmem:[%s1] sm:$0xff]
      %v250 = vld [vmem:[%s1 + $0x8] sm:$0xff]
      %v251 = vld [vmem:[%s1 + $0x10] sm:$0xff]
      %v252 = vld [vmem:[%s1 + $0x18] sm:$0x1]
      %v253 = vld [vmem:[%s2] sm:$0x1]
      %v255 = vlaneseq
      %v256 = vshrl.u32 %v255, 7
      %v257 = vsub.s32 0, %v256
      %v258 = vrot.slane %v253, %v257
      %vm260 = vcmask 203776
      %v262 = vsel %vm260, %v225, 0
      %v265 = vsel %vm260, %v226, 0
      %v268 = vsel %vm260, %v227, 0
      %v271 = vsel %vm260, %v228, 0
      %v274 = vsel %vm260, %v229, 0
      %v277 = vsel %vm260, %v230, 0
      %v280 = vsel %vm260, %v231, 0
      %v283 = vsel %vm260, %v232, 0
      %v286 = vsel %vm260, %v233, 0
      %v289 = vsel %vm260, %v234, 0
      %v292 = vsel %vm260, %v235, 0
      %v295 = vsel %vm260, %v236, 0
      %v298 = vsel %vm260, %v237, 0
      %v301 = vsel %vm260, %v238, 0
      %v304 = vsel %vm260, %v239, 0
      %v307 = vsel %vm260, %v240, 0
      %v310 = vsel %vm260, %v241, 0
      %v313 = vsel %vm260, %v242, 0
      %v316 = vsel %vm260, %v243, 0
      %v319 = vsel %vm260, %v244, 0
      %v322 = vsel %vm260, %v245, 0
      %v325 = vsel %vm260, %v246, 0
      %v328 = vsel %vm260, %v247, 0
      %v331 = vsel %vm260, %v248, 0
      %vm333 = vcmask 1040384
      %v335 = vsel %vm333, %v252, 0
      %337 = vmatprep.subr.mxu0 0.0
      %338 = vmatpush1.msra.mxu0 0.0
      %339 = vmatprep.subr.mxu0 0.0
      %340 = vmatpush1.msra.mxu0 0.0
      %341 = vmatprep.subr.mxu0 0.0
      %342 = vmatpush1.msra.mxu0 0.0
      %343 = vmatprep.subr.mxu0 0.0
      %344 = vmatpush1.msra.mxu0 0.0
      %345 = vmatprep.subr.mxu0 0.0
      %346 = vmatpush1.msra.mxu0 0.0
      %347 = vmatprep.subr.mxu0 0.0
      %348 = vmatpush1.msra.mxu0 0.0
      %349 = vmatprep.subr.mxu0 0.0
      %350 = vmatpush1.msra.mxu0 0.0
      %351 = vmatprep.subr.mxu0 0.0
      %352 = vmatpush1.msra.mxu0 0.0
      %353 = vmatprep.subr.mxu0 0.0
      %354 = vmatpush1.msra.mxu0 0.0
      %355 = vmatprep.subr.mxu0 0.0
      %356 = vmatpush1.msra.mxu0 0.0
      %357 = vmatprep.subr.mxu0 0.0
      %358 = vmatpush1.msra.mxu0 0.0
      %359 = vmatprep.subr.mxu0 0.0
      %360 = vmatpush1.msra.mxu0 0.0
      %361 = vmatprep.subr.mxu0 0.0
      %362 = vmatpush1.msra.mxu0 %v335
      %363 = vmatprep.subr.mxu0 0.0
      %364 = vmatpush1.msra.mxu0 %v251
      %365 = vmatprep.subr.mxu0 0.0
      %366 = vmatpush1.msra.mxu0 %v250
      %367 = vmatprep.subr.mxu0 0.0
      %368 = vmatpush1.msra.mxu0 %v249
      %369 = vmatprep.subr.mxu0 0.0
      %370 = vmatpush2.msra.mxu0 0.0
      %371 = vmatprep.subr.mxu0 0.0
      %372 = vmatpush2.msra.mxu0 0.0
      %373 = vmatprep.subr.mxu0 0.0
      %374 = vmatpush2.msra.mxu0 0.0
      %375 = vmatprep.subr.mxu0 0.0
      %376 = vmatpush2.msra.mxu0 0.0
      %377 = vmatprep.subr.mxu0 0.0
      %378 = vmatpush2.msra.mxu0 0.0
      %379 = vmatprep.subr.mxu0 0.0
      %380 = vmatpush2.msra.mxu0 0.0
      %381 = vmatprep.subr.mxu0 0.0
      %382 = vmatpush2.msra.mxu0 0.0
      %383 = vmatprep.subr.mxu0 0.0
      %384 = vmatpush2.msra.mxu0 0.0
      %385 = vmatprep.subr.mxu0 0.0
      %386 = vmatpush2.msra.mxu0 0.0
      %387 = vmatprep.subr.mxu0 0.0
      %388 = vmatpush2.msra.mxu0 0.0
      %389 = vmatprep.subr.mxu0 0.0
      %390 = vmatpush2.msra.mxu0 0.0
      %391 = vmatprep.subr.mxu0 0.0
      %392 = vmatpush2.msra.mxu0 0.0
      %393 = vmatprep.subr.mxu0 0.0
      %394 = vmatpush2.msra.mxu0 0.0
      %395 = vmatprep.subr.mxu0 0.0
      %396 = vmatpush2.msra.mxu0 0.0
      %397 = vmatprep.subr.mxu0 0.0
      %398 = vmatpush2.msra.mxu0 0.0
      %399 = vmatprep.subr.mxu0 0.0
      %400 = vmatpush2.msra.mxu0 0.0
      %401 = vmatprep.mubr.f32.mxu0 0.0
      %402 = vmatmul.mubr.f32.gmra.mxu0 %v262
      %v403 = vpop.f32.mrf.mxu0
      %v404 = vadd.f32 %v258, %v403
      %v405 = vpop.f32.mrf.mxu0
      %406 = vmatprep.mubr.f32.mxu0 0.0
      %407 = vmatmul.mubr.f32.gmra.mxu0 %v265
      %v408 = vpop.f32.mrf.mxu0
      %v409 = vadd.f32 %v258, %v408
      %v410 = vpop.f32.mrf.mxu0
      %411 = vmatprep.mubr.f32.mxu0 0.0
      %412 = vmatmul.mubr.f32.gmra.mxu0 %v268
      %v413 = vpop.f32.mrf.mxu0
      %v414 = vadd.f32 %v258, %v413
      %v415 = vpop.f32.mrf.mxu0
      %416 = vmatprep.mubr.f32.mxu0 0.0
      %417 = vmatmul.mubr.f32.gmra.mxu0 %v271
      %v418 = vpop.f32.mrf.mxu0
      %v419 = vadd.f32 %v258, %v418
      %v420 = vpop.f32.mrf.mxu0
      %421 = vmatprep.mubr.f32.mxu0 0.0
      %422 = vmatmul.mubr.f32.gmra.mxu0 %v274
      %v423 = vpop.f32.mrf.mxu0
      %v424 = vadd.f32 %v258, %v423
      %v425 = vpop.f32.mrf.mxu0
      %426 = vmatprep.mubr.f32.mxu0 0.0
      %427 = vmatmul.mubr.f32.gmra.mxu0 %v277
      %v428 = vpop.f32.mrf.mxu0
      %v429 = vadd.f32 %v258, %v428
      %v430 = vpop.f32.mrf.mxu0
      %431 = vmatprep.mubr.f32.mxu0 0.0
      %432 = vmatmul.mubr.f32.gmra.mxu0 %v280
      %v433 = vpop.f32.mrf.mxu0
      %v434 = vadd.f32 %v258, %v433
      %v435 = vpop.f32.mrf.mxu0
      %436 = vmatprep.mubr.f32.mxu0 0.0
      %437 = vmatmul.mubr.f32.gmra.mxu0 %v283
      %v438 = vpop.f32.mrf.mxu0
      %v439 = vadd.f32 %v258, %v438
      %v440 = vpop.f32.mrf.mxu0
      %441 = vmatprep.mubr.f32.mxu0 0.0
      %442 = vmatmul.mubr.f32.gmra.mxu0 %v286
      %v443 = vpop.f32.mrf.mxu0
      %v444 = vadd.f32 %v258, %v443
      %v445 = vpop.f32.mrf.mxu0
      %446 = vmatprep.mubr.f32.mxu0 0.0
      %447 = vmatmul.mubr.f32.gmra.mxu0 %v289
      %v448 = vpop.f32.mrf.mxu0
      %v449 = vadd.f32 %v258, %v448
      %v450 = vpop.f32.mrf.mxu0
      %451 = vmatprep.mubr.f32.mxu0 0.0
      %452 = vmatmul.mubr.f32.gmra.mxu0 %v292
      %v453 = vpop.f32.mrf.mxu0
      %v454 = vadd.f32 %v258, %v453
      %v455 = vpop.f32.mrf.mxu0
      %456 = vmatprep.mubr.f32.mxu0 0.0
      %457 = vmatmul.mubr.f32.gmra.mxu0 %v295
      %v458 = vpop.f32.mrf.mxu0
      %v459 = vadd.f32 %v258, %v458
      %v460 = vpop.f32.mrf.mxu0
      %461 = vmatprep.mubr.f32.mxu0 0.0
      %462 = vmatmul.mubr.f32.gmra.mxu0 %v298
      %v463 = vpop.f32.mrf.mxu0
      %v464 = vadd.f32 %v258, %v463
      %v465 = vpop.f32.mrf.mxu0
      %466 = vmatprep.mubr.f32.mxu0 0.0
      %467 = vmatmul.mubr.f32.gmra.mxu0 %v301
      %v468 = vpop.f32.mrf.mxu0
      %v469 = vadd.f32 %v258, %v468
      %v470 = vpop.f32.mrf.mxu0
      %471 = vmatprep.mubr.f32.mxu0 0.0
      %472 = vmatmul.mubr.f32.gmra.mxu0 %v304
      %v473 = vpop.f32.mrf.mxu0
      %v474 = vadd.f32 %v258, %v473
      %v475 = vpop.f32.mrf.mxu0
      %476 = vmatprep.mubr.f32.mxu0 0.0
      %477 = vmatmul.mubr.f32.gmra.mxu0 %v307
      %v478 = vpop.f32.mrf.mxu0
      %v479 = vadd.f32 %v258, %v478
      %v480 = vpop.f32.mrf.mxu0
      %481 = vmatprep.mubr.f32.mxu0 0.0
      %482 = vmatmul.mubr.f32.gmra.mxu0 %v310
      %v483 = vpop.f32.mrf.mxu0
      %v484 = vadd.f32 %v258, %v483
      %v485 = vpop.f32.mrf.mxu0
      %486 = vmatprep.mubr.f32.mxu0 0.0
      %487 = vmatmul.mubr.f32.gmra.mxu0 %v313
      %v488 = vpop.f32.mrf.mxu0
      %v489 = vadd.f32 %v258, %v488
      %v490 = vpop.f32.mrf.mxu0
      %491 = vmatprep.mubr.f32.mxu0 0.0
      %492 = vmatmul.mubr.f32.gmra.mxu0 %v316
      %v493 = vpop.f32.mrf.mxu0
      %v494 = vadd.f32 %v258, %v493
      %v495 = vpop.f32.mrf.mxu0
      %496 = vmatprep.mubr.f32.mxu0 0.0
      %497 = vmatmul.mubr.f32.gmra.mxu0 %v319
      %v498 = vpop.f32.mrf.mxu0
      %v499 = vadd.f32 %v258, %v498
      %v500 = vpop.f32.mrf.mxu0
      %501 = vmatprep.mubr.f32.mxu0 0.0
      %502 = vmatmul.mubr.f32.gmra.mxu0 %v322
      %v503 = vpop.f32.mrf.mxu0
      %v504 = vadd.f32 %v258, %v503
      %v505 = vpop.f32.mrf.mxu0
      %506 = vmatprep.mubr.f32.mxu0 0.0
      %507 = vmatmul.mubr.f32.gmra.mxu0 %v325
      %v508 = vpop.f32.mrf.mxu0
      %v509 = vadd.f32 %v258, %v508
      %v510 = vpop.f32.mrf.mxu0
      %511 = vmatprep.mubr.f32.mxu0 0.0
      %512 = vmatmul.mubr.f32.gmra.mxu0 %v328
      %v513 = vpop.f32.mrf.mxu0
      %v514 = vadd.f32 %v258, %v513
      %v515 = vpop.f32.mrf.mxu0
      %516 = vmatprep.mubr.f32.mxu0 0.0
      %517 = vmatmul.mubr.f32.gmra.mxu0 %v331
      %v518 = vpop.f32.mrf.mxu0
      %v519 = vadd.f32 %v258, %v518
      %v520 = vpop.f32.mrf.mxu0
      %521 = vdwg.mxu0
      %v522 = vmax.f32 %v404, 0.0
      %v523 = vmax.f32 %v409, 0.0
      %v524 = vmax.f32 %v414, 0.0
      %v525 = vmax.f32 %v419, 0.0
      %v526 = vmax.f32 %v424, 0.0
      %v527 = vmax.f32 %v429, 0.0
      %v528 = vmax.f32 %v434, 0.0
      %v529 = vmax.f32 %v439, 0.0
      %v530 = vmax.f32 %v444, 0.0
      %v531 = vmax.f32 %v449, 0.0
      %v532 = vmax.f32 %v454, 0.0
      %v533 = vmax.f32 %v459, 0.0
      %v534 = vmax.f32 %v464, 0.0
      %v535 = vmax.f32 %v469, 0.0
      %v536 = vmax.f32 %v474, 0.0
      %v537 = vmax.f32 %v479, 0.0
      %v538 = vmax.f32 %v484, 0.0
      %v539 = vmax.f32 %v489, 0.0
      %v540 = vmax.f32 %v494, 0.0
      %v541 = vmax.f32 %v499, 0.0
      %v542 = vmax.f32 %v504, 0.0
      %v543 = vmax.f32 %v509, 0.0
      %v544 = vmax.f32 %v514, 0.0
      %v545 = vmax.f32 %v519, 0.0
      %v546 = vld [vmem:[%s3] sm:$0xff]
      %v547 = vld [vmem:[%s3 + $0x8] sm:$0xff]
      %v548 = vld [vmem:[%s3 + $0x10] sm:$0xf]
      %s549 = scalar_lea.vmem %s3, 120
      %v550 = vld [vmem:[%s549] sm:$0xff]
      %v551 = vld [vmem:[%s549 + $0x8] sm:$0xff]
      %v552 = vld [vmem:[%s549 + $0x10] sm:$0xf]
      %vm553 = vcmask 162816
      %v555 = vsel %vm553, %v524, 0
      %v558 = vsel %vm553, %v526, 0
      %v561 = vsel %vm553, %v528, 0
      %v564 = vsel %vm553, %v530, 0
      %v567 = vsel %vm553, %v532, 0
      %v570 = vsel %vm553, %v534, 0
      %v573 = vsel %vm553, %v536, 0
      %v576 = vsel %vm553, %v538, 0
      %vm578 = vcmask 1043456
      %v580 = vsel %vm578, %v552, 0
      %582 = vmatprep.subr.mxu0 0.0
      %583 = vmatpush1.msra.mxu0 0.0
      %584 = vmatprep.subr.mxu0 0.0
      %585 = vmatpush1.msra.mxu0 0.0
      %586 = vmatprep.subr.mxu0 0.0
      %587 = vmatpush1.msra.mxu0 0.0
      %588 = vmatprep.subr.mxu0 0.0
      %589 = vmatpush1.msra.mxu0 0.0
      %590 = vmatprep.subr.mxu0 0.0
      %591 = vmatpush1.msra.mxu0 0.0
      %592 = vmatprep.subr.mxu0 0.0
      %593 = vmatpush1.msra.mxu0 0.0
      %594 = vmatprep.subr.mxu0 0.0
      %595 = vmatpush1.msra.mxu0 0.0
      %596 = vmatprep.subr.mxu0 0.0
      %597 = vmatpush1.msra.mxu0 0.0
      %598 = vmatprep.subr.mxu0 0.0
      %599 = vmatpush1.msra.mxu0 0.0
      %600 = vmatprep.subr.mxu0 0.0
      %601 = vmatpush1.msra.mxu0 0.0
      %602 = vmatprep.subr.mxu0 0.0
      %603 = vmatpush1.msra.mxu0 0.0
      %604 = vmatprep.subr.mxu0 0.0
      %605 = vmatpush1.msra.mxu0 0.0
      %606 = vmatprep.subr.mxu0 0.0
      %607 = vmatpush1.msra.mxu0 0.0
      %608 = vmatprep.subr.mxu0 0.0
      %609 = vmatpush1.msra.mxu0 %v580
      %610 = vmatprep.subr.mxu0 0.0
      %611 = vmatpush1.msra.mxu0 %v551
      %612 = vmatprep.subr.mxu0 0.0
      %613 = vmatpush1.msra.mxu0 %v550
      %614 = vmatprep.subr.mxu0 0.0
      %615 = vmatpush2.msra.mxu0 0.0
      %616 = vmatprep.subr.mxu0 0.0
      %617 = vmatpush2.msra.mxu0 0.0
      %618 = vmatprep.subr.mxu0 0.0
      %619 = vmatpush2.msra.mxu0 0.0
      %620 = vmatprep.subr.mxu0 0.0
      %621 = vmatpush2.msra.mxu0 0.0
      %622 = vmatprep.subr.mxu0 0.0
      %623 = vmatpush2.msra.mxu0 0.0
      %624 = vmatprep.subr.mxu0 0.0
      %625 = vmatpush2.msra.mxu0 0.0
      %626 = vmatprep.subr.mxu0 0.0
      %627 = vmatpush2.msra.mxu0 0.0
      %628 = vmatprep.subr.mxu0 0.0
      %629 = vmatpush2.msra.mxu0 0.0
      %630 = vmatprep.subr.mxu0 0.0
      %631 = vmatpush2.msra.mxu0 0.0
      %632 = vmatprep.subr.mxu0 0.0
      %633 = vmatpush2.msra.mxu0 0.0
      %634 = vmatprep.subr.mxu0 0.0
      %635 = vmatpush2.msra.mxu0 0.0
      %636 = vmatprep.subr.mxu0 0.0
      %637 = vmatpush2.msra.mxu0 0.0
      %638 = vmatprep.subr.mxu0 0.0
      %639 = vmatpush2.msra.mxu0 0.0
      %640 = vmatprep.subr.mxu0 0.0
      %641 = vmatpush2.msra.mxu0 0.0
      %642 = vmatprep.subr.mxu0 0.0
      %643 = vmatpush2.msra.mxu0 0.0
      %644 = vmatprep.subr.mxu0 0.0
      %645 = vmatpush2.msra.mxu0 0.0
      %646 = vmatprep.mubr.f32.mxu0 0.0
      %647 = vmatmul.mubr.f32.gmra.mxu0 %v555
      %v648 = vpop.f32.mrf.mxu0
      %v649 = vadd.f32 0.0, %v648
      %v650 = vpop.f32.mrf.mxu0
      %651 = vmatprep.mubr.f32.mxu0 0.0
      %652 = vmatmul.mubr.f32.gmra.mxu0 %v558
      %v653 = vpop.f32.mrf.mxu0
      %v654 = vadd.f32 0.0, %v653
      %v655 = vpop.f32.mrf.mxu0
      %656 = vmatprep.mubr.f32.mxu0 0.0
      %657 = vmatmul.mubr.f32.gmra.mxu0 %v561
      %v658 = vpop.f32.mrf.mxu0
      %v659 = vadd.f32 0.0, %v658
      %v660 = vpop.f32.mrf.mxu0
      %661 = vmatprep.mubr.f32.mxu0 0.0
      %662 = vmatmul.mubr.f32.gmra.mxu0 %v564
      %v663 = vpop.f32.mrf.mxu0
      %v664 = vadd.f32 0.0, %v663
      %v665 = vpop.f32.mrf.mxu0
      %666 = vmatprep.mubr.f32.mxu0 0.0
      %667 = vmatmul.mubr.f32.gmra.mxu0 %v567
      %v668 = vpop.f32.mrf.mxu0
      %v669 = vadd.f32 0.0, %v668
      %v670 = vpop.f32.mrf.mxu0
      %671 = vmatprep.mubr.f32.mxu0 0.0
      %672 = vmatmul.mubr.f32.gmra.mxu0 %v570
      %v673 = vpop.f32.mrf.mxu0
      %v674 = vadd.f32 0.0, %v673
      %v675 = vpop.f32.mrf.mxu0
      %676 = vmatprep.mubr.f32.mxu0 0.0
      %677 = vmatmul.mubr.f32.gmra.mxu0 %v573
      %v678 = vpop.f32.mrf.mxu0
      %v679 = vadd.f32 0.0, %v678
      %v680 = vpop.f32.mrf.mxu0
      %681 = vmatprep.mubr.f32.mxu0 0.0
      %682 = vmatmul.mubr.f32.gmra.mxu0 %v576
      %v683 = vpop.f32.mrf.mxu0
      %v684 = vadd.f32 0.0, %v683
      %v685 = vpop.f32.mrf.mxu0
      %686 = vdwg.mxu0
      %v688 = vsel %vm553, %v522, 0
      %v691 = vsel %vm578, %v548, 0
      %693 = vmatprep.subr.mxu0 0.0
      %694 = vmatpush1.msra.mxu0 0.0
      %695 = vmatprep.subr.mxu0 0.0
      %696 = vmatpush1.msra.mxu0 0.0
      %697 = vmatprep.subr.mxu0 0.0
      %698 = vmatpush1.msra.mxu0 0.0
      %699 = vmatprep.subr.mxu0 0.0
      %700 = vmatpush1.msra.mxu0 0.0
      %701 = vmatprep.subr.mxu0 0.0
      %702 = vmatpush1.msra.mxu0 0.0
      %703 = vmatprep.subr.mxu0 0.0
      %704 = vmatpush1.msra.mxu0 0.0
      %705 = vmatprep.subr.mxu0 0.0
      %706 = vmatpush1.msra.mxu0 0.0
      %707 = vmatprep.subr.mxu0 0.0
      %708 = vmatpush1.msra.mxu0 0.0
      %709 = vmatprep.subr.mxu0 0.0
      %710 = vmatpush1.msra.mxu0 0.0
      %711 = vmatprep.subr.mxu0 0.0
      %712 = vmatpush1.msra.mxu0 0.0
      %713 = vmatprep.subr.mxu0 0.0
      %714 = vmatpush1.msra.mxu0 0.0
      %715 = vmatprep.subr.mxu0 0.0
      %716 = vmatpush1.msra.mxu0 0.0
      %717 = vmatprep.subr.mxu0 0.0
      %718 = vmatpush1.msra.mxu0 0.0
      %719 = vmatprep.subr.mxu0 0.0
      %720 = vmatpush1.msra.mxu0 %v691
      %721 = vmatprep.subr.mxu0 0.0
      %722 = vmatpush1.msra.mxu0 %v547
      %723 = vmatprep.subr.mxu0 0.0
      %724 = vmatpush1.msra.mxu0 %v546
      %725 = vmatprep.subr.mxu0 0.0
      %726 = vmatpush2.msra.mxu0 0.0
      %727 = vmatprep.subr.mxu0 0.0
      %728 = vmatpush2.msra.mxu0 0.0
      %729 = vmatprep.subr.mxu0 0.0
      %730 = vmatpush2.msra.mxu0 0.0
      %731 = vmatprep.subr.mxu0 0.0
      %732 = vmatpush2.msra.mxu0 0.0
      %733 = vmatprep.subr.mxu0 0.0
      %734 = vmatpush2.msra.mxu0 0.0
      %735 = vmatprep.subr.mxu0 0.0
      %736 = vmatpush2.msra.mxu0 0.0
      %737 = vmatprep.subr.mxu0 0.0
      %738 = vmatpush2.msra.mxu0 0.0
      %739 = vmatprep.subr.mxu0 0.0
      %740 = vmatpush2.msra.mxu0 0.0
      %741 = vmatprep.subr.mxu0 0.0
      %742 = vmatpush2.msra.mxu0 0.0
      %743 = vmatprep.subr.mxu0 0.0
      %744 = vmatpush2.msra.mxu0 0.0
      %745 = vmatprep.subr.mxu0 0.0
      %746 = vmatpush2.msra.mxu0 0.0
      %747 = vmatprep.subr.mxu0 0.0
      %748 = vmatpush2.msra.mxu0 0.0
      %749 = vmatprep.subr.mxu0 0.0
      %750 = vmatpush2.msra.mxu0 0.0
      %751 = vmatprep.subr.mxu0 0.0
      %752 = vmatpush2.msra.mxu0 0.0
      %753 = vmatprep.subr.mxu0 0.0
      %754 = vmatpush2.msra.mxu0 0.0
      %755 = vmatprep.subr.mxu0 0.0
      %756 = vmatpush2.msra.mxu0 0.0
      %757 = vmatprep.mubr.f32.mxu0 0.0
      %758 = vmatmul.mubr.f32.gmra.mxu0 %v688
      %v759 = vpop.f32.mrf.mxu0
      %v760 = vadd.f32 %v649, %v759
      %v761 = vpop.f32.mrf.mxu0
      %762 = vmatprep.mubr.f32.mxu0 0.0
      %763 = vmatmul.mubr.f32.gmra.mxu0 %v555
      %v764 = vpop.f32.mrf.mxu0
      %v765 = vadd.f32 %v654, %v764
      %v766 = vpop.f32.mrf.mxu0
      %767 = vmatprep.mubr.f32.mxu0 0.0
      %768 = vmatmul.mubr.f32.gmra.mxu0 %v558
      %v769 = vpop.f32.mrf.mxu0
      %v770 = vadd.f32 %v659, %v769
      %v771 = vpop.f32.mrf.mxu0
      %772 = vmatprep.mubr.f32.mxu0 0.0
      %773 = vmatmul.mubr.f32.gmra.mxu0 %v561
      %v774 = vpop.f32.mrf.mxu0
      %v775 = vadd.f32 %v664, %v774
      %v776 = vpop.f32.mrf.mxu0
      %777 = vmatprep.mubr.f32.mxu0 0.0
      %778 = vmatmul.mubr.f32.gmra.mxu0 %v564
      %v779 = vpop.f32.mrf.mxu0
      %v780 = vadd.f32 %v669, %v779
      %v781 = vpop.f32.mrf.mxu0
      %782 = vmatprep.mubr.f32.mxu0 0.0
      %783 = vmatmul.mubr.f32.gmra.mxu0 %v567
      %v784 = vpop.f32.mrf.mxu0
      %v785 = vadd.f32 %v674, %v784
      %v786 = vpop.f32.mrf.mxu0
      %787 = vmatprep.mubr.f32.mxu0 0.0
      %788 = vmatmul.mubr.f32.gmra.mxu0 %v570
      %v789 = vpop.f32.mrf.mxu0
      %v790 = vadd.f32 %v679, %v789
      %v791 = vpop.f32.mrf.mxu0
      %792 = vmatprep.mubr.f32.mxu0 0.0
      %793 = vmatmul.mubr.f32.gmra.mxu0 %v573
      %v794 = vpop.f32.mrf.mxu0
      %v795 = vadd.f32 %v684, %v794
      %v796 = vpop.f32.mrf.mxu0
      %797 = vdwg.mxu0
      %s798 = scalar_lea.vmem %s3, 240
      %v799 = vld [vmem:[%s798] sm:$0xff]
      %v800 = vld [vmem:[%s798 + $0x8] sm:$0xff]
      %v801 = vld [vmem:[%s798 + $0x10] sm:$0xf]
      %v803 = vsel %vm553, %v540, 0
      %v806 = vsel %vm578, %v801, 0
      %808 = vmatprep.subr.mxu0 0.0
      %809 = vmatpush1.msra.mxu0 0.0
      %810 = vmatprep.subr.mxu0 0.0
      %811 = vmatpush1.msra.mxu0 0.0
      %812 = vmatprep.subr.mxu0 0.0
      %813 = vmatpush1.msra.mxu0 0.0
      %814 = vmatprep.subr.mxu0 0.0
      %815 = vmatpush1.msra.mxu0 0.0
      %816 = vmatprep.subr.mxu0 0.0
      %817 = vmatpush1.msra.mxu0 0.0
      %818 = vmatprep.subr.mxu0 0.0
      %819 = vmatpush1.msra.mxu0 0.0
      %820 = vmatprep.subr.mxu0 0.0
      %821 = vmatpush1.msra.mxu0 0.0
      %822 = vmatprep.subr.mxu0 0.0
      %823 = vmatpush1.msra.mxu0 0.0
      %824 = vmatprep.subr.mxu0 0.0
      %825 = vmatpush1.msra.mxu0 0.0
      %826 = vmatprep.subr.mxu0 0.0
      %827 = vmatpush1.msra.mxu0 0.0
      %828 = vmatprep.subr.mxu0 0.0
      %829 = vmatpush1.msra.mxu0 0.0
      %830 = vmatprep.subr.mxu0 0.0
      %831 = vmatpush1.msra.mxu0 0.0
      %832 = vmatprep.subr.mxu0 0.0
      %833 = vmatpush1.msra.mxu0 0.0
      %834 = vmatprep.subr.mxu0 0.0
      %835 = vmatpush1.msra.mxu0 %v806
      %836 = vmatprep.subr.mxu0 0.0
      %837 = vmatpush1.msra.mxu0 %v800
      %838 = vmatprep.subr.mxu0 0.0
      %839 = vmatpush1.msra.mxu0 %v799
      %840 = vmatprep.subr.mxu0 0.0
      %841 = vmatpush2.msra.mxu0 0.0
      %842 = vmatprep.subr.mxu0 0.0
      %843 = vmatpush2.msra.mxu0 0.0
      %844 = vmatprep.subr.mxu0 0.0
      %845 = vmatpush2.msra.mxu0 0.0
      %846 = vmatprep.subr.mxu0 0.0
      %847 = vmatpush2.msra.mxu0 0.0
      %848 = vmatprep.subr.mxu0 0.0
      %849 = vmatpush2.msra.mxu0 0.0
      %850 = vmatprep.subr.mxu0 0.0
      %851 = vmatpush2.msra.mxu0 0.0
      %852 = vmatprep.subr.mxu0 0.0
      %853 = vmatpush2.msra.mxu0 0.0
      %854 = vmatprep.subr.mxu0 0.0
      %855 = vmatpush2.msra.mxu0 0.0
      %856 = vmatprep.subr.mxu0 0.0
      %857 = vmatpush2.msra.mxu0 0.0
      %858 = vmatprep.subr.mxu0 0.0
      %859 = vmatpush2.msra.mxu0 0.0
      %860 = vmatprep.subr.mxu0 0.0
      %861 = vmatpush2.msra.mxu0 0.0
      %862 = vmatprep.subr.mxu0 0.0
      %863 = vmatpush2.msra.mxu0 0.0
      %864 = vmatprep.subr.mxu0 0.0
      %865 = vmatpush2.msra.mxu0 0.0
      %866 = vmatprep.subr.mxu0 0.0
      %867 = vmatpush2.msra.mxu0 0.0
      %868 = vmatprep.subr.mxu0 0.0
      %869 = vmatpush2.msra.mxu0 0.0
      %870 = vmatprep.subr.mxu0 0.0
      %871 = vmatpush2.msra.mxu0 0.0
      %872 = vmatprep.mubr.f32.mxu0 0.0
      %873 = vmatmul.mubr.f32.gmra.mxu0 %v558
      %v874 = vpop.f32.mrf.mxu0
      %v875 = vadd.f32 0.0, %v874
      %v876 = vpop.f32.mrf.mxu0
      %877 = vmatprep.mubr.f32.mxu0 0.0
      %878 = vmatmul.mubr.f32.gmra.mxu0 %v561
      %v879 = vpop.f32.mrf.mxu0
      %v880 = vadd.f32 0.0, %v879
      %v881 = vpop.f32.mrf.mxu0
      %882 = vmatprep.mubr.f32.mxu0 0.0
      %883 = vmatmul.mubr.f32.gmra.mxu0 %v564
      %v884 = vpop.f32.mrf.mxu0
      %v885 = vadd.f32 0.0, %v884
      %v886 = vpop.f32.mrf.mxu0
      %887 = vmatprep.mubr.f32.mxu0 0.0
      %888 = vmatmul.mubr.f32.gmra.mxu0 %v567
      %v889 = vpop.f32.mrf.mxu0
      %v890 = vadd.f32 0.0, %v889
      %v891 = vpop.f32.mrf.mxu0
      %892 = vmatprep.mubr.f32.mxu0 0.0
      %893 = vmatmul.mubr.f32.gmra.mxu0 %v570
      %v894 = vpop.f32.mrf.mxu0
      %v895 = vadd.f32 0.0, %v894
      %v896 = vpop.f32.mrf.mxu0
      %897 = vmatprep.mubr.f32.mxu0 0.0
      %898 = vmatmul.mubr.f32.gmra.mxu0 %v573
      %v899 = vpop.f32.mrf.mxu0
      %v900 = vadd.f32 0.0, %v899
      %v901 = vpop.f32.mrf.mxu0
      %902 = vmatprep.mubr.f32.mxu0 0.0
      %903 = vmatmul.mubr.f32.gmra.mxu0 %v576
      %v904 = vpop.f32.mrf.mxu0
      %v905 = vadd.f32 0.0, %v904
      %v906 = vpop.f32.mrf.mxu0
      %907 = vmatprep.mubr.f32.mxu0 0.0
      %908 = vmatmul.mubr.f32.gmra.mxu0 %v803
      %v909 = vpop.f32.mrf.mxu0
      %v910 = vadd.f32 0.0, %v909
      %v911 = vpop.f32.mrf.mxu0
      %912 = vdwg.mxu0
      %v913 = vadd.f32 %v760, %v875
      %v914 = vadd.f32 %v765, %v880
      %v915 = vadd.f32 %v770, %v885
      %v916 = vadd.f32 %v775, %v890
      %v917 = vadd.f32 %v780, %v895
      %v918 = vadd.f32 %v785, %v900
      %v919 = vadd.f32 %v790, %v905
      %v920 = vadd.f32 %v795, %v910
      %s921 = scalar_lea.vmem %s3, 360
      %v922 = vld [vmem:[%s921] sm:$0xff]
      %v923 = vld [vmem:[%s921 + $0x8] sm:$0xff]
      %v924 = vld [vmem:[%s921 + $0x10] sm:$0xf]
      %v926 = vsel %vm553, %v542, 0
      %v929 = vsel %vm578, %v924, 0
      %931 = vmatprep.subr.mxu0 0.0
      %932 = vmatpush1.msra.mxu0 0.0
      %933 = vmatprep.subr.mxu0 0.0
      %934 = vmatpush1.msra.mxu0 0.0
      %935 = vmatprep.subr.mxu0 0.0
      %936 = vmatpush1.msra.mxu0 0.0
      %937 = vmatprep.subr.mxu0 0.0
      %938 = vmatpush1.msra.mxu0 0.0
      %939 = vmatprep.subr.mxu0 0.0
      %940 = vmatpush1.msra.mxu0 0.0
      %941 = vmatprep.subr.mxu0 0.0
      %942 = vmatpush1.msra.mxu0 0.0
      %943 = vmatprep.subr.mxu0 0.0
      %944 = vmatpush1.msra.mxu0 0.0
      %945 = vmatprep.subr.mxu0 0.0
      %946 = vmatpush1.msra.mxu0 0.0
      %947 = vmatprep.subr.mxu0 0.0
      %948 = vmatpush1.msra.mxu0 0.0
      %949 = vmatprep.subr.mxu0 0.0
      %950 = vmatpush1.msra.mxu0 0.0
      %951 = vmatprep.subr.mxu0 0.0
      %952 = vmatpush1.msra.mxu0 0.0
      %953 = vmatprep.subr.mxu0 0.0
      %954 = vmatpush1.msra.mxu0 0.0
      %955 = vmatprep.subr.mxu0 0.0
      %956 = vmatpush1.msra.mxu0 0.0
      %957 = vmatprep.subr.mxu0 0.0
      %958 = vmatpush1.msra.mxu0 %v929
      %959 = vmatprep.subr.mxu0 0.0
      %960 = vmatpush1.msra.mxu0 %v923
      %961 = vmatprep.subr.mxu0 0.0
      %962 = vmatpush1.msra.mxu0 %v922
      %963 = vmatprep.subr.mxu0 0.0
      %964 = vmatpush2.msra.mxu0 0.0
      %965 = vmatprep.subr.mxu0 0.0
      %966 = vmatpush2.msra.mxu0 0.0
      %967 = vmatprep.subr.mxu0 0.0
      %968 = vmatpush2.msra.mxu0 0.0
      %969 = vmatprep.subr.mxu0 0.0
      %970 = vmatpush2.msra.mxu0 0.0
      %971 = vmatprep.subr.mxu0 0.0
      %972 = vmatpush2.msra.mxu0 0.0
      %973 = vmatprep.subr.mxu0 0.0
      %974 = vmatpush2.msra.mxu0 0.0
      %975 = vmatprep.subr.mxu0 0.0
      %976 = vmatpush2.msra.mxu0 0.0
      %977 = vmatprep.subr.mxu0 0.0
      %978 = vmatpush2.msra.mxu0 0.0
      %979 = vmatprep.subr.mxu0 0.0
      %980 = vmatpush2.msra.mxu0 0.0
      %981 = vmatprep.subr.mxu0 0.0
      %982 = vmatpush2.msra.mxu0 0.0
      %983 = vmatprep.subr.mxu0 0.0
      %984 = vmatpush2.msra.mxu0 0.0
      %985 = vmatprep.subr.mxu0 0.0
      %986 = vmatpush2.msra.mxu0 0.0
      %987 = vmatprep.subr.mxu0 0.0
      %988 = vmatpush2.msra.mxu0 0.0
      %989 = vmatprep.subr.mxu0 0.0
      %990 = vmatpush2.msra.mxu0 0.0
      %991 = vmatprep.subr.mxu0 0.0
      %992 = vmatpush2.msra.mxu0 0.0
      %993 = vmatprep.subr.mxu0 0.0
      %994 = vmatpush2.msra.mxu0 0.0
      %995 = vmatprep.mubr.f32.mxu0 0.0
      %996 = vmatmul.mubr.f32.gmra.mxu0 %v561
      %v997 = vpop.f32.mrf.mxu0
      %v998 = vadd.f32 0.0, %v997
      %v999 = vpop.f32.mrf.mxu0
      %1000 = vmatprep.mubr.f32.mxu0 0.0
      %1001 = vmatmul.mubr.f32.gmra.mxu0 %v564
      %v1002 = vpop.f32.mrf.mxu0
      %v1003 = vadd.f32 0.0, %v1002
      %v1004 = vpop.f32.mrf.mxu0
      %1005 = vmatprep.mubr.f32.mxu0 0.0
      %1006 = vmatmul.mubr.f32.gmra.mxu0 %v567
      %v1007 = vpop.f32.mrf.mxu0
      %v1008 = vadd.f32 0.0, %v1007
      %v1009 = vpop.f32.mrf.mxu0
      %1010 = vmatprep.mubr.f32.mxu0 0.0
      %1011 = vmatmul.mubr.f32.gmra.mxu0 %v570
      %v1012 = vpop.f32.mrf.mxu0
      %v1013 = vadd.f32 0.0, %v1012
      %v1014 = vpop.f32.mrf.mxu0
      %1015 = vmatprep.mubr.f32.mxu0 0.0
      %1016 = vmatmul.mubr.f32.gmra.mxu0 %v573
      %v1017 = vpop.f32.mrf.mxu0
      %v1018 = vadd.f32 0.0, %v1017
      %v1019 = vpop.f32.mrf.mxu0
      %1020 = vmatprep.mubr.f32.mxu0 0.0
      %1021 = vmatmul.mubr.f32.gmra.mxu0 %v576
      %v1022 = vpop.f32.mrf.mxu0
      %v1023 = vadd.f32 0.0, %v1022
      %v1024 = vpop.f32.mrf.mxu0
      %1025 = vmatprep.mubr.f32.mxu0 0.0
      %1026 = vmatmul.mubr.f32.gmra.mxu0 %v803
      %v1027 = vpop.f32.mrf.mxu0
      %v1028 = vadd.f32 0.0, %v1027
      %v1029 = vpop.f32.mrf.mxu0
      %1030 = vmatprep.mubr.f32.mxu0 0.0
      %1031 = vmatmul.mubr.f32.gmra.mxu0 %v926
      %v1032 = vpop.f32.mrf.mxu0
      %v1033 = vadd.f32 0.0, %v1032
      %v1034 = vpop.f32.mrf.mxu0
      %1035 = vdwg.mxu0
      %v1036 = vadd.f32 %v913, %v998
      %v1037 = vadd.f32 %v914, %v1003
      %v1038 = vadd.f32 %v915, %v1008
      %v1039 = vadd.f32 %v916, %v1013
      %v1040 = vadd.f32 %v917, %v1018
      %v1041 = vadd.f32 %v918, %v1023
      %v1042 = vadd.f32 %v919, %v1028
      %v1043 = vadd.f32 %v920, %v1033
      %s1044 = scalar_lea.vmem %s3, 480
      %v1045 = vld [vmem:[%s1044] sm:$0xff]
      %v1046 = vld [vmem:[%s1044 + $0x8] sm:$0xff]
      %v1047 = vld [vmem:[%s1044 + $0x10] sm:$0xf]
      %v1049 = vsel %vm553, %v544, 0
      %v1052 = vsel %vm578, %v1047, 0
      %1054 = vmatprep.subr.mxu0 0.0
      %1055 = vmatpush1.msra.mxu0 0.0
      %1056 = vmatprep.subr.mxu0 0.0
      %1057 = vmatpush1.msra.mxu0 0.0
      %1058 = vmatprep.subr.mxu0 0.0
      %1059 = vmatpush1.msra.mxu0 0.0
      %1060 = vmatprep.subr.mxu0 0.0
      %1061 = vmatpush1.msra.mxu0 0.0
      %1062 = vmatprep.subr.mxu0 0.0
      %1063 = vmatpush1.msra.mxu0 0.0
      %1064 = vmatprep.subr.mxu0 0.0
      %1065 = vmatpush1.msra.mxu0 0.0
      %1066 = vmatprep.subr.mxu0 0.0
      %1067 = vmatpush1.msra.mxu0 0.0
      %1068 = vmatprep.subr.mxu0 0.0
      %1069 = vmatpush1.msra.mxu0 0.0
      %1070 = vmatprep.subr.mxu0 0.0
      %1071 = vmatpush1.msra.mxu0 0.0
      %1072 = vmatprep.subr.mxu0 0.0
      %1073 = vmatpush1.msra.mxu0 0.0
      %1074 = vmatprep.subr.mxu0 0.0
      %1075 = vmatpush1.msra.mxu0 0.0
      %1076 = vmatprep.subr.mxu0 0.0
      %1077 = vmatpush1.msra.mxu0 0.0
      %1078 = vmatprep.subr.mxu0 0.0
      %1079 = vmatpush1.msra.mxu0 0.0
      %1080 = vmatprep.subr.mxu0 0.0
      %1081 = vmatpush1.msra.mxu0 %v1052
      %1082 = vmatprep.subr.mxu0 0.0
      %1083 = vmatpush1.msra.mxu0 %v1046
      %1084 = vmatprep.subr.mxu0 0.0
      %1085 = vmatpush1.msra.mxu0 %v1045
      %1086 = vmatprep.subr.mxu0 0.0
      %1087 = vmatpush2.msra.mxu0 0.0
      %1088 = vmatprep.subr.mxu0 0.0
      %1089 = vmatpush2.msra.mxu0 0.0
      %1090 = vmatprep.subr.mxu0 0.0
      %1091 = vmatpush2.msra.mxu0 0.0
      %1092 = vmatprep.subr.mxu0 0.0
      %1093 = vmatpush2.msra.mxu0 0.0
      %1094 = vmatprep.subr.mxu0 0.0
      %1095 = vmatpush2.msra.mxu0 0.0
      %1096 = vmatprep.subr.mxu0 0.0
      %1097 = vmatpush2.msra.mxu0 0.0
      %1098 = vmatprep.subr.mxu0 0.0
      %1099 = vmatpush2.msra.mxu0 0.0
      %1100 = vmatprep.subr.mxu0 0.0
      %1101 = vmatpush2.msra.mxu0 0.0
      %1102 = vmatprep.subr.mxu0 0.0
      %1103 = vmatpush2.msra.mxu0 0.0
      %1104 = vmatprep.subr.mxu0 0.0
      %1105 = vmatpush2.msra.mxu0 0.0
      %1106 = vmatprep.subr.mxu0 0.0
      %1107 = vmatpush2.msra.mxu0 0.0
      %1108 = vmatprep.subr.mxu0 0.0
      %1109 = vmatpush2.msra.mxu0 0.0
      %1110 = vmatprep.subr.mxu0 0.0
      %1111 = vmatpush2.msra.mxu0 0.0
      %1112 = vmatprep.subr.mxu0 0.0
      %1113 = vmatpush2.msra.mxu0 0.0
      %1114 = vmatprep.subr.mxu0 0.0
      %1115 = vmatpush2.msra.mxu0 0.0
      %1116 = vmatprep.subr.mxu0 0.0
      %1117 = vmatpush2.msra.mxu0 0.0
      %1118 = vmatprep.mubr.f32.mxu0 0.0
      %1119 = vmatmul.mubr.f32.gmra.mxu0 %v564
      %v1120 = vpop.f32.mrf.mxu0
      %v1121 = vadd.f32 0.0, %v1120
      %v1122 = vpop.f32.mrf.mxu0
      %1123 = vmatprep.mubr.f32.mxu0 0.0
      %1124 = vmatmul.mubr.f32.gmra.mxu0 %v567
      %v1125 = vpop.f32.mrf.mxu0
      %v1126 = vadd.f32 0.0, %v1125
      %v1127 = vpop.f32.mrf.mxu0
      %1128 = vmatprep.mubr.f32.mxu0 0.0
      %1129 = vmatmul.mubr.f32.gmra.mxu0 %v570
      %v1130 = vpop.f32.mrf.mxu0
      %v1131 = vadd.f32 0.0, %v1130
      %v1132 = vpop.f32.mrf.mxu0
      %1133 = vmatprep.mubr.f32.mxu0 0.0
      %1134 = vmatmul.mubr.f32.gmra.mxu0 %v573
      %v1135 = vpop.f32.mrf.mxu0
      %v1136 = vadd.f32 0.0, %v1135
      %v1137 = vpop.f32.mrf.mxu0
      %1138 = vmatprep.mubr.f32.mxu0 0.0
      %1139 = vmatmul.mubr.f32.gmra.mxu0 %v576
      %v1140 = vpop.f32.mrf.mxu0
      %v1141 = vadd.f32 0.0, %v1140
      %v1142 = vpop.f32.mrf.mxu0
      %1143 = vmatprep.mubr.f32.mxu0 0.0
      %1144 = vmatmul.mubr.f32.gmra.mxu0 %v803
      %v1145 = vpop.f32.mrf.mxu0
      %v1146 = vadd.f32 0.0, %v1145
      %v1147 = vpop.f32.mrf.mxu0
      %1148 = vmatprep.mubr.f32.mxu0 0.0
      %1149 = vmatmul.mubr.f32.gmra.mxu0 %v926
      %v1150 = vpop.f32.mrf.mxu0
      %v1151 = vadd.f32 0.0, %v1150
      %v1152 = vpop.f32.mrf.mxu0
      %1153 = vmatprep.mubr.f32.mxu0 0.0
      %1154 = vmatmul.mubr.f32.gmra.mxu0 %v1049
      %v1155 = vpop.f32.mrf.mxu0
      %v1156 = vadd.f32 0.0, %v1155
      %v1157 = vpop.f32.mrf.mxu0
      %1158 = vdwg.mxu0
      %v1159 = vadd.f32 %v1036, %v1121
      %v1160 = vadd.f32 %v1037, %v1126
      %v1161 = vadd.f32 %v1038, %v1131
      %v1162 = vadd.f32 %v1039, %v1136
      %v1163 = vadd.f32 %v1040, %v1141
      %v1164 = vadd.f32 %v1041, %v1146
      %v1165 = vadd.f32 %v1042, %v1151
      %v1166 = vadd.f32 %v1043, %v1156
      %vm1175 = vcmask 1046528
      %v1176 = vrot.slane %v522, 1
      %v1177 = vrot.slane %v523, 1
      %v1178 = vsel %vm1175, %v1176, %v1177
      %v1179 = vrot.slane %v524, 1
      %v1180 = vrot.slane %v525, 1
      %v1181 = vsel %vm1175, %v1179, %v1180
      %v1182 = vrot.slane %v526, 1
      %v1183 = vrot.slane %v527, 1
      %v1184 = vsel %vm1175, %v1182, %v1183
      %v1185 = vrot.slane %v528, 1
      %v1186 = vrot.slane %v529, 1
      %v1187 = vsel %vm1175, %v1185, %v1186
      %v1188 = vrot.slane %v530, 1
      %v1189 = vrot.slane %v531, 1
      %v1190 = vsel %vm1175, %v1188, %v1189
      %v1191 = vrot.slane %v532, 1
      %v1192 = vrot.slane %v533, 1
      %v1193 = vsel %vm1175, %v1191, %v1192
      %v1194 = vrot.slane %v534, 1
      %v1195 = vrot.slane %v535, 1
      %v1196 = vsel %vm1175, %v1194, %v1195
      %v1197 = vrot.slane %v536, 1
      %v1198 = vrot.slane %v537, 1
      %v1199 = vsel %vm1175, %v1197, %v1198
      %s1200 = scalar_lea.vmem %s3, 24
      %v1201 = vld [vmem:[%s1200] sm:$0xff]
      %v1202 = vld [vmem:[%s1200 + $0x8] sm:$0xff]
      %v1203 = vld [vmem:[%s1200 + $0x10] sm:$0xf]
      %v1204 = vsel %vm553, %v1178, 0
      %v1206 = vsel %vm553, %v1181, 0
      %v1208 = vsel %vm553, %v1184, 0
      %v1210 = vsel %vm553, %v1187, 0
      %v1212 = vsel %vm553, %v1190, 0
      %v1214 = vsel %vm553, %v1193, 0
      %v1216 = vsel %vm553, %v1196, 0
      %v1218 = vsel %vm553, %v1199, 0
      %v1221 = vsel %vm578, %v1203, 0
      %1223 = vmatprep.subr.mxu0 0.0
      %1224 = vmatpush1.msra.mxu0 0.0
      %1225 = vmatprep.subr.mxu0 0.0
      %1226 = vmatpush1.msra.mxu0 0.0
      %1227 = vmatprep.subr.mxu0 0.0
      %1228 = vmatpush1.msra.mxu0 0.0
      %1229 = vmatprep.subr.mxu0 0.0
      %1230 = vmatpush1.msra.mxu0 0.0
      %1231 = vmatprep.subr.mxu0 0.0
      %1232 = vmatpush1.msra.mxu0 0.0
      %1233 = vmatprep.subr.mxu0 0.0
      %1234 = vmatpush1.msra.mxu0 0.0
      %1235 = vmatprep.subr.mxu0 0.0
      %1236 = vmatpush1.msra.mxu0 0.0
      %1237 = vmatprep.subr.mxu0 0.0
      %1238 = vmatpush1.msra.mxu0 0.0
      %1239 = vmatprep.subr.mxu0 0.0
      %1240 = vmatpush1.msra.mxu0 0.0
      %1241 = vmatprep.subr.mxu0 0.0
      %1242 = vmatpush1.msra.mxu0 0.0
      %1243 = vmatprep.subr.mxu0 0.0
      %1244 = vmatpush1.msra.mxu0 0.0
      %1245 = vmatprep.subr.mxu0 0.0
      %1246 = vmatpush1.msra.mxu0 0.0
      %1247 = vmatprep.subr.mxu0 0.0
      %1248 = vmatpush1.msra.mxu0 0.0
      %1249 = vmatprep.subr.mxu0 0.0
      %1250 = vmatpush1.msra.mxu0 %v1221
      %1251 = vmatprep.subr.mxu0 0.0
      %1252 = vmatpush1.msra.mxu0 %v1202
      %1253 = vmatprep.subr.mxu0 0.0
      %1254 = vmatpush1.msra.mxu0 %v1201
      %1255 = vmatprep.subr.mxu0 0.0
      %1256 = vmatpush2.msra.mxu0 0.0
      %1257 = vmatprep.subr.mxu0 0.0
      %1258 = vmatpush2.msra.mxu0 0.0
      %1259 = vmatprep.subr.mxu0 0.0
      %1260 = vmatpush2.msra.mxu0 0.0
      %1261 = vmatprep.subr.mxu0 0.0
      %1262 = vmatpush2.msra.mxu0 0.0
      %1263 = vmatprep.subr.mxu0 0.0
      %1264 = vmatpush2.msra.mxu0 0.0
      %1265 = vmatprep.subr.mxu0 0.0
      %1266 = vmatpush2.msra.mxu0 0.0
      %1267 = vmatprep.subr.mxu0 0.0
      %1268 = vmatpush2.msra.mxu0 0.0
      %1269 = vmatprep.subr.mxu0 0.0
      %1270 = vmatpush2.msra.mxu0 0.0
      %1271 = vmatprep.subr.mxu0 0.0
      %1272 = vmatpush2.msra.mxu0 0.0
      %1273 = vmatprep.subr.mxu0 0.0
      %1274 = vmatpush2.msra.mxu0 0.0
      %1275 = vmatprep.subr.mxu0 0.0
      %1276 = vmatpush2.msra.mxu0 0.0
      %1277 = vmatprep.subr.mxu0 0.0
      %1278 = vmatpush2.msra.mxu0 0.0
      %1279 = vmatprep.subr.mxu0 0.0
      %1280 = vmatpush2.msra.mxu0 0.0
      %1281 = vmatprep.subr.mxu0 0.0
      %1282 = vmatpush2.msra.mxu0 0.0
      %1283 = vmatprep.subr.mxu0 0.0
      %1284 = vmatpush2.msra.mxu0 0.0
      %1285 = vmatprep.subr.mxu0 0.0
      %1286 = vmatpush2.msra.mxu0 0.0
      %1287 = vmatprep.mubr.f32.mxu0 0.0
      %1288 = vmatmul.mubr.f32.gmra.mxu0 %v1204
      %v1289 = vpop.f32.mrf.mxu0
      %v1290 = vadd.f32 0.0, %v1289
      %v1291 = vpop.f32.mrf.mxu0
      %1292 = vmatprep.mubr.f32.mxu0 0.0
      %1293 = vmatmul.mubr.f32.gmra.mxu0 %v1206
      %v1294 = vpop.f32.mrf.mxu0
      %v1295 = vadd.f32 0.0, %v1294
      %v1296 = vpop.f32.mrf.mxu0
      %1297 = vmatprep.mubr.f32.mxu0 0.0
      %1298 = vmatmul.mubr.f32.gmra.mxu0 %v1208
      %v1299 = vpop.f32.mrf.mxu0
      %v1300 = vadd.f32 0.0, %v1299
      %v1301 = vpop.f32.mrf.mxu0
      %1302 = vmatprep.mubr.f32.mxu0 0.0
      %1303 = vmatmul.mubr.f32.gmra.mxu0 %v1210
      %v1304 = vpop.f32.mrf.mxu0
      %v1305 = vadd.f32 0.0, %v1304
      %v1306 = vpop.f32.mrf.mxu0
      %1307 = vmatprep.mubr.f32.mxu0 0.0
      %1308 = vmatmul.mubr.f32.gmra.mxu0 %v1212
      %v1309 = vpop.f32.mrf.mxu0
      %v1310 = vadd.f32 0.0, %v1309
      %v1311 = vpop.f32.mrf.mxu0
      %1312 = vmatprep.mubr.f32.mxu0 0.0
      %1313 = vmatmul.mubr.f32.gmra.mxu0 %v1214
      %v1314 = vpop.f32.mrf.mxu0
      %v1315 = vadd.f32 0.0, %v1314
      %v1316 = vpop.f32.mrf.mxu0
      %1317 = vmatprep.mubr.f32.mxu0 0.0
      %1318 = vmatmul.mubr.f32.gmra.mxu0 %v1216
      %v1319 = vpop.f32.mrf.mxu0
      %v1320 = vadd.f32 0.0, %v1319
      %v1321 = vpop.f32.mrf.mxu0
      %1322 = vmatprep.mubr.f32.mxu0 0.0
      %1323 = vmatmul.mubr.f32.gmra.mxu0 %v1218
      %v1324 = vpop.f32.mrf.mxu0
      %v1325 = vadd.f32 0.0, %v1324
      %v1326 = vpop.f32.mrf.mxu0
      %1327 = vdwg.mxu0
      %v1328 = vadd.f32 %v1159, %v1290
      %v1329 = vadd.f32 %v1160, %v1295
      %v1330 = vadd.f32 %v1161, %v1300
      %v1331 = vadd.f32 %v1162, %v1305
      %v1332 = vadd.f32 %v1163, %v1310
      %v1333 = vadd.f32 %v1164, %v1315
      %v1334 = vadd.f32 %v1165, %v1320
      %v1335 = vadd.f32 %v1166, %v1325
      %v1337 = vrot.slane %v538, 1
      %v1338 = vrot.slane %v539, 1
      %v1339 = vsel %vm1175, %v1337, %v1338
      %s1340 = scalar_lea.vmem %s3, 144
      %v1341 = vld [vmem:[%s1340] sm:$0xff]
      %v1342 = vld [vmem:[%s1340 + $0x8] sm:$0xff]
      %v1343 = vld [vmem:[%s1340 + $0x10] sm:$0xf]
      %v1344 = vsel %vm553, %v1339, 0
      %v1347 = vsel %vm578, %v1343, 0
      %1349 = vmatprep.subr.mxu0 0.0
      %1350 = vmatpush1.msra.mxu0 0.0
      %1351 = vmatprep.subr.mxu0 0.0
      %1352 = vmatpush1.msra.mxu0 0.0
      %1353 = vmatprep.subr.mxu0 0.0
      %1354 = vmatpush1.msra.mxu0 0.0
      %1355 = vmatprep.subr.mxu0 0.0
      %1356 = vmatpush1.msra.mxu0 0.0
      %1357 = vmatprep.subr.mxu0 0.0
      %1358 = vmatpush1.msra.mxu0 0.0
      %1359 = vmatprep.subr.mxu0 0.0
      %1360 = vmatpush1.msra.mxu0 0.0
      %1361 = vmatprep.subr.mxu0 0.0
      %1362 = vmatpush1.msra.mxu0 0.0
      %1363 = vmatprep.subr.mxu0 0.0
      %1364 = vmatpush1.msra.mxu0 0.0
      %1365 = vmatprep.subr.mxu0 0.0
      %1366 = vmatpush1.msra.mxu0 0.0
      %1367 = vmatprep.subr.mxu0 0.0
      %1368 = vmatpush1.msra.mxu0 0.0
      %1369 = vmatprep.subr.mxu0 0.0
      %1370 = vmatpush1.msra.mxu0 0.0
      %1371 = vmatprep.subr.mxu0 0.0
      %1372 = vmatpush1.msra.mxu0 0.0
      %1373 = vmatprep.subr.mxu0 0.0
      %1374 = vmatpush1.msra.mxu0 0.0
      %1375 = vmatprep.subr.mxu0 0.0
      %1376 = vmatpush1.msra.mxu0 %v1347
      %1377 = vmatprep.subr.mxu0 0.0
      %1378 = vmatpush1.msra.mxu0 %v1342
      %1379 = vmatprep.subr.mxu0 0.0
      %1380 = vmatpush1.msra.mxu0 %v1341
      %1381 = vmatprep.subr.mxu0 0.0
      %1382 = vmatpush2.msra.mxu0 0.0
      %1383 = vmatprep.subr.mxu0 0.0
      %1384 = vmatpush2.msra.mxu0 0.0
      %1385 = vmatprep.subr.mxu0 0.0
      %1386 = vmatpush2.msra.mxu0 0.0
      %1387 = vmatprep.subr.mxu0 0.0
      %1388 = vmatpush2.msra.mxu0 0.0
      %1389 = vmatprep.subr.mxu0 0.0
      %1390 = vmatpush2.msra.mxu0 0.0
      %1391 = vmatprep.subr.mxu0 0.0
      %1392 = vmatpush2.msra.mxu0 0.0
      %1393 = vmatprep.subr.mxu0 0.0
      %1394 = vmatpush2.msra.mxu0 0.0
      %1395 = vmatprep.subr.mxu0 0.0
      %1396 = vmatpush2.msra.mxu0 0.0
      %1397 = vmatprep.subr.mxu0 0.0
      %1398 = vmatpush2.msra.mxu0 0.0
      %1399 = vmatprep.subr.mxu0 0.0
      %1400 = vmatpush2.msra.mxu0 0.0
      %1401 = vmatprep.subr.mxu0 0.0
      %1402 = vmatpush2.msra.mxu0 0.0
      %1403 = vmatprep.subr.mxu0 0.0
      %1404 = vmatpush2.msra.mxu0 0.0
      %1405 = vmatprep.subr.mxu0 0.0
      %1406 = vmatpush2.msra.mxu0 0.0
      %1407 = vmatprep.subr.mxu0 0.0
      %1408 = vmatpush2.msra.mxu0 0.0
      %1409 = vmatprep.subr.mxu0 0.0
      %1410 = vmatpush2.msra.mxu0 0.0
      %1411 = vmatprep.subr.mxu0 0.0
      %1412 = vmatpush2.msra.mxu0 0.0
      %1413 = vmatprep.mubr.f32.mxu0 0.0
      %1414 = vmatmul.mubr.f32.gmra.mxu0 %v1206
      %v1415 = vpop.f32.mrf.mxu0
      %v1416 = vadd.f32 0.0, %v1415
      %v1417 = vpop.f32.mrf.mxu0
      %1418 = vmatprep.mubr.f32.mxu0 0.0
      %1419 = vmatmul.mubr.f32.gmra.mxu0 %v1208
      %v1420 = vpop.f32.mrf.mxu0
      %v1421 = vadd.f32 0.0, %v1420
      %v1422 = vpop.f32.mrf.mxu0
      %1423 = vmatprep.mubr.f32.mxu0 0.0
      %1424 = vmatmul.mubr.f32.gmra.mxu0 %v1210
      %v1425 = vpop.f32.mrf.mxu0
      %v1426 = vadd.f32 0.0, %v1425
      %v1427 = vpop.f32.mrf.mxu0
      %1428 = vmatprep.mubr.f32.mxu0 0.0
      %1429 = vmatmul.mubr.f32.gmra.mxu0 %v1212
      %v1430 = vpop.f32.mrf.mxu0
      %v1431 = vadd.f32 0.0, %v1430
      %v1432 = vpop.f32.mrf.mxu0
      %1433 = vmatprep.mubr.f32.mxu0 0.0
      %1434 = vmatmul.mubr.f32.gmra.mxu0 %v1214
      %v1435 = vpop.f32.mrf.mxu0
      %v1436 = vadd.f32 0.0, %v1435
      %v1437 = vpop.f32.mrf.mxu0
      %1438 = vmatprep.mubr.f32.mxu0 0.0
      %1439 = vmatmul.mubr.f32.gmra.mxu0 %v1216
      %v1440 = vpop.f32.mrf.mxu0
      %v1441 = vadd.f32 0.0, %v1440
      %v1442 = vpop.f32.mrf.mxu0
      %1443 = vmatprep.mubr.f32.mxu0 0.0
      %1444 = vmatmul.mubr.f32.gmra.mxu0 %v1218
      %v1445 = vpop.f32.mrf.mxu0
      %v1446 = vadd.f32 0.0, %v1445
      %v1447 = vpop.f32.mrf.mxu0
      %1448 = vmatprep.mubr.f32.mxu0 0.0
      %1449 = vmatmul.mubr.f32.gmra.mxu0 %v1344
      %v1450 = vpop.f32.mrf.mxu0
      %v1451 = vadd.f32 0.0, %v1450
      %v1452 = vpop.f32.mrf.mxu0
      %1453 = vdwg.mxu0
      %v1454 = vadd.f32 %v1328, %v1416
      %v1455 = vadd.f32 %v1329, %v1421
      %v1456 = vadd.f32 %v1330, %v1426
      %v1457 = vadd.f32 %v1331, %v1431
      %v1458 = vadd.f32 %v1332, %v1436
      %v1459 = vadd.f32 %v1333, %v1441
      %v1460 = vadd.f32 %v1334, %v1446
      %v1461 = vadd.f32 %v1335, %v1451
      %v1463 = vrot.slane %v540, 1
      %v1464 = vrot.slane %v541, 1
      %v1465 = vsel %vm1175, %v1463, %v1464
      %s1466 = scalar_lea.vmem %s3, 264
      %v1467 = vld [vmem:[%s1466] sm:$0xff]
      %v1468 = vld [vmem:[%s1466 + $0x8] sm:$0xff]
      %v1469 = vld [vmem:[%s1466 + $0x10] sm:$0xf]
      %v1470 = vsel %vm553, %v1465, 0
      %v1473 = vsel %vm578, %v1469, 0
      %1475 = vmatprep.subr.mxu0 0.0
      %1476 = vmatpush1.msra.mxu0 0.0
      %1477 = vmatprep.subr.mxu0 0.0
      %1478 = vmatpush1.msra.mxu0 0.0
      %1479 = vmatprep.subr.mxu0 0.0
      %1480 = vmatpush1.msra.mxu0 0.0
      %1481 = vmatprep.subr.mxu0 0.0
      %1482 = vmatpush1.msra.mxu0 0.0
      %1483 = vmatprep.subr.mxu0 0.0
      %1484 = vmatpush1.msra.mxu0 0.0
      %1485 = vmatprep.subr.mxu0 0.0
      %1486 = vmatpush1.msra.mxu0 0.0
      %1487 = vmatprep.subr.mxu0 0.0
      %1488 = vmatpush1.msra.mxu0 0.0
      %1489 = vmatprep.subr.mxu0 0.0
      %1490 = vmatpush1.msra.mxu0 0.0
      %1491 = vmatprep.subr.mxu0 0.0
      %1492 = vmatpush1.msra.mxu0 0.0
      %1493 = vmatprep.subr.mxu0 0.0
      %1494 = vmatpush1.msra.mxu0 0.0
      %1495 = vmatprep.subr.mxu0 0.0
      %1496 = vmatpush1.msra.mxu0 0.0
      %1497 = vmatprep.subr.mxu0 0.0
      %1498 = vmatpush1.msra.mxu0 0.0
      %1499 = vmatprep.subr.mxu0 0.0
      %1500 = vmatpush1.msra.mxu0 0.0
      %1501 = vmatprep.subr.mxu0 0.0
      %1502 = vmatpush1.msra.mxu0 %v1473
      %1503 = vmatprep.subr.mxu0 0.0
      %1504 = vmatpush1.msra.mxu0 %v1468
      %1505 = vmatprep.subr.mxu0 0.0
      %1506 = vmatpush1.msra.mxu0 %v1467
      %1507 = vmatprep.subr.mxu0 0.0
      %1508 = vmatpush2.msra.mxu0 0.0
      %1509 = vmatprep.subr.mxu0 0.0
      %1510 = vmatpush2.msra.mxu0 0.0
      %1511 = vmatprep.subr.mxu0 0.0
      %1512 = vmatpush2.msra.mxu0 0.0
      %1513 = vmatprep.subr.mxu0 0.0
      %1514 = vmatpush2.msra.mxu0 0.0
      %1515 = vmatprep.subr.mxu0 0.0
      %1516 = vmatpush2.msra.mxu0 0.0
      %1517 = vmatprep.subr.mxu0 0.0
      %1518 = vmatpush2.msra.mxu0 0.0
      %1519 = vmatprep.subr.mxu0 0.0
      %1520 = vmatpush2.msra.mxu0 0.0
      %1521 = vmatprep.subr.mxu0 0.0
      %1522 = vmatpush2.msra.mxu0 0.0
      %1523 = vmatprep.subr.mxu0 0.0
      %1524 = vmatpush2.msra.mxu0 0.0
      %1525 = vmatprep.subr.mxu0 0.0
      %1526 = vmatpush2.msra.mxu0 0.0
      %1527 = vmatprep.subr.mxu0 0.0
      %1528 = vmatpush2.msra.mxu0 0.0
      %1529 = vmatprep.subr.mxu0 0.0
      %1530 = vmatpush2.msra.mxu0 0.0
      %1531 = vmatprep.subr.mxu0 0.0
      %1532 = vmatpush2.msra.mxu0 0.0
      %1533 = vmatprep.subr.mxu0 0.0
      %1534 = vmatpush2.msra.mxu0 0.0
      %1535 = vmatprep.subr.mxu0 0.0
      %1536 = vmatpush2.msra.mxu0 0.0
      %1537 = vmatprep.subr.mxu0 0.0
      %1538 = vmatpush2.msra.mxu0 0.0
      %1539 = vmatprep.mubr.f32.mxu0 0.0
      %1540 = vmatmul.mubr.f32.gmra.mxu0 %v1208
      %v1541 = vpop.f32.mrf.mxu0
      %v1542 = vadd.f32 0.0, %v1541
      %v1543 = vpop.f32.mrf.mxu0
      %1544 = vmatprep.mubr.f32.mxu0 0.0
      %1545 = vmatmul.mubr.f32.gmra.mxu0 %v1210
      %v1546 = vpop.f32.mrf.mxu0
      %v1547 = vadd.f32 0.0, %v1546
      %v1548 = vpop.f32.mrf.mxu0
      %1549 = vmatprep.mubr.f32.mxu0 0.0
      %1550 = vmatmul.mubr.f32.gmra.mxu0 %v1212
      %v1551 = vpop.f32.mrf.mxu0
      %v1552 = vadd.f32 0.0, %v1551
      %v1553 = vpop.f32.mrf.mxu0
      %1554 = vmatprep.mubr.f32.mxu0 0.0
      %1555 = vmatmul.mubr.f32.gmra.mxu0 %v1214
      %v1556 = vpop.f32.mrf.mxu0
      %v1557 = vadd.f32 0.0, %v1556
      %v1558 = vpop.f32.mrf.mxu0
      %1559 = vmatprep.mubr.f32.mxu0 0.0
      %1560 = vmatmul.mubr.f32.gmra.mxu0 %v1216
      %v1561 = vpop.f32.mrf.mxu0
      %v1562 = vadd.f32 0.0, %v1561
      %v1563 = vpop.f32.mrf.mxu0
      %1564 = vmatprep.mubr.f32.mxu0 0.0
      %1565 = vmatmul.mubr.f32.gmra.mxu0 %v1218
      %v1566 = vpop.f32.mrf.mxu0
      %v1567 = vadd.f32 0.0, %v1566
      %v1568 = vpop.f32.mrf.mxu0
      %1569 = vmatprep.mubr.f32.mxu0 0.0
      %1570 = vmatmul.mubr.f32.gmra.mxu0 %v1344
      %v1571 = vpop.f32.mrf.mxu0
      %v1572 = vadd.f32 0.0, %v1571
      %v1573 = vpop.f32.mrf.mxu0
      %1574 = vmatprep.mubr.f32.mxu0 0.0
      %1575 = vmatmul.mubr.f32.gmra.mxu0 %v1470
      %v1576 = vpop.f32.mrf.mxu0
      %v1577 = vadd.f32 0.0, %v1576
      %v1578 = vpop.f32.mrf.mxu0
      %1579 = vdwg.mxu0
      %v1580 = vadd.f32 %v1454, %v1542
      %v1581 = vadd.f32 %v1455, %v1547
      %v1582 = vadd.f32 %v1456, %v1552
      %v1583 = vadd.f32 %v1457, %v1557
      %v1584 = vadd.f32 %v1458, %v1562
      %v1585 = vadd.f32 %v1459, %v1567
      %v1586 = vadd.f32 %v1460, %v1572
      %v1587 = vadd.f32 %v1461, %v1577
      %v1589 = vrot.slane %v542, 1
      %v1590 = vrot.slane %v543, 1
      %v1591 = vsel %vm1175, %v1589, %v1590
      %s1592 = scalar_lea.vmem %s3, 384
      %v1593 = vld [vmem:[%s1592] sm:$0xff]
      %v1594 = vld [vmem:[%s1592 + $0x8] sm:$0xff]
      %v1595 = vld [vmem:[%s1592 + $0x10] sm:$0xf]
      %v1596 = vsel %vm553, %v1591, 0
      %v1599 = vsel %vm578, %v1595, 0
      %1601 = vmatprep.subr.mxu0 0.0
      %1602 = vmatpush1.msra.mxu0 0.0
      %1603 = vmatprep.subr.mxu0 0.0
      %1604 = vmatpush1.msra.mxu0 0.0
      %1605 = vmatprep.subr.mxu0 0.0
      %1606 = vmatpush1.msra.mxu0 0.0
      %1607 = vmatprep.subr.mxu0 0.0
      %1608 = vmatpush1.msra.mxu0 0.0
      %1609 = vmatprep.subr.mxu0 0.0
      %1610 = vmatpush1.msra.mxu0 0.0
      %1611 = vmatprep.subr.mxu0 0.0
      %1612 = vmatpush1.msra.mxu0 0.0
      %1613 = vmatprep.subr.mxu0 0.0
      %1614 = vmatpush1.msra.mxu0 0.0
      %1615 = vmatprep.subr.mxu0 0.0
      %1616 = vmatpush1.msra.mxu0 0.0
      %1617 = vmatprep.subr.mxu0 0.0
      %1618 = vmatpush1.msra.mxu0 0.0
      %1619 = vmatprep.subr.mxu0 0.0
      %1620 = vmatpush1.msra.mxu0 0.0
      %1621 = vmatprep.subr.mxu0 0.0
      %1622 = vmatpush1.msra.mxu0 0.0
      %1623 = vmatprep.subr.mxu0 0.0
      %1624 = vmatpush1.msra.mxu0 0.0
      %1625 = vmatprep.subr.mxu0 0.0
      %1626 = vmatpush1.msra.mxu0 0.0
      %1627 = vmatprep.subr.mxu0 0.0
      %1628 = vmatpush1.msra.mxu0 %v1599
      %1629 = vmatprep.subr.mxu0 0.0
      %1630 = vmatpush1.msra.mxu0 %v1594
      %1631 = vmatprep.subr.mxu0 0.0
      %1632 = vmatpush1.msra.mxu0 %v1593
      %1633 = vmatprep.subr.mxu0 0.0
      %1634 = vmatpush2.msra.mxu0 0.0
      %1635 = vmatprep.subr.mxu0 0.0
      %1636 = vmatpush2.msra.mxu0 0.0
      %1637 = vmatprep.subr.mxu0 0.0
      %1638 = vmatpush2.msra.mxu0 0.0
      %1639 = vmatprep.subr.mxu0 0.0
      %1640 = vmatpush2.msra.mxu0 0.0
      %1641 = vmatprep.subr.mxu0 0.0
      %1642 = vmatpush2.msra.mxu0 0.0
      %1643 = vmatprep.subr.mxu0 0.0
      %1644 = vmatpush2.msra.mxu0 0.0
      %1645 = vmatprep.subr.mxu0 0.0
      %1646 = vmatpush2.msra.mxu0 0.0
      %1647 = vmatprep.subr.mxu0 0.0
      %1648 = vmatpush2.msra.mxu0 0.0
      %1649 = vmatprep.subr.mxu0 0.0
      %1650 = vmatpush2.msra.mxu0 0.0
      %1651 = vmatprep.subr.mxu0 0.0
      %1652 = vmatpush2.msra.mxu0 0.0
      %1653 = vmatprep.subr.mxu0 0.0
      %1654 = vmatpush2.msra.mxu0 0.0
      %1655 = vmatprep.subr.mxu0 0.0
      %1656 = vmatpush2.msra.mxu0 0.0
      %1657 = vmatprep.subr.mxu0 0.0
      %1658 = vmatpush2.msra.mxu0 0.0
      %1659 = vmatprep.subr.mxu0 0.0
      %1660 = vmatpush2.msra.mxu0 0.0
      %1661 = vmatprep.subr.mxu0 0.0
      %1662 = vmatpush2.msra.mxu0 0.0
      %1663 = vmatprep.subr.mxu0 0.0
      %1664 = vmatpush2.msra.mxu0 0.0
      %1665 = vmatprep.mubr.f32.mxu0 0.0
      %1666 = vmatmul.mubr.f32.gmra.mxu0 %v1210
      %v1667 = vpop.f32.mrf.mxu0
      %v1668 = vadd.f32 0.0, %v1667
      %v1669 = vpop.f32.mrf.mxu0
      %1670 = vmatprep.mubr.f32.mxu0 0.0
      %1671 = vmatmul.mubr.f32.gmra.mxu0 %v1212
      %v1672 = vpop.f32.mrf.mxu0
      %v1673 = vadd.f32 0.0, %v1672
      %v1674 = vpop.f32.mrf.mxu0
      %1675 = vmatprep.mubr.f32.mxu0 0.0
      %1676 = vmatmul.mubr.f32.gmra.mxu0 %v1214
      %v1677 = vpop.f32.mrf.mxu0
      %v1678 = vadd.f32 0.0, %v1677
      %v1679 = vpop.f32.mrf.mxu0
      %1680 = vmatprep.mubr.f32.mxu0 0.0
      %1681 = vmatmul.mubr.f32.gmra.mxu0 %v1216
      %v1682 = vpop.f32.mrf.mxu0
      %v1683 = vadd.f32 0.0, %v1682
      %v1684 = vpop.f32.mrf.mxu0
      %1685 = vmatprep.mubr.f32.mxu0 0.0
      %1686 = vmatmul.mubr.f32.gmra.mxu0 %v1218
      %v1687 = vpop.f32.mrf.mxu0
      %v1688 = vadd.f32 0.0, %v1687
      %v1689 = vpop.f32.mrf.mxu0
      %1690 = vmatprep.mubr.f32.mxu0 0.0
      %1691 = vmatmul.mubr.f32.gmra.mxu0 %v1344
      %v1692 = vpop.f32.mrf.mxu0
      %v1693 = vadd.f32 0.0, %v1692
      %v1694 = vpop.f32.mrf.mxu0
      %1695 = vmatprep.mubr.f32.mxu0 0.0
      %1696 = vmatmul.mubr.f32.gmra.mxu0 %v1470
      %v1697 = vpop.f32.mrf.mxu0
      %v1698 = vadd.f32 0.0, %v1697
      %v1699 = vpop.f32.mrf.mxu0
      %1700 = vmatprep.mubr.f32.mxu0 0.0
      %1701 = vmatmul.mubr.f32.gmra.mxu0 %v1596
      %v1702 = vpop.f32.mrf.mxu0
      %v1703 = vadd.f32 0.0, %v1702
      %v1704 = vpop.f32.mrf.mxu0
      %1705 = vdwg.mxu0
      %v1706 = vadd.f32 %v1580, %v1668
      %v1707 = vadd.f32 %v1581, %v1673
      %v1708 = vadd.f32 %v1582, %v1678
      %v1709 = vadd.f32 %v1583, %v1683
      %v1710 = vadd.f32 %v1584, %v1688
      %v1711 = vadd.f32 %v1585, %v1693
      %v1712 = vadd.f32 %v1586, %v1698
      %v1713 = vadd.f32 %v1587, %v1703
      %v1715 = vrot.slane %v544, 1
      %v1716 = vrot.slane %v545, 1
      %v1717 = vsel %vm1175, %v1715, %v1716
      %s1718 = scalar_lea.vmem %s3, 504
      %v1719 = vld [vmem:[%s1718] sm:$0xff]
      %v1720 = vld [vmem:[%s1718 + $0x8] sm:$0xff]
      %v1721 = vld [vmem:[%s1718 + $0x10] sm:$0xf]
      %v1722 = vsel %vm553, %v1717, 0
      %v1725 = vsel %vm578, %v1721, 0
      %1727 = vmatprep.subr.mxu0 0.0
      %1728 = vmatpush1.msra.mxu0 0.0
      %1729 = vmatprep.subr.mxu0 0.0
      %1730 = vmatpush1.msra.mxu0 0.0
      %1731 = vmatprep.subr.mxu0 0.0
      %1732 = vmatpush1.msra.mxu0 0.0
      %1733 = vmatprep.subr.mxu0 0.0
      %1734 = vmatpush1.msra.mxu0 0.0
      %1735 = vmatprep.subr.mxu0 0.0
      %1736 = vmatpush1.msra.mxu0 0.0
      %1737 = vmatprep.subr.mxu0 0.0
      %1738 = vmatpush1.msra.mxu0 0.0
      %1739 = vmatprep.subr.mxu0 0.0
      %1740 = vmatpush1.msra.mxu0 0.0
      %1741 = vmatprep.subr.mxu0 0.0
      %1742 = vmatpush1.msra.mxu0 0.0
      %1743 = vmatprep.subr.mxu0 0.0
      %1744 = vmatpush1.msra.mxu0 0.0
      %1745 = vmatprep.subr.mxu0 0.0
      %1746 = vmatpush1.msra.mxu0 0.0
      %1747 = vmatprep.subr.mxu0 0.0
      %1748 = vmatpush1.msra.mxu0 0.0
      %1749 = vmatprep.subr.mxu0 0.0
      %1750 = vmatpush1.msra.mxu0 0.0
      %1751 = vmatprep.subr.mxu0 0.0
      %1752 = vmatpush1.msra.mxu0 0.0
      %1753 = vmatprep.subr.mxu0 0.0
      %1754 = vmatpush1.msra.mxu0 %v1725
      %1755 = vmatprep.subr.mxu0 0.0
      %1756 = vmatpush1.msra.mxu0 %v1720
      %1757 = vmatprep.subr.mxu0 0.0
      %1758 = vmatpush1.msra.mxu0 %v1719
      %1759 = vmatprep.subr.mxu0 0.0
      %1760 = vmatpush2.msra.mxu0 0.0
      %1761 = vmatprep.subr.mxu0 0.0
      %1762 = vmatpush2.msra.mxu0 0.0
      %1763 = vmatprep.subr.mxu0 0.0
      %1764 = vmatpush2.msra.mxu0 0.0
      %1765 = vmatprep.subr.mxu0 0.0
      %1766 = vmatpush2.msra.mxu0 0.0
      %1767 = vmatprep.subr.mxu0 0.0
      %1768 = vmatpush2.msra.mxu0 0.0
      %1769 = vmatprep.subr.mxu0 0.0
      %1770 = vmatpush2.msra.mxu0 0.0
      %1771 = vmatprep.subr.mxu0 0.0
      %1772 = vmatpush2.msra.mxu0 0.0
      %1773 = vmatprep.subr.mxu0 0.0
      %1774 = vmatpush2.msra.mxu0 0.0
      %1775 = vmatprep.subr.mxu0 0.0
      %1776 = vmatpush2.msra.mxu0 0.0
      %1777 = vmatprep.subr.mxu0 0.0
      %1778 = vmatpush2.msra.mxu0 0.0
      %1779 = vmatprep.subr.mxu0 0.0
      %1780 = vmatpush2.msra.mxu0 0.0
      %1781 = vmatprep.subr.mxu0 0.0
      %1782 = vmatpush2.msra.mxu0 0.0
      %1783 = vmatprep.subr.mxu0 0.0
      %1784 = vmatpush2.msra.mxu0 0.0
      %1785 = vmatprep.subr.mxu0 0.0
      %1786 = vmatpush2.msra.mxu0 0.0
      %1787 = vmatprep.subr.mxu0 0.0
      %1788 = vmatpush2.msra.mxu0 0.0
      %1789 = vmatprep.subr.mxu0 0.0
      %1790 = vmatpush2.msra.mxu0 0.0
      %1791 = vmatprep.mubr.f32.mxu0 0.0
      %1792 = vmatmul.mubr.f32.gmra.mxu0 %v1212
      %v1793 = vpop.f32.mrf.mxu0
      %v1794 = vadd.f32 0.0, %v1793
      %v1795 = vpop.f32.mrf.mxu0
      %1796 = vmatprep.mubr.f32.mxu0 0.0
      %1797 = vmatmul.mubr.f32.gmra.mxu0 %v1214
      %v1798 = vpop.f32.mrf.mxu0
      %v1799 = vadd.f32 0.0, %v1798
      %v1800 = vpop.f32.mrf.mxu0
      %1801 = vmatprep.mubr.f32.mxu0 0.0
      %1802 = vmatmul.mubr.f32.gmra.mxu0 %v1216
      %v1803 = vpop.f32.mrf.mxu0
      %v1804 = vadd.f32 0.0, %v1803
      %v1805 = vpop.f32.mrf.mxu0
      %1806 = vmatprep.mubr.f32.mxu0 0.0
      %1807 = vmatmul.mubr.f32.gmra.mxu0 %v1218
      %v1808 = vpop.f32.mrf.mxu0
      %v1809 = vadd.f32 0.0, %v1808
      %v1810 = vpop.f32.mrf.mxu0
      %1811 = vmatprep.mubr.f32.mxu0 0.0
      %1812 = vmatmul.mubr.f32.gmra.mxu0 %v1344
      %v1813 = vpop.f32.mrf.mxu0
      %v1814 = vadd.f32 0.0, %v1813
      %v1815 = vpop.f32.mrf.mxu0
      %1816 = vmatprep.mubr.f32.mxu0 0.0
      %1817 = vmatmul.mubr.f32.gmra.mxu0 %v1470
      %v1818 = vpop.f32.mrf.mxu0
      %v1819 = vadd.f32 0.0, %v1818
      %v1820 = vpop.f32.mrf.mxu0
      %1821 = vmatprep.mubr.f32.mxu0 0.0
      %1822 = vmatmul.mubr.f32.gmra.mxu0 %v1596
      %v1823 = vpop.f32.mrf.mxu0
      %v1824 = vadd.f32 0.0, %v1823
      %v1825 = vpop.f32.mrf.mxu0
      %1826 = vmatprep.mubr.f32.mxu0 0.0
      %1827 = vmatmul.mubr.f32.gmra.mxu0 %v1722
      %v1828 = vpop.f32.mrf.mxu0
      %v1829 = vadd.f32 0.0, %v1828
      %v1830 = vpop.f32.mrf.mxu0
      %1831 = vdwg.mxu0
      %v1832 = vadd.f32 %v1706, %v1794
      %v1833 = vadd.f32 %v1707, %v1799
      %v1834 = vadd.f32 %v1708, %v1804
      %v1835 = vadd.f32 %v1709, %v1809
      %v1836 = vadd.f32 %v1710, %v1814
      %v1837 = vadd.f32 %v1711, %v1819
      %v1838 = vadd.f32 %v1712, %v1824
      %v1839 = vadd.f32 %v1713, %v1829
      %vm1840 = vcmask 1045504
      %v1841 = vrot.slane %v522, 2
      %v1842 = vrot.slane %v523, 2
      %v1843 = vsel %vm1840, %v1841, %v1842
      %v1844 = vrot.slane %v524, 2
      %v1845 = vrot.slane %v525, 2
      %v1846 = vsel %vm1840, %v1844, %v1845
      %v1847 = vrot.slane %v526, 2
      %v1848 = vrot.slane %v527, 2
      %v1849 = vsel %vm1840, %v1847, %v1848
      %v1850 = vrot.slane %v528, 2
      %v1851 = vrot.slane %v529, 2
      %v1852 = vsel %vm1840, %v1850, %v1851
      %v1853 = vrot.slane %v530, 2
      %v1854 = vrot.slane %v531, 2
      %v1855 = vsel %vm1840, %v1853, %v1854
      %v1856 = vrot.slane %v532, 2
      %v1857 = vrot.slane %v533, 2
      %v1858 = vsel %vm1840, %v1856, %v1857
      %v1859 = vrot.slane %v534, 2
      %v1860 = vrot.slane %v535, 2
      %v1861 = vsel %vm1840, %v1859, %v1860
      %v1862 = vrot.slane %v536, 2
      %v1863 = vrot.slane %v537, 2
      %v1864 = vsel %vm1840, %v1862, %v1863
      %s1865 = scalar_lea.vmem %s3, 48
      %v1866 = vld [vmem:[%s1865] sm:$0xff]
      %v1867 = vld [vmem:[%s1865 + $0x8] sm:$0xff]
      %v1868 = vld [vmem:[%s1865 + $0x10] sm:$0xf]
      %v1869 = vsel %vm553, %v1843, 0
      %v1871 = vsel %vm553, %v1846, 0
      %v1873 = vsel %vm553, %v1849, 0
      %v1875 = vsel %vm553, %v1852, 0
      %v1877 = vsel %vm553, %v1855, 0
      %v1879 = vsel %vm553, %v1858, 0
      %v1881 = vsel %vm553, %v1861, 0
      %v1883 = vsel %vm553, %v1864, 0
      %v1886 = vsel %vm578, %v1868, 0
      %1888 = vmatprep.subr.mxu0 0.0
      %1889 = vmatpush1.msra.mxu0 0.0
      %1890 = vmatprep.subr.mxu0 0.0
      %1891 = vmatpush1.msra.mxu0 0.0
      %1892 = vmatprep.subr.mxu0 0.0
      %1893 = vmatpush1.msra.mxu0 0.0
      %1894 = vmatprep.subr.mxu0 0.0
      %1895 = vmatpush1.msra.mxu0 0.0
      %1896 = vmatprep.subr.mxu0 0.0
      %1897 = vmatpush1.msra.mxu0 0.0
      %1898 = vmatprep.subr.mxu0 0.0
      %1899 = vmatpush1.msra.mxu0 0.0
      %1900 = vmatprep.subr.mxu0 0.0
      %1901 = vmatpush1.msra.mxu0 0.0
      %1902 = vmatprep.subr.mxu0 0.0
      %1903 = vmatpush1.msra.mxu0 0.0
      %1904 = vmatprep.subr.mxu0 0.0
      %1905 = vmatpush1.msra.mxu0 0.0
      %1906 = vmatprep.subr.mxu0 0.0
      %1907 = vmatpush1.msra.mxu0 0.0
      %1908 = vmatprep.subr.mxu0 0.0
      %1909 = vmatpush1.msra.mxu0 0.0
      %1910 = vmatprep.subr.mxu0 0.0
      %1911 = vmatpush1.msra.mxu0 0.0
      %1912 = vmatprep.subr.mxu0 0.0
      %1913 = vmatpush1.msra.mxu0 0.0
      %1914 = vmatprep.subr.mxu0 0.0
      %1915 = vmatpush1.msra.mxu0 %v1886
      %1916 = vmatprep.subr.mxu0 0.0
      %1917 = vmatpush1.msra.mxu0 %v1867
      %1918 = vmatprep.subr.mxu0 0.0
      %1919 = vmatpush1.msra.mxu0 %v1866
      %1920 = vmatprep.subr.mxu0 0.0
      %1921 = vmatpush2.msra.mxu0 0.0
      %1922 = vmatprep.subr.mxu0 0.0
      %1923 = vmatpush2.msra.mxu0 0.0
      %1924 = vmatprep.subr.mxu0 0.0
      %1925 = vmatpush2.msra.mxu0 0.0
      %1926 = vmatprep.subr.mxu0 0.0
      %1927 = vmatpush2.msra.mxu0 0.0
      %1928 = vmatprep.subr.mxu0 0.0
      %1929 = vmatpush2.msra.mxu0 0.0
      %1930 = vmatprep.subr.mxu0 0.0
      %1931 = vmatpush2.msra.mxu0 0.0
      %1932 = vmatprep.subr.mxu0 0.0
      %1933 = vmatpush2.msra.mxu0 0.0
      %1934 = vmatprep.subr.mxu0 0.0
      %1935 = vmatpush2.msra.mxu0 0.0
      %1936 = vmatprep.subr.mxu0 0.0
      %1937 = vmatpush2.msra.mxu0 0.0
      %1938 = vmatprep.subr.mxu0 0.0
      %1939 = vmatpush2.msra.mxu0 0.0
      %1940 = vmatprep.subr.mxu0 0.0
      %1941 = vmatpush2.msra.mxu0 0.0
      %1942 = vmatprep.subr.mxu0 0.0
      %1943 = vmatpush2.msra.mxu0 0.0
      %1944 = vmatprep.subr.mxu0 0.0
      %1945 = vmatpush2.msra.mxu0 0.0
      %1946 = vmatprep.subr.mxu0 0.0
      %1947 = vmatpush2.msra.mxu0 0.0
      %1948 = vmatprep.subr.mxu0 0.0
      %1949 = vmatpush2.msra.mxu0 0.0
      %1950 = vmatprep.subr.mxu0 0.0
      %1951 = vmatpush2.msra.mxu0 0.0
      %1952 = vmatprep.mubr.f32.mxu0 0.0
      %1953 = vmatmul.mubr.f32.gmra.mxu0 %v1869
      %v1954 = vpop.f32.mrf.mxu0
      %v1955 = vadd.f32 0.0, %v1954
      %v1956 = vpop.f32.mrf.mxu0
      %1957 = vmatprep.mubr.f32.mxu0 0.0
      %1958 = vmatmul.mubr.f32.gmra.mxu0 %v1871
      %v1959 = vpop.f32.mrf.mxu0
      %v1960 = vadd.f32 0.0, %v1959
      %v1961 = vpop.f32.mrf.mxu0
      %1962 = vmatprep.mubr.f32.mxu0 0.0
      %1963 = vmatmul.mubr.f32.gmra.mxu0 %v1873
      %v1964 = vpop.f32.mrf.mxu0
      %v1965 = vadd.f32 0.0, %v1964
      %v1966 = vpop.f32.mrf.mxu0
      %1967 = vmatprep.mubr.f32.mxu0 0.0
      %1968 = vmatmul.mubr.f32.gmra.mxu0 %v1875
      %v1969 = vpop.f32.mrf.mxu0
      %v1970 = vadd.f32 0.0, %v1969
      %v1971 = vpop.f32.mrf.mxu0
      %1972 = vmatprep.mubr.f32.mxu0 0.0
      %1973 = vmatmul.mubr.f32.gmra.mxu0 %v1877
      %v1974 = vpop.f32.mrf.mxu0
      %v1975 = vadd.f32 0.0, %v1974
      %v1976 = vpop.f32.mrf.mxu0
      %1977 = vmatprep.mubr.f32.mxu0 0.0
      %1978 = vmatmul.mubr.f32.gmra.mxu0 %v1879
      %v1979 = vpop.f32.mrf.mxu0
      %v1980 = vadd.f32 0.0, %v1979
      %v1981 = vpop.f32.mrf.mxu0
      %1982 = vmatprep.mubr.f32.mxu0 0.0
      %1983 = vmatmul.mubr.f32.gmra.mxu0 %v1881
      %v1984 = vpop.f32.mrf.mxu0
      %v1985 = vadd.f32 0.0, %v1984
      %v1986 = vpop.f32.mrf.mxu0
      %1987 = vmatprep.mubr.f32.mxu0 0.0
      %1988 = vmatmul.mubr.f32.gmra.mxu0 %v1883
      %v1989 = vpop.f32.mrf.mxu0
      %v1990 = vadd.f32 0.0, %v1989
      %v1991 = vpop.f32.mrf.mxu0
      %1992 = vdwg.mxu0
      %v1993 = vadd.f32 %v1832, %v1955
      %v1994 = vadd.f32 %v1833, %v1960
      %v1995 = vadd.f32 %v1834, %v1965
      %v1996 = vadd.f32 %v1835, %v1970
      %v1997 = vadd.f32 %v1836, %v1975
      %v1998 = vadd.f32 %v1837, %v1980
      %v1999 = vadd.f32 %v1838, %v1985
      %v2000 = vadd.f32 %v1839, %v1990
      %v2001 = vrot.slane %v538, 2
      %v2002 = vrot.slane %v539, 2
      %v2003 = vsel %vm1840, %v2001, %v2002
      %s2004 = scalar_lea.vmem %s3, 168
      %v2005 = vld [vmem:[%s2004] sm:$0xff]
      %v2006 = vld [vmem:[%s2004 + $0x8] sm:$0xff]
      %v2007 = vld [vmem:[%s2004 + $0x10] sm:$0xf]
      %v2008 = vsel %vm553, %v2003, 0
      %v2011 = vsel %vm578, %v2007, 0
      %2013 = vmatprep.subr.mxu0 0.0
      %2014 = vmatpush1.msra.mxu0 0.0
      %2015 = vmatprep.subr.mxu0 0.0
      %2016 = vmatpush1.msra.mxu0 0.0
      %2017 = vmatprep.subr.mxu0 0.0
      %2018 = vmatpush1.msra.mxu0 0.0
      %2019 = vmatprep.subr.mxu0 0.0
      %2020 = vmatpush1.msra.mxu0 0.0
      %2021 = vmatprep.subr.mxu0 0.0
      %2022 = vmatpush1.msra.mxu0 0.0
      %2023 = vmatprep.subr.mxu0 0.0
      %2024 = vmatpush1.msra.mxu0 0.0
      %2025 = vmatprep.subr.mxu0 0.0
      %2026 = vmatpush1.msra.mxu0 0.0
      %2027 = vmatprep.subr.mxu0 0.0
      %2028 = vmatpush1.msra.mxu0 0.0
      %2029 = vmatprep.subr.mxu0 0.0
      %2030 = vmatpush1.msra.mxu0 0.0
      %2031 = vmatprep.subr.mxu0 0.0
      %2032 = vmatpush1.msra.mxu0 0.0
      %2033 = vmatprep.subr.mxu0 0.0
      %2034 = vmatpush1.msra.mxu0 0.0
      %2035 = vmatprep.subr.mxu0 0.0
      %2036 = vmatpush1.msra.mxu0 0.0
      %2037 = vmatprep.subr.mxu0 0.0
      %2038 = vmatpush1.msra.mxu0 0.0
      %2039 = vmatprep.subr.mxu0 0.0
      %2040 = vmatpush1.msra.mxu0 %v2011
      %2041 = vmatprep.subr.mxu0 0.0
      %2042 = vmatpush1.msra.mxu0 %v2006
      %2043 = vmatprep.subr.mxu0 0.0
      %2044 = vmatpush1.msra.mxu0 %v2005
      %2045 = vmatprep.subr.mxu0 0.0
      %2046 = vmatpush2.msra.mxu0 0.0
      %2047 = vmatprep.subr.mxu0 0.0
      %2048 = vmatpush2.msra.mxu0 0.0
      %2049 = vmatprep.subr.mxu0 0.0
      %2050 = vmatpush2.msra.mxu0 0.0
      %2051 = vmatprep.subr.mxu0 0.0
      %2052 = vmatpush2.msra.mxu0 0.0
      %2053 = vmatprep.subr.mxu0 0.0
      %2054 = vmatpush2.msra.mxu0 0.0
      %2055 = vmatprep.subr.mxu0 0.0
      %2056 = vmatpush2.msra.mxu0 0.0
      %2057 = vmatprep.subr.mxu0 0.0
      %2058 = vmatpush2.msra.mxu0 0.0
      %2059 = vmatprep.subr.mxu0 0.0
      %2060 = vmatpush2.msra.mxu0 0.0
      %2061 = vmatprep.subr.mxu0 0.0
      %2062 = vmatpush2.msra.mxu0 0.0
      %2063 = vmatprep.subr.mxu0 0.0
      %2064 = vmatpush2.msra.mxu0 0.0
      %2065 = vmatprep.subr.mxu0 0.0
      %2066 = vmatpush2.msra.mxu0 0.0
      %2067 = vmatprep.subr.mxu0 0.0
      %2068 = vmatpush2.msra.mxu0 0.0
      %2069 = vmatprep.subr.mxu0 0.0
      %2070 = vmatpush2.msra.mxu0 0.0
      %2071 = vmatprep.subr.mxu0 0.0
      %2072 = vmatpush2.msra.mxu0 0.0
      %2073 = vmatprep.subr.mxu0 0.0
      %2074 = vmatpush2.msra.mxu0 0.0
      %2075 = vmatprep.subr.mxu0 0.0
      %2076 = vmatpush2.msra.mxu0 0.0
      %2077 = vmatprep.mubr.f32.mxu0 0.0
      %2078 = vmatmul.mubr.f32.gmra.mxu0 %v1871
      %v2079 = vpop.f32.mrf.mxu0
      %v2080 = vadd.f32 0.0, %v2079
      %v2081 = vpop.f32.mrf.mxu0
      %2082 = vmatprep.mubr.f32.mxu0 0.0
      %2083 = vmatmul.mubr.f32.gmra.mxu0 %v1873
      %v2084 = vpop.f32.mrf.mxu0
      %v2085 = vadd.f32 0.0, %v2084
      %v2086 = vpop.f32.mrf.mxu0
      %2087 = vmatprep.mubr.f32.mxu0 0.0
      %2088 = vmatmul.mubr.f32.gmra.mxu0 %v1875
      %v2089 = vpop.f32.mrf.mxu0
      %v2090 = vadd.f32 0.0, %v2089
      %v2091 = vpop.f32.mrf.mxu0
      %2092 = vmatprep.mubr.f32.mxu0 0.0
      %2093 = vmatmul.mubr.f32.gmra.mxu0 %v1877
      %v2094 = vpop.f32.mrf.mxu0
      %v2095 = vadd.f32 0.0, %v2094
      %v2096 = vpop.f32.mrf.mxu0
      %2097 = vmatprep.mubr.f32.mxu0 0.0
      %2098 = vmatmul.mubr.f32.gmra.mxu0 %v1879
      %v2099 = vpop.f32.mrf.mxu0
      %v2100 = vadd.f32 0.0, %v2099
      %v2101 = vpop.f32.mrf.mxu0
      %2102 = vmatprep.mubr.f32.mxu0 0.0
      %2103 = vmatmul.mubr.f32.gmra.mxu0 %v1881
      %v2104 = vpop.f32.mrf.mxu0
      %v2105 = vadd.f32 0.0, %v2104
      %v2106 = vpop.f32.mrf.mxu0
      %2107 = vmatprep.mubr.f32.mxu0 0.0
      %2108 = vmatmul.mubr.f32.gmra.mxu0 %v1883
      %v2109 = vpop.f32.mrf.mxu0
      %v2110 = vadd.f32 0.0, %v2109
      %v2111 = vpop.f32.mrf.mxu0
      %2112 = vmatprep.mubr.f32.mxu0 0.0
      %2113 = vmatmul.mubr.f32.gmra.mxu0 %v2008
      %v2114 = vpop.f32.mrf.mxu0
      %v2115 = vadd.f32 0.0, %v2114
      %v2116 = vpop.f32.mrf.mxu0
      %2117 = vdwg.mxu0
      %v2118 = vadd.f32 %v1993, %v2080
      %v2119 = vadd.f32 %v1994, %v2085
      %v2120 = vadd.f32 %v1995, %v2090
      %v2121 = vadd.f32 %v1996, %v2095
      %v2122 = vadd.f32 %v1997, %v2100
      %v2123 = vadd.f32 %v1998, %v2105
      %v2124 = vadd.f32 %v1999, %v2110
      %v2125 = vadd.f32 %v2000, %v2115
      %v2126 = vrot.slane %v540, 2
      %v2127 = vrot.slane %v541, 2
      %v2128 = vsel %vm1840, %v2126, %v2127
      %s2129 = scalar_lea.vmem %s3, 288
      %v2130 = vld [vmem:[%s2129] sm:$0xff]
      %v2131 = vld [vmem:[%s2129 + $0x8] sm:$0xff]
      %v2132 = vld [vmem:[%s2129 + $0x10] sm:$0xf]
      %v2133 = vsel %vm553, %v2128, 0
      %v2136 = vsel %vm578, %v2132, 0
      %2138 = vmatprep.subr.mxu0 0.0
      %2139 = vmatpush1.msra.mxu0 0.0
      %2140 = vmatprep.subr.mxu0 0.0
      %2141 = vmatpush1.msra.mxu0 0.0
      %2142 = vmatprep.subr.mxu0 0.0
      %2143 = vmatpush1.msra.mxu0 0.0
      %2144 = vmatprep.subr.mxu0 0.0
      %2145 = vmatpush1.msra.mxu0 0.0
      %2146 = vmatprep.subr.mxu0 0.0
      %2147 = vmatpush1.msra.mxu0 0.0
      %2148 = vmatprep.subr.mxu0 0.0
      %2149 = vmatpush1.msra.mxu0 0.0
      %2150 = vmatprep.subr.mxu0 0.0
      %2151 = vmatpush1.msra.mxu0 0.0
      %2152 = vmatprep.subr.mxu0 0.0
      %2153 = vmatpush1.msra.mxu0 0.0
      %2154 = vmatprep.subr.mxu0 0.0
      %2155 = vmatpush1.msra.mxu0 0.0
      %2156 = vmatprep.subr.mxu0 0.0
      %2157 = vmatpush1.msra.mxu0 0.0
      %2158 = vmatprep.subr.mxu0 0.0
      %2159 = vmatpush1.msra.mxu0 0.0
      %2160 = vmatprep.subr.mxu0 0.0
      %2161 = vmatpush1.msra.mxu0 0.0
      %2162 = vmatprep.subr.mxu0 0.0
      %2163 = vmatpush1.msra.mxu0 0.0
      %2164 = vmatprep.subr.mxu0 0.0
      %2165 = vmatpush1.msra.mxu0 %v2136
      %2166 = vmatprep.subr.mxu0 0.0
      %2167 = vmatpush1.msra.mxu0 %v2131
      %2168 = vmatprep.subr.mxu0 0.0
      %2169 = vmatpush1.msra.mxu0 %v2130
      %2170 = vmatprep.subr.mxu0 0.0
      %2171 = vmatpush2.msra.mxu0 0.0
      %2172 = vmatprep.subr.mxu0 0.0
      %2173 = vmatpush2.msra.mxu0 0.0
      %2174 = vmatprep.subr.mxu0 0.0
      %2175 = vmatpush2.msra.mxu0 0.0
      %2176 = vmatprep.subr.mxu0 0.0
      %2177 = vmatpush2.msra.mxu0 0.0
      %2178 = vmatprep.subr.mxu0 0.0
      %2179 = vmatpush2.msra.mxu0 0.0
      %2180 = vmatprep.subr.mxu0 0.0
      %2181 = vmatpush2.msra.mxu0 0.0
      %2182 = vmatprep.subr.mxu0 0.0
      %2183 = vmatpush2.msra.mxu0 0.0
      %2184 = vmatprep.subr.mxu0 0.0
      %2185 = vmatpush2.msra.mxu0 0.0
      %2186 = vmatprep.subr.mxu0 0.0
      %2187 = vmatpush2.msra.mxu0 0.0
      %2188 = vmatprep.subr.mxu0 0.0
      %2189 = vmatpush2.msra.mxu0 0.0
      %2190 = vmatprep.subr.mxu0 0.0
      %2191 = vmatpush2.msra.mxu0 0.0
      %2192 = vmatprep.subr.mxu0 0.0
      %2193 = vmatpush2.msra.mxu0 0.0
      %2194 = vmatprep.subr.mxu0 0.0
      %2195 = vmatpush2.msra.mxu0 0.0
      %2196 = vmatprep.subr.mxu0 0.0
      %2197 = vmatpush2.msra.mxu0 0.0
      %2198 = vmatprep.subr.mxu0 0.0
      %2199 = vmatpush2.msra.mxu0 0.0
      %2200 = vmatprep.subr.mxu0 0.0
      %2201 = vmatpush2.msra.mxu0 0.0
      %2202 = vmatprep.mubr.f32.mxu0 0.0
      %2203 = vmatmul.mubr.f32.gmra.mxu0 %v1873
      %v2204 = vpop.f32.mrf.mxu0
      %v2205 = vadd.f32 0.0, %v2204
      %v2206 = vpop.f32.mrf.mxu0
      %2207 = vmatprep.mubr.f32.mxu0 0.0
      %2208 = vmatmul.mubr.f32.gmra.mxu0 %v1875
      %v2209 = vpop.f32.mrf.mxu0
      %v2210 = vadd.f32 0.0, %v2209
      %v2211 = vpop.f32.mrf.mxu0
      %2212 = vmatprep.mubr.f32.mxu0 0.0
      %2213 = vmatmul.mubr.f32.gmra.mxu0 %v1877
      %v2214 = vpop.f32.mrf.mxu0
      %v2215 = vadd.f32 0.0, %v2214
      %v2216 = vpop.f32.mrf.mxu0
      %2217 = vmatprep.mubr.f32.mxu0 0.0
      %2218 = vmatmul.mubr.f32.gmra.mxu0 %v1879
      %v2219 = vpop.f32.mrf.mxu0
      %v2220 = vadd.f32 0.0, %v2219
      %v2221 = vpop.f32.mrf.mxu0
      %2222 = vmatprep.mubr.f32.mxu0 0.0
      %2223 = vmatmul.mubr.f32.gmra.mxu0 %v1881
      %v2224 = vpop.f32.mrf.mxu0
      %v2225 = vadd.f32 0.0, %v2224
      %v2226 = vpop.f32.mrf.mxu0
      %2227 = vmatprep.mubr.f32.mxu0 0.0
      %2228 = vmatmul.mubr.f32.gmra.mxu0 %v1883
      %v2229 = vpop.f32.mrf.mxu0
      %v2230 = vadd.f32 0.0, %v2229
      %v2231 = vpop.f32.mrf.mxu0
      %2232 = vmatprep.mubr.f32.mxu0 0.0
      %2233 = vmatmul.mubr.f32.gmra.mxu0 %v2008
      %v2234 = vpop.f32.mrf.mxu0
      %v2235 = vadd.f32 0.0, %v2234
      %v2236 = vpop.f32.mrf.mxu0
      %2237 = vmatprep.mubr.f32.mxu0 0.0
      %2238 = vmatmul.mubr.f32.gmra.mxu0 %v2133
      %v2239 = vpop.f32.mrf.mxu0
      %v2240 = vadd.f32 0.0, %v2239
      %v2241 = vpop.f32.mrf.mxu0
      %2242 = vdwg.mxu0
      %v2243 = vadd.f32 %v2118, %v2205
      %v2244 = vadd.f32 %v2119, %v2210
      %v2245 = vadd.f32 %v2120, %v2215
      %v2246 = vadd.f32 %v2121, %v2220
      %v2247 = vadd.f32 %v2122, %v2225
      %v2248 = vadd.f32 %v2123, %v2230
      %v2249 = vadd.f32 %v2124, %v2235
      %v2250 = vadd.f32 %v2125, %v2240
      %v2251 = vrot.slane %v542, 2
      %v2252 = vrot.slane %v543, 2
      %v2253 = vsel %vm1840, %v2251, %v2252
      %s2254 = scalar_lea.vmem %s3, 408
      %v2255 = vld [vmem:[%s2254] sm:$0xff]
      %v2256 = vld [vmem:[%s2254 + $0x8] sm:$0xff]
      %v2257 = vld [vmem:[%s2254 + $0x10] sm:$0xf]
      %v2258 = vsel %vm553, %v2253, 0
      %v2261 = vsel %vm578, %v2257, 0
      %2263 = vmatprep.subr.mxu0 0.0
      %2264 = vmatpush1.msra.mxu0 0.0
      %2265 = vmatprep.subr.mxu0 0.0
      %2266 = vmatpush1.msra.mxu0 0.0
      %2267 = vmatprep.subr.mxu0 0.0
      %2268 = vmatpush1.msra.mxu0 0.0
      %2269 = vmatprep.subr.mxu0 0.0
      %2270 = vmatpush1.msra.mxu0 0.0
      %2271 = vmatprep.subr.mxu0 0.0
      %2272 = vmatpush1.msra.mxu0 0.0
      %2273 = vmatprep.subr.mxu0 0.0
      %2274 = vmatpush1.msra.mxu0 0.0
      %2275 = vmatprep.subr.mxu0 0.0
      %2276 = vmatpush1.msra.mxu0 0.0
      %2277 = vmatprep.subr.mxu0 0.0
      %2278 = vmatpush1.msra.mxu0 0.0
      %2279 = vmatprep.subr.mxu0 0.0
      %2280 = vmatpush1.msra.mxu0 0.0
      %2281 = vmatprep.subr.mxu0 0.0
      %2282 = vmatpush1.msra.mxu0 0.0
      %2283 = vmatprep.subr.mxu0 0.0
      %2284 = vmatpush1.msra.mxu0 0.0
      %2285 = vmatprep.subr.mxu0 0.0
      %2286 = vmatpush1.msra.mxu0 0.0
      %2287 = vmatprep.subr.mxu0 0.0
      %2288 = vmatpush1.msra.mxu0 0.0
      %2289 = vmatprep.subr.mxu0 0.0
      %2290 = vmatpush1.msra.mxu0 %v2261
      %2291 = vmatprep.subr.mxu0 0.0
      %2292 = vmatpush1.msra.mxu0 %v2256
      %2293 = vmatprep.subr.mxu0 0.0
      %2294 = vmatpush1.msra.mxu0 %v2255
      %2295 = vmatprep.subr.mxu0 0.0
      %2296 = vmatpush2.msra.mxu0 0.0
      %2297 = vmatprep.subr.mxu0 0.0
      %2298 = vmatpush2.msra.mxu0 0.0
      %2299 = vmatprep.subr.mxu0 0.0
      %2300 = vmatpush2.msra.mxu0 0.0
      %2301 = vmatprep.subr.mxu0 0.0
      %2302 = vmatpush2.msra.mxu0 0.0
      %2303 = vmatprep.subr.mxu0 0.0
      %2304 = vmatpush2.msra.mxu0 0.0
      %2305 = vmatprep.subr.mxu0 0.0
      %2306 = vmatpush2.msra.mxu0 0.0
      %2307 = vmatprep.subr.mxu0 0.0
      %2308 = vmatpush2.msra.mxu0 0.0
      %2309 = vmatprep.subr.mxu0 0.0
      %2310 = vmatpush2.msra.mxu0 0.0
      %2311 = vmatprep.subr.mxu0 0.0
      %2312 = vmatpush2.msra.mxu0 0.0
      %2313 = vmatprep.subr.mxu0 0.0
      %2314 = vmatpush2.msra.mxu0 0.0
      %2315 = vmatprep.subr.mxu0 0.0
      %2316 = vmatpush2.msra.mxu0 0.0
      %2317 = vmatprep.subr.mxu0 0.0
      %2318 = vmatpush2.msra.mxu0 0.0
      %2319 = vmatprep.subr.mxu0 0.0
      %2320 = vmatpush2.msra.mxu0 0.0
      %2321 = vmatprep.subr.mxu0 0.0
      %2322 = vmatpush2.msra.mxu0 0.0
      %2323 = vmatprep.subr.mxu0 0.0
      %2324 = vmatpush2.msra.mxu0 0.0
      %2325 = vmatprep.subr.mxu0 0.0
      %2326 = vmatpush2.msra.mxu0 0.0
      %2327 = vmatprep.mubr.f32.mxu0 0.0
      %2328 = vmatmul.mubr.f32.gmra.mxu0 %v1875
      %v2329 = vpop.f32.mrf.mxu0
      %v2330 = vadd.f32 0.0, %v2329
      %v2331 = vpop.f32.mrf.mxu0
      %2332 = vmatprep.mubr.f32.mxu0 0.0
      %2333 = vmatmul.mubr.f32.gmra.mxu0 %v1877
      %v2334 = vpop.f32.mrf.mxu0
      %v2335 = vadd.f32 0.0, %v2334
      %v2336 = vpop.f32.mrf.mxu0
      %2337 = vmatprep.mubr.f32.mxu0 0.0
      %2338 = vmatmul.mubr.f32.gmra.mxu0 %v1879
      %v2339 = vpop.f32.mrf.mxu0
      %v2340 = vadd.f32 0.0, %v2339
      %v2341 = vpop.f32.mrf.mxu0
      %2342 = vmatprep.mubr.f32.mxu0 0.0
      %2343 = vmatmul.mubr.f32.gmra.mxu0 %v1881
      %v2344 = vpop.f32.mrf.mxu0
      %v2345 = vadd.f32 0.0, %v2344
      %v2346 = vpop.f32.mrf.mxu0
      %2347 = vmatprep.mubr.f32.mxu0 0.0
      %2348 = vmatmul.mubr.f32.gmra.mxu0 %v1883
      %v2349 = vpop.f32.mrf.mxu0
      %v2350 = vadd.f32 0.0, %v2349
      %v2351 = vpop.f32.mrf.mxu0
      %2352 = vmatprep.mubr.f32.mxu0 0.0
      %2353 = vmatmul.mubr.f32.gmra.mxu0 %v2008
      %v2354 = vpop.f32.mrf.mxu0
      %v2355 = vadd.f32 0.0, %v2354
      %v2356 = vpop.f32.mrf.mxu0
      %2357 = vmatprep.mubr.f32.mxu0 0.0
      %2358 = vmatmul.mubr.f32.gmra.mxu0 %v2133
      %v2359 = vpop.f32.mrf.mxu0
      %v2360 = vadd.f32 0.0, %v2359
      %v2361 = vpop.f32.mrf.mxu0
      %2362 = vmatprep.mubr.f32.mxu0 0.0
      %2363 = vmatmul.mubr.f32.gmra.mxu0 %v2258
      %v2364 = vpop.f32.mrf.mxu0
      %v2365 = vadd.f32 0.0, %v2364
      %v2366 = vpop.f32.mrf.mxu0
      %2367 = vdwg.mxu0
      %v2368 = vadd.f32 %v2243, %v2330
      %v2369 = vadd.f32 %v2244, %v2335
      %v2370 = vadd.f32 %v2245, %v2340
      %v2371 = vadd.f32 %v2246, %v2345
      %v2372 = vadd.f32 %v2247, %v2350
      %v2373 = vadd.f32 %v2248, %v2355
      %v2374 = vadd.f32 %v2249, %v2360
      %v2375 = vadd.f32 %v2250, %v2365
      %v2376 = vrot.slane %v544, 2
      %v2377 = vrot.slane %v545, 2
      %v2378 = vsel %vm1840, %v2376, %v2377
      %s2379 = scalar_lea.vmem %s3, 528
      %v2380 = vld [vmem:[%s2379] sm:$0xff]
      %v2381 = vld [vmem:[%s2379 + $0x8] sm:$0xff]
      %v2382 = vld [vmem:[%s2379 + $0x10] sm:$0xf]
      %v2383 = vsel %vm553, %v2378, 0
      %v2386 = vsel %vm578, %v2382, 0
      %2388 = vmatprep.subr.mxu0 0.0
      %2389 = vmatpush1.msra.mxu0 0.0
      %2390 = vmatprep.subr.mxu0 0.0
      %2391 = vmatpush1.msra.mxu0 0.0
      %2392 = vmatprep.subr.mxu0 0.0
      %2393 = vmatpush1.msra.mxu0 0.0
      %2394 = vmatprep.subr.mxu0 0.0
      %2395 = vmatpush1.msra.mxu0 0.0
      %2396 = vmatprep.subr.mxu0 0.0
      %2397 = vmatpush1.msra.mxu0 0.0
      %2398 = vmatprep.subr.mxu0 0.0
      %2399 = vmatpush1.msra.mxu0 0.0
      %2400 = vmatprep.subr.mxu0 0.0
      %2401 = vmatpush1.msra.mxu0 0.0
      %2402 = vmatprep.subr.mxu0 0.0
      %2403 = vmatpush1.msra.mxu0 0.0
      %2404 = vmatprep.subr.mxu0 0.0
      %2405 = vmatpush1.msra.mxu0 0.0
      %2406 = vmatprep.subr.mxu0 0.0
      %2407 = vmatpush1.msra.mxu0 0.0
      %2408 = vmatprep.subr.mxu0 0.0
      %2409 = vmatpush1.msra.mxu0 0.0
      %2410 = vmatprep.subr.mxu0 0.0
      %2411 = vmatpush1.msra.mxu0 0.0
      %2412 = vmatprep.subr.mxu0 0.0
      %2413 = vmatpush1.msra.mxu0 0.0
      %2414 = vmatprep.subr.mxu0 0.0
      %2415 = vmatpush1.msra.mxu0 %v2386
      %2416 = vmatprep.subr.mxu0 0.0
      %2417 = vmatpush1.msra.mxu0 %v2381
      %2418 = vmatprep.subr.mxu0 0.0
      %2419 = vmatpush1.msra.mxu0 %v2380
      %2420 = vmatprep.subr.mxu0 0.0
      %2421 = vmatpush2.msra.mxu0 0.0
      %2422 = vmatprep.subr.mxu0 0.0
      %2423 = vmatpush2.msra.mxu0 0.0
      %2424 = vmatprep.subr.mxu0 0.0
      %2425 = vmatpush2.msra.mxu0 0.0
      %2426 = vmatprep.subr.mxu0 0.0
      %2427 = vmatpush2.msra.mxu0 0.0
      %2428 = vmatprep.subr.mxu0 0.0
      %2429 = vmatpush2.msra.mxu0 0.0
      %2430 = vmatprep.subr.mxu0 0.0
      %2431 = vmatpush2.msra.mxu0 0.0
      %2432 = vmatprep.subr.mxu0 0.0
      %2433 = vmatpush2.msra.mxu0 0.0
      %2434 = vmatprep.subr.mxu0 0.0
      %2435 = vmatpush2.msra.mxu0 0.0
      %2436 = vmatprep.subr.mxu0 0.0
      %2437 = vmatpush2.msra.mxu0 0.0
      %2438 = vmatprep.subr.mxu0 0.0
      %2439 = vmatpush2.msra.mxu0 0.0
      %2440 = vmatprep.subr.mxu0 0.0
      %2441 = vmatpush2.msra.mxu0 0.0
      %2442 = vmatprep.subr.mxu0 0.0
      %2443 = vmatpush2.msra.mxu0 0.0
      %2444 = vmatprep.subr.mxu0 0.0
      %2445 = vmatpush2.msra.mxu0 0.0
      %2446 = vmatprep.subr.mxu0 0.0
      %2447 = vmatpush2.msra.mxu0 0.0
      %2448 = vmatprep.subr.mxu0 0.0
      %2449 = vmatpush2.msra.mxu0 0.0
      %2450 = vmatprep.subr.mxu0 0.0
      %2451 = vmatpush2.msra.mxu0 0.0
      %2452 = vmatprep.mubr.f32.mxu0 0.0
      %2453 = vmatmul.mubr.f32.gmra.mxu0 %v1877
      %v2454 = vpop.f32.mrf.mxu0
      %v2455 = vadd.f32 0.0, %v2454
      %v2456 = vpop.f32.mrf.mxu0
      %2457 = vmatprep.mubr.f32.mxu0 0.0
      %2458 = vmatmul.mubr.f32.gmra.mxu0 %v1879
      %v2459 = vpop.f32.mrf.mxu0
      %v2460 = vadd.f32 0.0, %v2459
      %v2461 = vpop.f32.mrf.mxu0
      %2462 = vmatprep.mubr.f32.mxu0 0.0
      %2463 = vmatmul.mubr.f32.gmra.mxu0 %v1881
      %v2464 = vpop.f32.mrf.mxu0
      %v2465 = vadd.f32 0.0, %v2464
      %v2466 = vpop.f32.mrf.mxu0
      %2467 = vmatprep.mubr.f32.mxu0 0.0
      %2468 = vmatmul.mubr.f32.gmra.mxu0 %v1883
      %v2469 = vpop.f32.mrf.mxu0
      %v2470 = vadd.f32 0.0, %v2469
      %v2471 = vpop.f32.mrf.mxu0
      %2472 = vmatprep.mubr.f32.mxu0 0.0
      %2473 = vmatmul.mubr.f32.gmra.mxu0 %v2008
      %v2474 = vpop.f32.mrf.mxu0
      %v2475 = vadd.f32 0.0, %v2474
      %v2476 = vpop.f32.mrf.mxu0
      %2477 = vmatprep.mubr.f32.mxu0 0.0
      %2478 = vmatmul.mubr.f32.gmra.mxu0 %v2133
      %v2479 = vpop.f32.mrf.mxu0
      %v2480 = vadd.f32 0.0, %v2479
      %v2481 = vpop.f32.mrf.mxu0
      %2482 = vmatprep.mubr.f32.mxu0 0.0
      %2483 = vmatmul.mubr.f32.gmra.mxu0 %v2258
      %v2484 = vpop.f32.mrf.mxu0
      %v2485 = vadd.f32 0.0, %v2484
      %v2486 = vpop.f32.mrf.mxu0
      %2487 = vmatprep.mubr.f32.mxu0 0.0
      %2488 = vmatmul.mubr.f32.gmra.mxu0 %v2383
      %v2489 = vpop.f32.mrf.mxu0
      %v2490 = vadd.f32 0.0, %v2489
      %v2491 = vpop.f32.mrf.mxu0
      %2492 = vdwg.mxu0
      %v2493 = vadd.f32 %v2368, %v2455
      %v2494 = vadd.f32 %v2369, %v2460
      %v2495 = vadd.f32 %v2370, %v2465
      %v2496 = vadd.f32 %v2371, %v2470
      %v2497 = vadd.f32 %v2372, %v2475
      %v2498 = vadd.f32 %v2373, %v2480
      %v2499 = vadd.f32 %v2374, %v2485
      %v2500 = vadd.f32 %v2375, %v2490
      %vm2501 = vcmask 1044480
      %v2502 = vrot.slane %v522, 3
      %v2503 = vrot.slane %v523, 3
      %v2504 = vsel %vm2501, %v2502, %v2503
      %v2505 = vrot.slane %v524, 3
      %v2506 = vrot.slane %v525, 3
      %v2507 = vsel %vm2501, %v2505, %v2506
      %v2508 = vrot.slane %v526, 3
      %v2509 = vrot.slane %v527, 3
      %v2510 = vsel %vm2501, %v2508, %v2509
      %v2511 = vrot.slane %v528, 3
      %v2512 = vrot.slane %v529, 3
      %v2513 = vsel %vm2501, %v2511, %v2512
      %v2514 = vrot.slane %v530, 3
      %v2515 = vrot.slane %v531, 3
      %v2516 = vsel %vm2501, %v2514, %v2515
      %v2517 = vrot.slane %v532, 3
      %v2518 = vrot.slane %v533, 3
      %v2519 = vsel %vm2501, %v2517, %v2518
      %v2520 = vrot.slane %v534, 3
      %v2521 = vrot.slane %v535, 3
      %v2522 = vsel %vm2501, %v2520, %v2521
      %v2523 = vrot.slane %v536, 3
      %v2524 = vrot.slane %v537, 3
      %v2525 = vsel %vm2501, %v2523, %v2524
      %s2526 = scalar_lea.vmem %s3, 72
      %v2527 = vld [vmem:[%s2526] sm:$0xff]
      %v2528 = vld [vmem:[%s2526 + $0x8] sm:$0xff]
      %v2529 = vld [vmem:[%s2526 + $0x10] sm:$0xf]
      %v2530 = vsel %vm553, %v2504, 0
      %v2532 = vsel %vm553, %v2507, 0
      %v2534 = vsel %vm553, %v2510, 0
      %v2536 = vsel %vm553, %v2513, 0
      %v2538 = vsel %vm553, %v2516, 0
      %v2540 = vsel %vm553, %v2519, 0
      %v2542 = vsel %vm553, %v2522, 0
      %v2544 = vsel %vm553, %v2525, 0
      %v2547 = vsel %vm578, %v2529, 0
      %2549 = vmatprep.subr.mxu0 0.0
      %2550 = vmatpush1.msra.mxu0 0.0
      %2551 = vmatprep.subr.mxu0 0.0
      %2552 = vmatpush1.msra.mxu0 0.0
      %2553 = vmatprep.subr.mxu0 0.0
      %2554 = vmatpush1.msra.mxu0 0.0
      %2555 = vmatprep.subr.mxu0 0.0
      %2556 = vmatpush1.msra.mxu0 0.0
      %2557 = vmatprep.subr.mxu0 0.0
      %2558 = vmatpush1.msra.mxu0 0.0
      %2559 = vmatprep.subr.mxu0 0.0
      %2560 = vmatpush1.msra.mxu0 0.0
      %2561 = vmatprep.subr.mxu0 0.0
      %2562 = vmatpush1.msra.mxu0 0.0
      %2563 = vmatprep.subr.mxu0 0.0
      %2564 = vmatpush1.msra.mxu0 0.0
      %2565 = vmatprep.subr.mxu0 0.0
      %2566 = vmatpush1.msra.mxu0 0.0
      %2567 = vmatprep.subr.mxu0 0.0
      %2568 = vmatpush1.msra.mxu0 0.0
      %2569 = vmatprep.subr.mxu0 0.0
      %2570 = vmatpush1.msra.mxu0 0.0
      %2571 = vmatprep.subr.mxu0 0.0
      %2572 = vmatpush1.msra.mxu0 0.0
      %2573 = vmatprep.subr.mxu0 0.0
      %2574 = vmatpush1.msra.mxu0 0.0
      %2575 = vmatprep.subr.mxu0 0.0
      %2576 = vmatpush1.msra.mxu0 %v2547
      %2577 = vmatprep.subr.mxu0 0.0
      %2578 = vmatpush1.msra.mxu0 %v2528
      %2579 = vmatprep.subr.mxu0 0.0
      %2580 = vmatpush1.msra.mxu0 %v2527
      %2581 = vmatprep.subr.mxu0 0.0
      %2582 = vmatpush2.msra.mxu0 0.0
      %2583 = vmatprep.subr.mxu0 0.0
      %2584 = vmatpush2.msra.mxu0 0.0
      %2585 = vmatprep.subr.mxu0 0.0
      %2586 = vmatpush2.msra.mxu0 0.0
      %2587 = vmatprep.subr.mxu0 0.0
      %2588 = vmatpush2.msra.mxu0 0.0
      %2589 = vmatprep.subr.mxu0 0.0
      %2590 = vmatpush2.msra.mxu0 0.0
      %2591 = vmatprep.subr.mxu0 0.0
      %2592 = vmatpush2.msra.mxu0 0.0
      %2593 = vmatprep.subr.mxu0 0.0
      %2594 = vmatpush2.msra.mxu0 0.0
      %2595 = vmatprep.subr.mxu0 0.0
      %2596 = vmatpush2.msra.mxu0 0.0
      %2597 = vmatprep.subr.mxu0 0.0
      %2598 = vmatpush2.msra.mxu0 0.0
      %2599 = vmatprep.subr.mxu0 0.0
      %2600 = vmatpush2.msra.mxu0 0.0
      %2601 = vmatprep.subr.mxu0 0.0
      %2602 = vmatpush2.msra.mxu0 0.0
      %2603 = vmatprep.subr.mxu0 0.0
      %2604 = vmatpush2.msra.mxu0 0.0
      %2605 = vmatprep.subr.mxu0 0.0
      %2606 = vmatpush2.msra.mxu0 0.0
      %2607 = vmatprep.subr.mxu0 0.0
      %2608 = vmatpush2.msra.mxu0 0.0
      %2609 = vmatprep.subr.mxu0 0.0
      %2610 = vmatpush2.msra.mxu0 0.0
      %2611 = vmatprep.subr.mxu0 0.0
      %2612 = vmatpush2.msra.mxu0 0.0
      %2613 = vmatprep.mubr.f32.mxu0 0.0
      %2614 = vmatmul.mubr.f32.gmra.mxu0 %v2530
      %v2615 = vpop.f32.mrf.mxu0
      %v2616 = vadd.f32 0.0, %v2615
      %v2617 = vpop.f32.mrf.mxu0
      %2618 = vmatprep.mubr.f32.mxu0 0.0
      %2619 = vmatmul.mubr.f32.gmra.mxu0 %v2532
      %v2620 = vpop.f32.mrf.mxu0
      %v2621 = vadd.f32 0.0, %v2620
      %v2622 = vpop.f32.mrf.mxu0
      %2623 = vmatprep.mubr.f32.mxu0 0.0
      %2624 = vmatmul.mubr.f32.gmra.mxu0 %v2534
      %v2625 = vpop.f32.mrf.mxu0
      %v2626 = vadd.f32 0.0, %v2625
      %v2627 = vpop.f32.mrf.mxu0
      %2628 = vmatprep.mubr.f32.mxu0 0.0
      %2629 = vmatmul.mubr.f32.gmra.mxu0 %v2536
      %v2630 = vpop.f32.mrf.mxu0
      %v2631 = vadd.f32 0.0, %v2630
      %v2632 = vpop.f32.mrf.mxu0
      %2633 = vmatprep.mubr.f32.mxu0 0.0
      %2634 = vmatmul.mubr.f32.gmra.mxu0 %v2538
      %v2635 = vpop.f32.mrf.mxu0
      %v2636 = vadd.f32 0.0, %v2635
      %v2637 = vpop.f32.mrf.mxu0
      %2638 = vmatprep.mubr.f32.mxu0 0.0
      %2639 = vmatmul.mubr.f32.gmra.mxu0 %v2540
      %v2640 = vpop.f32.mrf.mxu0
      %v2641 = vadd.f32 0.0, %v2640
      %v2642 = vpop.f32.mrf.mxu0
      %2643 = vmatprep.mubr.f32.mxu0 0.0
      %2644 = vmatmul.mubr.f32.gmra.mxu0 %v2542
      %v2645 = vpop.f32.mrf.mxu0
      %v2646 = vadd.f32 0.0, %v2645
      %v2647 = vpop.f32.mrf.mxu0
      %2648 = vmatprep.mubr.f32.mxu0 0.0
      %2649 = vmatmul.mubr.f32.gmra.mxu0 %v2544
      %v2650 = vpop.f32.mrf.mxu0
      %v2651 = vadd.f32 0.0, %v2650
      %v2652 = vpop.f32.mrf.mxu0
      %2653 = vdwg.mxu0
      %v2654 = vadd.f32 %v2493, %v2616
      %v2655 = vadd.f32 %v2494, %v2621
      %v2656 = vadd.f32 %v2495, %v2626
      %v2657 = vadd.f32 %v2496, %v2631
      %v2658 = vadd.f32 %v2497, %v2636
      %v2659 = vadd.f32 %v2498, %v2641
      %v2660 = vadd.f32 %v2499, %v2646
      %v2661 = vadd.f32 %v2500, %v2651
      %v2662 = vrot.slane %v538, 3
      %v2663 = vrot.slane %v539, 3
      %v2664 = vsel %vm2501, %v2662, %v2663
      %s2665 = scalar_lea.vmem %s3, 192
      %v2666 = vld [vmem:[%s2665] sm:$0xff]
      %v2667 = vld [vmem:[%s2665 + $0x8] sm:$0xff]
      %v2668 = vld [vmem:[%s2665 + $0x10] sm:$0xf]
      %v2669 = vsel %vm553, %v2664, 0
      %v2672 = vsel %vm578, %v2668, 0
      %2674 = vmatprep.subr.mxu0 0.0
      %2675 = vmatpush1.msra.mxu0 0.0
      %2676 = vmatprep.subr.mxu0 0.0
      %2677 = vmatpush1.msra.mxu0 0.0
      %2678 = vmatprep.subr.mxu0 0.0
      %2679 = vmatpush1.msra.mxu0 0.0
      %2680 = vmatprep.subr.mxu0 0.0
      %2681 = vmatpush1.msra.mxu0 0.0
      %2682 = vmatprep.subr.mxu0 0.0
      %2683 = vmatpush1.msra.mxu0 0.0
      %2684 = vmatprep.subr.mxu0 0.0
      %2685 = vmatpush1.msra.mxu0 0.0
      %2686 = vmatprep.subr.mxu0 0.0
      %2687 = vmatpush1.msra.mxu0 0.0
      %2688 = vmatprep.subr.mxu0 0.0
      %2689 = vmatpush1.msra.mxu0 0.0
      %2690 = vmatprep.subr.mxu0 0.0
      %2691 = vmatpush1.msra.mxu0 0.0
      %2692 = vmatprep.subr.mxu0 0.0
      %2693 = vmatpush1.msra.mxu0 0.0
      %2694 = vmatprep.subr.mxu0 0.0
      %2695 = vmatpush1.msra.mxu0 0.0
      %2696 = vmatprep.subr.mxu0 0.0
      %2697 = vmatpush1.msra.mxu0 0.0
      %2698 = vmatprep.subr.mxu0 0.0
      %2699 = vmatpush1.msra.mxu0 0.0
      %2700 = vmatprep.subr.mxu0 0.0
      %2701 = vmatpush1.msra.mxu0 %v2672
      %2702 = vmatprep.subr.mxu0 0.0
      %2703 = vmatpush1.msra.mxu0 %v2667
      %2704 = vmatprep.subr.mxu0 0.0
      %2705 = vmatpush1.msra.mxu0 %v2666
      %2706 = vmatprep.subr.mxu0 0.0
      %2707 = vmatpush2.msra.mxu0 0.0
      %2708 = vmatprep.subr.mxu0 0.0
      %2709 = vmatpush2.msra.mxu0 0.0
      %2710 = vmatprep.subr.mxu0 0.0
      %2711 = vmatpush2.msra.mxu0 0.0
      %2712 = vmatprep.subr.mxu0 0.0
      %2713 = vmatpush2.msra.mxu0 0.0
      %2714 = vmatprep.subr.mxu0 0.0
      %2715 = vmatpush2.msra.mxu0 0.0
      %2716 = vmatprep.subr.mxu0 0.0
      %2717 = vmatpush2.msra.mxu0 0.0
      %2718 = vmatprep.subr.mxu0 0.0
      %2719 = vmatpush2.msra.mxu0 0.0
      %2720 = vmatprep.subr.mxu0 0.0
      %2721 = vmatpush2.msra.mxu0 0.0
      %2722 = vmatprep.subr.mxu0 0.0
      %2723 = vmatpush2.msra.mxu0 0.0
      %2724 = vmatprep.subr.mxu0 0.0
      %2725 = vmatpush2.msra.mxu0 0.0
      %2726 = vmatprep.subr.mxu0 0.0
      %2727 = vmatpush2.msra.mxu0 0.0
      %2728 = vmatprep.subr.mxu0 0.0
      %2729 = vmatpush2.msra.mxu0 0.0
      %2730 = vmatprep.subr.mxu0 0.0
      %2731 = vmatpush2.msra.mxu0 0.0
      %2732 = vmatprep.subr.mxu0 0.0
      %2733 = vmatpush2.msra.mxu0 0.0
      %2734 = vmatprep.subr.mxu0 0.0
      %2735 = vmatpush2.msra.mxu0 0.0
      %2736 = vmatprep.subr.mxu0 0.0
      %2737 = vmatpush2.msra.mxu0 0.0
      %2738 = vmatprep.mubr.f32.mxu0 0.0
      %2739 = vmatmul.mubr.f32.gmra.mxu0 %v2532
      %v2740 = vpop.f32.mrf.mxu0
      %v2741 = vadd.f32 0.0, %v2740
      %v2742 = vpop.f32.mrf.mxu0
      %2743 = vmatprep.mubr.f32.mxu0 0.0
      %2744 = vmatmul.mubr.f32.gmra.mxu0 %v2534
      %v2745 = vpop.f32.mrf.mxu0
      %v2746 = vadd.f32 0.0, %v2745
      %v2747 = vpop.f32.mrf.mxu0
      %2748 = vmatprep.mubr.f32.mxu0 0.0
      %2749 = vmatmul.mubr.f32.gmra.mxu0 %v2536
      %v2750 = vpop.f32.mrf.mxu0
      %v2751 = vadd.f32 0.0, %v2750
      %v2752 = vpop.f32.mrf.mxu0
      %2753 = vmatprep.mubr.f32.mxu0 0.0
      %2754 = vmatmul.mubr.f32.gmra.mxu0 %v2538
      %v2755 = vpop.f32.mrf.mxu0
      %v2756 = vadd.f32 0.0, %v2755
      %v2757 = vpop.f32.mrf.mxu0
      %2758 = vmatprep.mubr.f32.mxu0 0.0
      %2759 = vmatmul.mubr.f32.gmra.mxu0 %v2540
      %v2760 = vpop.f32.mrf.mxu0
      %v2761 = vadd.f32 0.0, %v2760
      %v2762 = vpop.f32.mrf.mxu0
      %2763 = vmatprep.mubr.f32.mxu0 0.0
      %2764 = vmatmul.mubr.f32.gmra.mxu0 %v2542
      %v2765 = vpop.f32.mrf.mxu0
      %v2766 = vadd.f32 0.0, %v2765
      %v2767 = vpop.f32.mrf.mxu0
      %2768 = vmatprep.mubr.f32.mxu0 0.0
      %2769 = vmatmul.mubr.f32.gmra.mxu0 %v2544
      %v2770 = vpop.f32.mrf.mxu0
      %v2771 = vadd.f32 0.0, %v2770
      %v2772 = vpop.f32.mrf.mxu0
      %2773 = vmatprep.mubr.f32.mxu0 0.0
      %2774 = vmatmul.mubr.f32.gmra.mxu0 %v2669
      %v2775 = vpop.f32.mrf.mxu0
      %v2776 = vadd.f32 0.0, %v2775
      %v2777 = vpop.f32.mrf.mxu0
      %2778 = vdwg.mxu0
      %v2779 = vadd.f32 %v2654, %v2741
      %v2780 = vadd.f32 %v2655, %v2746
      %v2781 = vadd.f32 %v2656, %v2751
      %v2782 = vadd.f32 %v2657, %v2756
      %v2783 = vadd.f32 %v2658, %v2761
      %v2784 = vadd.f32 %v2659, %v2766
      %v2785 = vadd.f32 %v2660, %v2771
      %v2786 = vadd.f32 %v2661, %v2776
      %v2787 = vrot.slane %v540, 3
      %v2788 = vrot.slane %v541, 3
      %v2789 = vsel %vm2501, %v2787, %v2788
      %s2790 = scalar_lea.vmem %s3, 312
      %v2791 = vld [vmem:[%s2790] sm:$0xff]
      %v2792 = vld [vmem:[%s2790 + $0x8] sm:$0xff]
      %v2793 = vld [vmem:[%s2790 + $0x10] sm:$0xf]
      %v2794 = vsel %vm553, %v2789, 0
      %v2797 = vsel %vm578, %v2793, 0
      %2799 = vmatprep.subr.mxu0 0.0
      %2800 = vmatpush1.msra.mxu0 0.0
      %2801 = vmatprep.subr.mxu0 0.0
      %2802 = vmatpush1.msra.mxu0 0.0
      %2803 = vmatprep.subr.mxu0 0.0
      %2804 = vmatpush1.msra.mxu0 0.0
      %2805 = vmatprep.subr.mxu0 0.0
      %2806 = vmatpush1.msra.mxu0 0.0
      %2807 = vmatprep.subr.mxu0 0.0
      %2808 = vmatpush1.msra.mxu0 0.0
      %2809 = vmatprep.subr.mxu0 0.0
      %2810 = vmatpush1.msra.mxu0 0.0
      %2811 = vmatprep.subr.mxu0 0.0
      %2812 = vmatpush1.msra.mxu0 0.0
      %2813 = vmatprep.subr.mxu0 0.0
      %2814 = vmatpush1.msra.mxu0 0.0
      %2815 = vmatprep.subr.mxu0 0.0
      %2816 = vmatpush1.msra.mxu0 0.0
      %2817 = vmatprep.subr.mxu0 0.0
      %2818 = vmatpush1.msra.mxu0 0.0
      %2819 = vmatprep.subr.mxu0 0.0
      %2820 = vmatpush1.msra.mxu0 0.0
      %2821 = vmatprep.subr.mxu0 0.0
      %2822 = vmatpush1.msra.mxu0 0.0
      %2823 = vmatprep.subr.mxu0 0.0
      %2824 = vmatpush1.msra.mxu0 0.0
      %2825 = vmatprep.subr.mxu0 0.0
      %2826 = vmatpush1.msra.mxu0 %v2797
      %2827 = vmatprep.subr.mxu0 0.0
      %2828 = vmatpush1.msra.mxu0 %v2792
      %2829 = vmatprep.subr.mxu0 0.0
      %2830 = vmatpush1.msra.mxu0 %v2791
      %2831 = vmatprep.subr.mxu0 0.0
      %2832 = vmatpush2.msra.mxu0 0.0
      %2833 = vmatprep.subr.mxu0 0.0
      %2834 = vmatpush2.msra.mxu0 0.0
      %2835 = vmatprep.subr.mxu0 0.0
      %2836 = vmatpush2.msra.mxu0 0.0
      %2837 = vmatprep.subr.mxu0 0.0
      %2838 = vmatpush2.msra.mxu0 0.0
      %2839 = vmatprep.subr.mxu0 0.0
      %2840 = vmatpush2.msra.mxu0 0.0
      %2841 = vmatprep.subr.mxu0 0.0
      %2842 = vmatpush2.msra.mxu0 0.0
      %2843 = vmatprep.subr.mxu0 0.0
      %2844 = vmatpush2.msra.mxu0 0.0
      %2845 = vmatprep.subr.mxu0 0.0
      %2846 = vmatpush2.msra.mxu0 0.0
      %2847 = vmatprep.subr.mxu0 0.0
      %2848 = vmatpush2.msra.mxu0 0.0
      %2849 = vmatprep.subr.mxu0 0.0
      %2850 = vmatpush2.msra.mxu0 0.0
      %2851 = vmatprep.subr.mxu0 0.0
      %2852 = vmatpush2.msra.mxu0 0.0
      %2853 = vmatprep.subr.mxu0 0.0
      %2854 = vmatpush2.msra.mxu0 0.0
      %2855 = vmatprep.subr.mxu0 0.0
      %2856 = vmatpush2.msra.mxu0 0.0
      %2857 = vmatprep.subr.mxu0 0.0
      %2858 = vmatpush2.msra.mxu0 0.0
      %2859 = vmatprep.subr.mxu0 0.0
      %2860 = vmatpush2.msra.mxu0 0.0
      %2861 = vmatprep.subr.mxu0 0.0
      %2862 = vmatpush2.msra.mxu0 0.0
      %2863 = vmatprep.mubr.f32.mxu0 0.0
      %2864 = vmatmul.mubr.f32.gmra.mxu0 %v2534
      %v2865 = vpop.f32.mrf.mxu0
      %v2866 = vadd.f32 0.0, %v2865
      %v2867 = vpop.f32.mrf.mxu0
      %2868 = vmatprep.mubr.f32.mxu0 0.0
      %2869 = vmatmul.mubr.f32.gmra.mxu0 %v2536
      %v2870 = vpop.f32.mrf.mxu0
      %v2871 = vadd.f32 0.0, %v2870
      %v2872 = vpop.f32.mrf.mxu0
      %2873 = vmatprep.mubr.f32.mxu0 0.0
      %2874 = vmatmul.mubr.f32.gmra.mxu0 %v2538
      %v2875 = vpop.f32.mrf.mxu0
      %v2876 = vadd.f32 0.0, %v2875
      %v2877 = vpop.f32.mrf.mxu0
      %2878 = vmatprep.mubr.f32.mxu0 0.0
      %2879 = vmatmul.mubr.f32.gmra.mxu0 %v2540
      %v2880 = vpop.f32.mrf.mxu0
      %v2881 = vadd.f32 0.0, %v2880
      %v2882 = vpop.f32.mrf.mxu0
      %2883 = vmatprep.mubr.f32.mxu0 0.0
      %2884 = vmatmul.mubr.f32.gmra.mxu0 %v2542
      %v2885 = vpop.f32.mrf.mxu0
      %v2886 = vadd.f32 0.0, %v2885
      %v2887 = vpop.f32.mrf.mxu0
      %2888 = vmatprep.mubr.f32.mxu0 0.0
      %2889 = vmatmul.mubr.f32.gmra.mxu0 %v2544
      %v2890 = vpop.f32.mrf.mxu0
      %v2891 = vadd.f32 0.0, %v2890
      %v2892 = vpop.f32.mrf.mxu0
      %2893 = vmatprep.mubr.f32.mxu0 0.0
      %2894 = vmatmul.mubr.f32.gmra.mxu0 %v2669
      %v2895 = vpop.f32.mrf.mxu0
      %v2896 = vadd.f32 0.0, %v2895
      %v2897 = vpop.f32.mrf.mxu0
      %2898 = vmatprep.mubr.f32.mxu0 0.0
      %2899 = vmatmul.mubr.f32.gmra.mxu0 %v2794
      %v2900 = vpop.f32.mrf.mxu0
      %v2901 = vadd.f32 0.0, %v2900
      %v2902 = vpop.f32.mrf.mxu0
      %2903 = vdwg.mxu0
      %v2904 = vadd.f32 %v2779, %v2866
      %v2905 = vadd.f32 %v2780, %v2871
      %v2906 = vadd.f32 %v2781, %v2876
      %v2907 = vadd.f32 %v2782, %v2881
      %v2908 = vadd.f32 %v2783, %v2886
      %v2909 = vadd.f32 %v2784, %v2891
      %v2910 = vadd.f32 %v2785, %v2896
      %v2911 = vadd.f32 %v2786, %v2901
      %v2912 = vrot.slane %v542, 3
      %v2913 = vrot.slane %v543, 3
      %v2914 = vsel %vm2501, %v2912, %v2913
      %s2915 = scalar_lea.vmem %s3, 432
      %v2916 = vld [vmem:[%s2915] sm:$0xff]
      %v2917 = vld [vmem:[%s2915 + $0x8] sm:$0xff]
      %v2918 = vld [vmem:[%s2915 + $0x10] sm:$0xf]
      %v2919 = vsel %vm553, %v2914, 0
      %v2922 = vsel %vm578, %v2918, 0
      %2924 = vmatprep.subr.mxu0 0.0
      %2925 = vmatpush1.msra.mxu0 0.0
      %2926 = vmatprep.subr.mxu0 0.0
      %2927 = vmatpush1.msra.mxu0 0.0
      %2928 = vmatprep.subr.mxu0 0.0
      %2929 = vmatpush1.msra.mxu0 0.0
      %2930 = vmatprep.subr.mxu0 0.0
      %2931 = vmatpush1.msra.mxu0 0.0
      %2932 = vmatprep.subr.mxu0 0.0
      %2933 = vmatpush1.msra.mxu0 0.0
      %2934 = vmatprep.subr.mxu0 0.0
      %2935 = vmatpush1.msra.mxu0 0.0
      %2936 = vmatprep.subr.mxu0 0.0
      %2937 = vmatpush1.msra.mxu0 0.0
      %2938 = vmatprep.subr.mxu0 0.0
      %2939 = vmatpush1.msra.mxu0 0.0
      %2940 = vmatprep.subr.mxu0 0.0
      %2941 = vmatpush1.msra.mxu0 0.0
      %2942 = vmatprep.subr.mxu0 0.0
      %2943 = vmatpush1.msra.mxu0 0.0
      %2944 = vmatprep.subr.mxu0 0.0
      %2945 = vmatpush1.msra.mxu0 0.0
      %2946 = vmatprep.subr.mxu0 0.0
      %2947 = vmatpush1.msra.mxu0 0.0
      %2948 = vmatprep.subr.mxu0 0.0
      %2949 = vmatpush1.msra.mxu0 0.0
      %2950 = vmatprep.subr.mxu0 0.0
      %2951 = vmatpush1.msra.mxu0 %v2922
      %2952 = vmatprep.subr.mxu0 0.0
      %2953 = vmatpush1.msra.mxu0 %v2917
      %2954 = vmatprep.subr.mxu0 0.0
      %2955 = vmatpush1.msra.mxu0 %v2916
      %2956 = vmatprep.subr.mxu0 0.0
      %2957 = vmatpush2.msra.mxu0 0.0
      %2958 = vmatprep.subr.mxu0 0.0
      %2959 = vmatpush2.msra.mxu0 0.0
      %2960 = vmatprep.subr.mxu0 0.0
      %2961 = vmatpush2.msra.mxu0 0.0
      %2962 = vmatprep.subr.mxu0 0.0
      %2963 = vmatpush2.msra.mxu0 0.0
      %2964 = vmatprep.subr.mxu0 0.0
      %2965 = vmatpush2.msra.mxu0 0.0
      %2966 = vmatprep.subr.mxu0 0.0
      %2967 = vmatpush2.msra.mxu0 0.0
      %2968 = vmatprep.subr.mxu0 0.0
      %2969 = vmatpush2.msra.mxu0 0.0
      %2970 = vmatprep.subr.mxu0 0.0
      %2971 = vmatpush2.msra.mxu0 0.0
      %2972 = vmatprep.subr.mxu0 0.0
      %2973 = vmatpush2.msra.mxu0 0.0
      %2974 = vmatprep.subr.mxu0 0.0
      %2975 = vmatpush2.msra.mxu0 0.0
      %2976 = vmatprep.subr.mxu0 0.0
      %2977 = vmatpush2.msra.mxu0 0.0
      %2978 = vmatprep.subr.mxu0 0.0
      %2979 = vmatpush2.msra.mxu0 0.0
      %2980 = vmatprep.subr.mxu0 0.0
      %2981 = vmatpush2.msra.mxu0 0.0
      %2982 = vmatprep.subr.mxu0 0.0
      %2983 = vmatpush2.msra.mxu0 0.0
      %2984 = vmatprep.subr.mxu0 0.0
      %2985 = vmatpush2.msra.mxu0 0.0
      %2986 = vmatprep.subr.mxu0 0.0
      %2987 = vmatpush2.msra.mxu0 0.0
      %2988 = vmatprep.mubr.f32.mxu0 0.0
      %2989 = vmatmul.mubr.f32.gmra.mxu0 %v2536
      %v2990 = vpop.f32.mrf.mxu0
      %v2991 = vadd.f32 0.0, %v2990
      %v2992 = vpop.f32.mrf.mxu0
      %2993 = vmatprep.mubr.f32.mxu0 0.0
      %2994 = vmatmul.mubr.f32.gmra.mxu0 %v2538
      %v2995 = vpop.f32.mrf.mxu0
      %v2996 = vadd.f32 0.0, %v2995
      %v2997 = vpop.f32.mrf.mxu0
      %2998 = vmatprep.mubr.f32.mxu0 0.0
      %2999 = vmatmul.mubr.f32.gmra.mxu0 %v2540
      %v3000 = vpop.f32.mrf.mxu0
      %v3001 = vadd.f32 0.0, %v3000
      %v3002 = vpop.f32.mrf.mxu0
      %3003 = vmatprep.mubr.f32.mxu0 0.0
      %3004 = vmatmul.mubr.f32.gmra.mxu0 %v2542
      %v3005 = vpop.f32.mrf.mxu0
      %v3006 = vadd.f32 0.0, %v3005
      %v3007 = vpop.f32.mrf.mxu0
      %3008 = vmatprep.mubr.f32.mxu0 0.0
      %3009 = vmatmul.mubr.f32.gmra.mxu0 %v2544
      %v3010 = vpop.f32.mrf.mxu0
      %v3011 = vadd.f32 0.0, %v3010
      %v3012 = vpop.f32.mrf.mxu0
      %3013 = vmatprep.mubr.f32.mxu0 0.0
      %3014 = vmatmul.mubr.f32.gmra.mxu0 %v2669
      %v3015 = vpop.f32.mrf.mxu0
      %v3016 = vadd.f32 0.0, %v3015
      %v3017 = vpop.f32.mrf.mxu0
      %3018 = vmatprep.mubr.f32.mxu0 0.0
      %3019 = vmatmul.mubr.f32.gmra.mxu0 %v2794
      %v3020 = vpop.f32.mrf.mxu0
      %v3021 = vadd.f32 0.0, %v3020
      %v3022 = vpop.f32.mrf.mxu0
      %3023 = vmatprep.mubr.f32.mxu0 0.0
      %3024 = vmatmul.mubr.f32.gmra.mxu0 %v2919
      %v3025 = vpop.f32.mrf.mxu0
      %v3026 = vadd.f32 0.0, %v3025
      %v3027 = vpop.f32.mrf.mxu0
      %3028 = vdwg.mxu0
      %v3029 = vadd.f32 %v2904, %v2991
      %v3030 = vadd.f32 %v2905, %v2996
      %v3031 = vadd.f32 %v2906, %v3001
      %v3032 = vadd.f32 %v2907, %v3006
      %v3033 = vadd.f32 %v2908, %v3011
      %v3034 = vadd.f32 %v2909, %v3016
      %v3035 = vadd.f32 %v2910, %v3021
      %v3036 = vadd.f32 %v2911, %v3026
      %v3037 = vrot.slane %v544, 3
      %v3038 = vrot.slane %v545, 3
      %v3039 = vsel %vm2501, %v3037, %v3038
      %s3040 = scalar_lea.vmem %s3, 552
      %v3041 = vld [vmem:[%s3040] sm:$0xff]
      %v3042 = vld [vmem:[%s3040 + $0x8] sm:$0xff]
      %v3043 = vld [vmem:[%s3040 + $0x10] sm:$0xf]
      %v3044 = vsel %vm553, %v3039, 0
      %v3047 = vsel %vm578, %v3043, 0
      %3049 = vmatprep.subr.mxu0 0.0
      %3050 = vmatpush1.msra.mxu0 0.0
      %3051 = vmatprep.subr.mxu0 0.0
      %3052 = vmatpush1.msra.mxu0 0.0
      %3053 = vmatprep.subr.mxu0 0.0
      %3054 = vmatpush1.msra.mxu0 0.0
      %3055 = vmatprep.subr.mxu0 0.0
      %3056 = vmatpush1.msra.mxu0 0.0
      %3057 = vmatprep.subr.mxu0 0.0
      %3058 = vmatpush1.msra.mxu0 0.0
      %3059 = vmatprep.subr.mxu0 0.0
      %3060 = vmatpush1.msra.mxu0 0.0
      %3061 = vmatprep.subr.mxu0 0.0
      %3062 = vmatpush1.msra.mxu0 0.0
      %3063 = vmatprep.subr.mxu0 0.0
      %3064 = vmatpush1.msra.mxu0 0.0
      %3065 = vmatprep.subr.mxu0 0.0
      %3066 = vmatpush1.msra.mxu0 0.0
      %3067 = vmatprep.subr.mxu0 0.0
      %3068 = vmatpush1.msra.mxu0 0.0
      %3069 = vmatprep.subr.mxu0 0.0
      %3070 = vmatpush1.msra.mxu0 0.0
      %3071 = vmatprep.subr.mxu0 0.0
      %3072 = vmatpush1.msra.mxu0 0.0
      %3073 = vmatprep.subr.mxu0 0.0
      %3074 = vmatpush1.msra.mxu0 0.0
      %3075 = vmatprep.subr.mxu0 0.0
      %3076 = vmatpush1.msra.mxu0 %v3047
      %3077 = vmatprep.subr.mxu0 0.0
      %3078 = vmatpush1.msra.mxu0 %v3042
      %3079 = vmatprep.subr.mxu0 0.0
      %3080 = vmatpush1.msra.mxu0 %v3041
      %3081 = vmatprep.subr.mxu0 0.0
      %3082 = vmatpush2.msra.mxu0 0.0
      %3083 = vmatprep.subr.mxu0 0.0
      %3084 = vmatpush2.msra.mxu0 0.0
      %3085 = vmatprep.subr.mxu0 0.0
      %3086 = vmatpush2.msra.mxu0 0.0
      %3087 = vmatprep.subr.mxu0 0.0
      %3088 = vmatpush2.msra.mxu0 0.0
      %3089 = vmatprep.subr.mxu0 0.0
      %3090 = vmatpush2.msra.mxu0 0.0
      %3091 = vmatprep.subr.mxu0 0.0
      %3092 = vmatpush2.msra.mxu0 0.0
      %3093 = vmatprep.subr.mxu0 0.0
      %3094 = vmatpush2.msra.mxu0 0.0
      %3095 = vmatprep.subr.mxu0 0.0
      %3096 = vmatpush2.msra.mxu0 0.0
      %3097 = vmatprep.subr.mxu0 0.0
      %3098 = vmatpush2.msra.mxu0 0.0
      %3099 = vmatprep.subr.mxu0 0.0
      %3100 = vmatpush2.msra.mxu0 0.0
      %3101 = vmatprep.subr.mxu0 0.0
      %3102 = vmatpush2.msra.mxu0 0.0
      %3103 = vmatprep.subr.mxu0 0.0
      %3104 = vmatpush2.msra.mxu0 0.0
      %3105 = vmatprep.subr.mxu0 0.0
      %3106 = vmatpush2.msra.mxu0 0.0
      %3107 = vmatprep.subr.mxu0 0.0
      %3108 = vmatpush2.msra.mxu0 0.0
      %3109 = vmatprep.subr.mxu0 0.0
      %3110 = vmatpush2.msra.mxu0 0.0
      %3111 = vmatprep.subr.mxu0 0.0
      %3112 = vmatpush2.msra.mxu0 0.0
      %3113 = vmatprep.mubr.f32.mxu0 0.0
      %3114 = vmatmul.mubr.f32.gmra.mxu0 %v2538
      %v3115 = vpop.f32.mrf.mxu0
      %v3116 = vadd.f32 0.0, %v3115
      %v3117 = vpop.f32.mrf.mxu0
      %3118 = vmatprep.mubr.f32.mxu0 0.0
      %3119 = vmatmul.mubr.f32.gmra.mxu0 %v2540
      %v3120 = vpop.f32.mrf.mxu0
      %v3121 = vadd.f32 0.0, %v3120
      %v3122 = vpop.f32.mrf.mxu0
      %3123 = vmatprep.mubr.f32.mxu0 0.0
      %3124 = vmatmul.mubr.f32.gmra.mxu0 %v2542
      %v3125 = vpop.f32.mrf.mxu0
      %v3126 = vadd.f32 0.0, %v3125
      %v3127 = vpop.f32.mrf.mxu0
      %3128 = vmatprep.mubr.f32.mxu0 0.0
      %3129 = vmatmul.mubr.f32.gmra.mxu0 %v2544
      %v3130 = vpop.f32.mrf.mxu0
      %v3131 = vadd.f32 0.0, %v3130
      %v3132 = vpop.f32.mrf.mxu0
      %3133 = vmatprep.mubr.f32.mxu0 0.0
      %3134 = vmatmul.mubr.f32.gmra.mxu0 %v2669
      %v3135 = vpop.f32.mrf.mxu0
      %v3136 = vadd.f32 0.0, %v3135
      %v3137 = vpop.f32.mrf.mxu0
      %3138 = vmatprep.mubr.f32.mxu0 0.0
      %3139 = vmatmul.mubr.f32.gmra.mxu0 %v2794
      %v3140 = vpop.f32.mrf.mxu0
      %v3141 = vadd.f32 0.0, %v3140
      %v3142 = vpop.f32.mrf.mxu0
      %3143 = vmatprep.mubr.f32.mxu0 0.0
      %3144 = vmatmul.mubr.f32.gmra.mxu0 %v2919
      %v3145 = vpop.f32.mrf.mxu0
      %v3146 = vadd.f32 0.0, %v3145
      %v3147 = vpop.f32.mrf.mxu0
      %3148 = vmatprep.mubr.f32.mxu0 0.0
      %3149 = vmatmul.mubr.f32.gmra.mxu0 %v3044
      %v3150 = vpop.f32.mrf.mxu0
      %v3151 = vadd.f32 0.0, %v3150
      %v3152 = vpop.f32.mrf.mxu0
      %3153 = vdwg.mxu0
      %v3154 = vadd.f32 %v3029, %v3116
      %v3155 = vadd.f32 %v3030, %v3121
      %v3156 = vadd.f32 %v3031, %v3126
      %v3157 = vadd.f32 %v3032, %v3131
      %v3158 = vadd.f32 %v3033, %v3136
      %v3159 = vadd.f32 %v3034, %v3141
      %v3160 = vadd.f32 %v3035, %v3146
      %v3161 = vadd.f32 %v3036, %v3151
      %v3162 = vrot.slane %v522, 4
      %v3163 = vrot.slane %v523, 4
      %v3164 = vsel %vm578, %v3162, %v3163
      %v3165 = vrot.slane %v524, 4
      %v3166 = vrot.slane %v525, 4
      %v3167 = vsel %vm578, %v3165, %v3166
      %v3168 = vrot.slane %v526, 4
      %v3169 = vrot.slane %v527, 4
      %v3170 = vsel %vm578, %v3168, %v3169
      %v3171 = vrot.slane %v528, 4
      %v3172 = vrot.slane %v529, 4
      %v3173 = vsel %vm578, %v3171, %v3172
      %v3174 = vrot.slane %v530, 4
      %v3175 = vrot.slane %v531, 4
      %v3176 = vsel %vm578, %v3174, %v3175
      %v3177 = vrot.slane %v532, 4
      %v3178 = vrot.slane %v533, 4
      %v3179 = vsel %vm578, %v3177, %v3178
      %v3180 = vrot.slane %v534, 4
      %v3181 = vrot.slane %v535, 4
      %v3182 = vsel %vm578, %v3180, %v3181
      %v3183 = vrot.slane %v536, 4
      %v3184 = vrot.slane %v537, 4
      %v3185 = vsel %vm578, %v3183, %v3184
      %s3186 = scalar_lea.vmem %s3, 96
      %v3187 = vld [vmem:[%s3186] sm:$0xff]
      %v3188 = vld [vmem:[%s3186 + $0x8] sm:$0xff]
      %v3189 = vld [vmem:[%s3186 + $0x10] sm:$0xf]
      %v3190 = vsel %vm553, %v3164, 0
      %v3192 = vsel %vm553, %v3167, 0
      %v3194 = vsel %vm553, %v3170, 0
      %v3196 = vsel %vm553, %v3173, 0
      %v3198 = vsel %vm553, %v3176, 0
      %v3200 = vsel %vm553, %v3179, 0
      %v3202 = vsel %vm553, %v3182, 0
      %v3204 = vsel %vm553, %v3185, 0
      %v3207 = vsel %vm578, %v3189, 0
      %3209 = vmatprep.subr.mxu0 0.0
      %3210 = vmatpush1.msra.mxu0 0.0
      %3211 = vmatprep.subr.mxu0 0.0
      %3212 = vmatpush1.msra.mxu0 0.0
      %3213 = vmatprep.subr.mxu0 0.0
      %3214 = vmatpush1.msra.mxu0 0.0
      %3215 = vmatprep.subr.mxu0 0.0
      %3216 = vmatpush1.msra.mxu0 0.0
      %3217 = vmatprep.subr.mxu0 0.0
      %3218 = vmatpush1.msra.mxu0 0.0
      %3219 = vmatprep.subr.mxu0 0.0
      %3220 = vmatpush1.msra.mxu0 0.0
      %3221 = vmatprep.subr.mxu0 0.0
      %3222 = vmatpush1.msra.mxu0 0.0
      %3223 = vmatprep.subr.mxu0 0.0
      %3224 = vmatpush1.msra.mxu0 0.0
      %3225 = vmatprep.subr.mxu0 0.0
      %3226 = vmatpush1.msra.mxu0 0.0
      %3227 = vmatprep.subr.mxu0 0.0
      %3228 = vmatpush1.msra.mxu0 0.0
      %3229 = vmatprep.subr.mxu0 0.0
      %3230 = vmatpush1.msra.mxu0 0.0
      %3231 = vmatprep.subr.mxu0 0.0
      %3232 = vmatpush1.msra.mxu0 0.0
      %3233 = vmatprep.subr.mxu0 0.0
      %3234 = vmatpush1.msra.mxu0 0.0
      %3235 = vmatprep.subr.mxu0 0.0
      %3236 = vmatpush1.msra.mxu0 %v3207
      %3237 = vmatprep.subr.mxu0 0.0
      %3238 = vmatpush1.msra.mxu0 %v3188
      %3239 = vmatprep.subr.mxu0 0.0
      %3240 = vmatpush1.msra.mxu0 %v3187
      %3241 = vmatprep.subr.mxu0 0.0
      %3242 = vmatpush2.msra.mxu0 0.0
      %3243 = vmatprep.subr.mxu0 0.0
      %3244 = vmatpush2.msra.mxu0 0.0
      %3245 = vmatprep.subr.mxu0 0.0
      %3246 = vmatpush2.msra.mxu0 0.0
      %3247 = vmatprep.subr.mxu0 0.0
      %3248 = vmatpush2.msra.mxu0 0.0
      %3249 = vmatprep.subr.mxu0 0.0
      %3250 = vmatpush2.msra.mxu0 0.0
      %3251 = vmatprep.subr.mxu0 0.0
      %3252 = vmatpush2.msra.mxu0 0.0
      %3253 = vmatprep.subr.mxu0 0.0
      %3254 = vmatpush2.msra.mxu0 0.0
      %3255 = vmatprep.subr.mxu0 0.0
      %3256 = vmatpush2.msra.mxu0 0.0
      %3257 = vmatprep.subr.mxu0 0.0
      %3258 = vmatpush2.msra.mxu0 0.0
      %3259 = vmatprep.subr.mxu0 0.0
      %3260 = vmatpush2.msra.mxu0 0.0
      %3261 = vmatprep.subr.mxu0 0.0
      %3262 = vmatpush2.msra.mxu0 0.0
      %3263 = vmatprep.subr.mxu0 0.0
      %3264 = vmatpush2.msra.mxu0 0.0
      %3265 = vmatprep.subr.mxu0 0.0
      %3266 = vmatpush2.msra.mxu0 0.0
      %3267 = vmatprep.subr.mxu0 0.0
      %3268 = vmatpush2.msra.mxu0 0.0
      %3269 = vmatprep.subr.mxu0 0.0
      %3270 = vmatpush2.msra.mxu0 0.0
      %3271 = vmatprep.subr.mxu0 0.0
      %3272 = vmatpush2.msra.mxu0 0.0
      %3273 = vmatprep.mubr.f32.mxu0 0.0
      %3274 = vmatmul.mubr.f32.gmra.mxu0 %v3190
      %v3275 = vpop.f32.mrf.mxu0
      %v3276 = vadd.f32 0.0, %v3275
      %v3277 = vpop.f32.mrf.mxu0
      %3278 = vmatprep.mubr.f32.mxu0 0.0
      %3279 = vmatmul.mubr.f32.gmra.mxu0 %v3192
      %v3280 = vpop.f32.mrf.mxu0
      %v3281 = vadd.f32 0.0, %v3280
      %v3282 = vpop.f32.mrf.mxu0
      %3283 = vmatprep.mubr.f32.mxu0 0.0
      %3284 = vmatmul.mubr.f32.gmra.mxu0 %v3194
      %v3285 = vpop.f32.mrf.mxu0
      %v3286 = vadd.f32 0.0, %v3285
      %v3287 = vpop.f32.mrf.mxu0
      %3288 = vmatprep.mubr.f32.mxu0 0.0
      %3289 = vmatmul.mubr.f32.gmra.mxu0 %v3196
      %v3290 = vpop.f32.mrf.mxu0
      %v3291 = vadd.f32 0.0, %v3290
      %v3292 = vpop.f32.mrf.mxu0
      %3293 = vmatprep.mubr.f32.mxu0 0.0
      %3294 = vmatmul.mubr.f32.gmra.mxu0 %v3198
      %v3295 = vpop.f32.mrf.mxu0
      %v3296 = vadd.f32 0.0, %v3295
      %v3297 = vpop.f32.mrf.mxu0
      %3298 = vmatprep.mubr.f32.mxu0 0.0
      %3299 = vmatmul.mubr.f32.gmra.mxu0 %v3200
      %v3300 = vpop.f32.mrf.mxu0
      %v3301 = vadd.f32 0.0, %v3300
      %v3302 = vpop.f32.mrf.mxu0
      %3303 = vmatprep.mubr.f32.mxu0 0.0
      %3304 = vmatmul.mubr.f32.gmra.mxu0 %v3202
      %v3305 = vpop.f32.mrf.mxu0
      %v3306 = vadd.f32 0.0, %v3305
      %v3307 = vpop.f32.mrf.mxu0
      %3308 = vmatprep.mubr.f32.mxu0 0.0
      %3309 = vmatmul.mubr.f32.gmra.mxu0 %v3204
      %v3310 = vpop.f32.mrf.mxu0
      %v3311 = vadd.f32 0.0, %v3310
      %v3312 = vpop.f32.mrf.mxu0
      %3313 = vdwg.mxu0
      %v3314 = vadd.f32 %v3154, %v3276
      %v3315 = vadd.f32 %v3155, %v3281
      %v3316 = vadd.f32 %v3156, %v3286
      %v3317 = vadd.f32 %v3157, %v3291
      %v3318 = vadd.f32 %v3158, %v3296
      %v3319 = vadd.f32 %v3159, %v3301
      %v3320 = vadd.f32 %v3160, %v3306
      %v3321 = vadd.f32 %v3161, %v3311
      %v3322 = vrot.slane %v538, 4
      %v3323 = vrot.slane %v539, 4
      %v3324 = vsel %vm578, %v3322, %v3323
      %s3325 = scalar_lea.vmem %s3, 216
      %v3326 = vld [vmem:[%s3325] sm:$0xff]
      %v3327 = vld [vmem:[%s3325 + $0x8] sm:$0xff]
      %v3328 = vld [vmem:[%s3325 + $0x10] sm:$0xf]
      %v3329 = vsel %vm553, %v3324, 0
      %v3332 = vsel %vm578, %v3328, 0
      %3334 = vmatprep.subr.mxu0 0.0
      %3335 = vmatpush1.msra.mxu0 0.0
      %3336 = vmatprep.subr.mxu0 0.0
      %3337 = vmatpush1.msra.mxu0 0.0
      %3338 = vmatprep.subr.mxu0 0.0
      %3339 = vmatpush1.msra.mxu0 0.0
      %3340 = vmatprep.subr.mxu0 0.0
      %3341 = vmatpush1.msra.mxu0 0.0
      %3342 = vmatprep.subr.mxu0 0.0
      %3343 = vmatpush1.msra.mxu0 0.0
      %3344 = vmatprep.subr.mxu0 0.0
      %3345 = vmatpush1.msra.mxu0 0.0
      %3346 = vmatprep.subr.mxu0 0.0
      %3347 = vmatpush1.msra.mxu0 0.0
      %3348 = vmatprep.subr.mxu0 0.0
      %3349 = vmatpush1.msra.mxu0 0.0
      %3350 = vmatprep.subr.mxu0 0.0
      %3351 = vmatpush1.msra.mxu0 0.0
      %3352 = vmatprep.subr.mxu0 0.0
      %3353 = vmatpush1.msra.mxu0 0.0
      %3354 = vmatprep.subr.mxu0 0.0
      %3355 = vmatpush1.msra.mxu0 0.0
      %3356 = vmatprep.subr.mxu0 0.0
      %3357 = vmatpush1.msra.mxu0 0.0
      %3358 = vmatprep.subr.mxu0 0.0
      %3359 = vmatpush1.msra.mxu0 0.0
      %3360 = vmatprep.subr.mxu0 0.0
      %3361 = vmatpush1.msra.mxu0 %v3332
      %3362 = vmatprep.subr.mxu0 0.0
      %3363 = vmatpush1.msra.mxu0 %v3327
      %3364 = vmatprep.subr.mxu0 0.0
      %3365 = vmatpush1.msra.mxu0 %v3326
      %3366 = vmatprep.subr.mxu0 0.0
      %3367 = vmatpush2.msra.mxu0 0.0
      %3368 = vmatprep.subr.mxu0 0.0
      %3369 = vmatpush2.msra.mxu0 0.0
      %3370 = vmatprep.subr.mxu0 0.0
      %3371 = vmatpush2.msra.mxu0 0.0
      %3372 = vmatprep.subr.mxu0 0.0
      %3373 = vmatpush2.msra.mxu0 0.0
      %3374 = vmatprep.subr.mxu0 0.0
      %3375 = vmatpush2.msra.mxu0 0.0
      %3376 = vmatprep.subr.mxu0 0.0
      %3377 = vmatpush2.msra.mxu0 0.0
      %3378 = vmatprep.subr.mxu0 0.0
      %3379 = vmatpush2.msra.mxu0 0.0
      %3380 = vmatprep.subr.mxu0 0.0
      %3381 = vmatpush2.msra.mxu0 0.0
      %3382 = vmatprep.subr.mxu0 0.0
      %3383 = vmatpush2.msra.mxu0 0.0
      %3384 = vmatprep.subr.mxu0 0.0
      %3385 = vmatpush2.msra.mxu0 0.0
      %3386 = vmatprep.subr.mxu0 0.0
      %3387 = vmatpush2.msra.mxu0 0.0
      %3388 = vmatprep.subr.mxu0 0.0
      %3389 = vmatpush2.msra.mxu0 0.0
      %3390 = vmatprep.subr.mxu0 0.0
      %3391 = vmatpush2.msra.mxu0 0.0
      %3392 = vmatprep.subr.mxu0 0.0
      %3393 = vmatpush2.msra.mxu0 0.0
      %3394 = vmatprep.subr.mxu0 0.0
      %3395 = vmatpush2.msra.mxu0 0.0
      %3396 = vmatprep.subr.mxu0 0.0
      %3397 = vmatpush2.msra.mxu0 0.0
      %3398 = vmatprep.mubr.f32.mxu0 0.0
      %3399 = vmatmul.mubr.f32.gmra.mxu0 %v3192
      %v3400 = vpop.f32.mrf.mxu0
      %v3401 = vadd.f32 0.0, %v3400
      %v3402 = vpop.f32.mrf.mxu0
      %3403 = vmatprep.mubr.f32.mxu0 0.0
      %3404 = vmatmul.mubr.f32.gmra.mxu0 %v3194
      %v3405 = vpop.f32.mrf.mxu0
      %v3406 = vadd.f32 0.0, %v3405
      %v3407 = vpop.f32.mrf.mxu0
      %3408 = vmatprep.mubr.f32.mxu0 0.0
      %3409 = vmatmul.mubr.f32.gmra.mxu0 %v3196
      %v3410 = vpop.f32.mrf.mxu0
      %v3411 = vadd.f32 0.0, %v3410
      %v3412 = vpop.f32.mrf.mxu0
      %3413 = vmatprep.mubr.f32.mxu0 0.0
      %3414 = vmatmul.mubr.f32.gmra.mxu0 %v3198
      %v3415 = vpop.f32.mrf.mxu0
      %v3416 = vadd.f32 0.0, %v3415
      %v3417 = vpop.f32.mrf.mxu0
      %3418 = vmatprep.mubr.f32.mxu0 0.0
      %3419 = vmatmul.mubr.f32.gmra.mxu0 %v3200
      %v3420 = vpop.f32.mrf.mxu0
      %v3421 = vadd.f32 0.0, %v3420
      %v3422 = vpop.f32.mrf.mxu0
      %3423 = vmatprep.mubr.f32.mxu0 0.0
      %3424 = vmatmul.mubr.f32.gmra.mxu0 %v3202
      %v3425 = vpop.f32.mrf.mxu0
      %v3426 = vadd.f32 0.0, %v3425
      %v3427 = vpop.f32.mrf.mxu0
      %3428 = vmatprep.mubr.f32.mxu0 0.0
      %3429 = vmatmul.mubr.f32.gmra.mxu0 %v3204
      %v3430 = vpop.f32.mrf.mxu0
      %v3431 = vadd.f32 0.0, %v3430
      %v3432 = vpop.f32.mrf.mxu0
      %3433 = vmatprep.mubr.f32.mxu0 0.0
      %3434 = vmatmul.mubr.f32.gmra.mxu0 %v3329
      %v3435 = vpop.f32.mrf.mxu0
      %v3436 = vadd.f32 0.0, %v3435
      %v3437 = vpop.f32.mrf.mxu0
      %3438 = vdwg.mxu0
      %v3439 = vadd.f32 %v3314, %v3401
      %v3440 = vadd.f32 %v3315, %v3406
      %v3441 = vadd.f32 %v3316, %v3411
      %v3442 = vadd.f32 %v3317, %v3416
      %v3443 = vadd.f32 %v3318, %v3421
      %v3444 = vadd.f32 %v3319, %v3426
      %v3445 = vadd.f32 %v3320, %v3431
      %v3446 = vadd.f32 %v3321, %v3436
      %v3447 = vrot.slane %v540, 4
      %v3448 = vrot.slane %v541, 4
      %v3449 = vsel %vm578, %v3447, %v3448
      %s3450 = scalar_lea.vmem %s3, 336
      %v3451 = vld [vmem:[%s3450] sm:$0xff]
      %v3452 = vld [vmem:[%s3450 + $0x8] sm:$0xff]
      %v3453 = vld [vmem:[%s3450 + $0x10] sm:$0xf]
      %v3454 = vsel %vm553, %v3449, 0
      %v3457 = vsel %vm578, %v3453, 0
      %3459 = vmatprep.subr.mxu0 0.0
      %3460 = vmatpush1.msra.mxu0 0.0
      %3461 = vmatprep.subr.mxu0 0.0
      %3462 = vmatpush1.msra.mxu0 0.0
      %3463 = vmatprep.subr.mxu0 0.0
      %3464 = vmatpush1.msra.mxu0 0.0
      %3465 = vmatprep.subr.mxu0 0.0
      %3466 = vmatpush1.msra.mxu0 0.0
      %3467 = vmatprep.subr.mxu0 0.0
      %3468 = vmatpush1.msra.mxu0 0.0
      %3469 = vmatprep.subr.mxu0 0.0
      %3470 = vmatpush1.msra.mxu0 0.0
      %3471 = vmatprep.subr.mxu0 0.0
      %3472 = vmatpush1.msra.mxu0 0.0
      %3473 = vmatprep.subr.mxu0 0.0
      %3474 = vmatpush1.msra.mxu0 0.0
      %3475 = vmatprep.subr.mxu0 0.0
      %3476 = vmatpush1.msra.mxu0 0.0
      %3477 = vmatprep.subr.mxu0 0.0
      %3478 = vmatpush1.msra.mxu0 0.0
      %3479 = vmatprep.subr.mxu0 0.0
      %3480 = vmatpush1.msra.mxu0 0.0
      %3481 = vmatprep.subr.mxu0 0.0
      %3482 = vmatpush1.msra.mxu0 0.0
      %3483 = vmatprep.subr.mxu0 0.0
      %3484 = vmatpush1.msra.mxu0 0.0
      %3485 = vmatprep.subr.mxu0 0.0
      %3486 = vmatpush1.msra.mxu0 %v3457
      %3487 = vmatprep.subr.mxu0 0.0
      %3488 = vmatpush1.msra.mxu0 %v3452
      %3489 = vmatprep.subr.mxu0 0.0
      %3490 = vmatpush1.msra.mxu0 %v3451
      %3491 = vmatprep.subr.mxu0 0.0
      %3492 = vmatpush2.msra.mxu0 0.0
      %3493 = vmatprep.subr.mxu0 0.0
      %3494 = vmatpush2.msra.mxu0 0.0
      %3495 = vmatprep.subr.mxu0 0.0
      %3496 = vmatpush2.msra.mxu0 0.0
      %3497 = vmatprep.subr.mxu0 0.0
      %3498 = vmatpush2.msra.mxu0 0.0
      %3499 = vmatprep.subr.mxu0 0.0
      %3500 = vmatpush2.msra.mxu0 0.0
      %3501 = vmatprep.subr.mxu0 0.0
      %3502 = vmatpush2.msra.mxu0 0.0
      %3503 = vmatprep.subr.mxu0 0.0
      %3504 = vmatpush2.msra.mxu0 0.0
      %3505 = vmatprep.subr.mxu0 0.0
      %3506 = vmatpush2.msra.mxu0 0.0
      %3507 = vmatprep.subr.mxu0 0.0
      %3508 = vmatpush2.msra.mxu0 0.0
      %3509 = vmatprep.subr.mxu0 0.0
      %3510 = vmatpush2.msra.mxu0 0.0
      %3511 = vmatprep.subr.mxu0 0.0
      %3512 = vmatpush2.msra.mxu0 0.0
      %3513 = vmatprep.subr.mxu0 0.0
      %3514 = vmatpush2.msra.mxu0 0.0
      %3515 = vmatprep.subr.mxu0 0.0
      %3516 = vmatpush2.msra.mxu0 0.0
      %3517 = vmatprep.subr.mxu0 0.0
      %3518 = vmatpush2.msra.mxu0 0.0
      %3519 = vmatprep.subr.mxu0 0.0
      %3520 = vmatpush2.msra.mxu0 0.0
      %3521 = vmatprep.subr.mxu0 0.0
      %3522 = vmatpush2.msra.mxu0 0.0
      %3523 = vmatprep.mubr.f32.mxu0 0.0
      %3524 = vmatmul.mubr.f32.gmra.mxu0 %v3194
      %v3525 = vpop.f32.mrf.mxu0
      %v3526 = vadd.f32 0.0, %v3525
      %v3527 = vpop.f32.mrf.mxu0
      %3528 = vmatprep.mubr.f32.mxu0 0.0
      %3529 = vmatmul.mubr.f32.gmra.mxu0 %v3196
      %v3530 = vpop.f32.mrf.mxu0
      %v3531 = vadd.f32 0.0, %v3530
      %v3532 = vpop.f32.mrf.mxu0
      %3533 = vmatprep.mubr.f32.mxu0 0.0
      %3534 = vmatmul.mubr.f32.gmra.mxu0 %v3198
      %v3535 = vpop.f32.mrf.mxu0
      %v3536 = vadd.f32 0.0, %v3535
      %v3537 = vpop.f32.mrf.mxu0
      %3538 = vmatprep.mubr.f32.mxu0 0.0
      %3539 = vmatmul.mubr.f32.gmra.mxu0 %v3200
      %v3540 = vpop.f32.mrf.mxu0
      %v3541 = vadd.f32 0.0, %v3540
      %v3542 = vpop.f32.mrf.mxu0
      %3543 = vmatprep.mubr.f32.mxu0 0.0
      %3544 = vmatmul.mubr.f32.gmra.mxu0 %v3202
      %v3545 = vpop.f32.mrf.mxu0
      %v3546 = vadd.f32 0.0, %v3545
      %v3547 = vpop.f32.mrf.mxu0
      %3548 = vmatprep.mubr.f32.mxu0 0.0
      %3549 = vmatmul.mubr.f32.gmra.mxu0 %v3204
      %v3550 = vpop.f32.mrf.mxu0
      %v3551 = vadd.f32 0.0, %v3550
      %v3552 = vpop.f32.mrf.mxu0
      %3553 = vmatprep.mubr.f32.mxu0 0.0
      %3554 = vmatmul.mubr.f32.gmra.mxu0 %v3329
      %v3555 = vpop.f32.mrf.mxu0
      %v3556 = vadd.f32 0.0, %v3555
      %v3557 = vpop.f32.mrf.mxu0
      %3558 = vmatprep.mubr.f32.mxu0 0.0
      %3559 = vmatmul.mubr.f32.gmra.mxu0 %v3454
      %v3560 = vpop.f32.mrf.mxu0
      %v3561 = vadd.f32 0.0, %v3560
      %v3562 = vpop.f32.mrf.mxu0
      %3563 = vdwg.mxu0
      %v3564 = vadd.f32 %v3439, %v3526
      %v3565 = vadd.f32 %v3440, %v3531
      %v3566 = vadd.f32 %v3441, %v3536
      %v3567 = vadd.f32 %v3442, %v3541
      %v3568 = vadd.f32 %v3443, %v3546
      %v3569 = vadd.f32 %v3444, %v3551
      %v3570 = vadd.f32 %v3445, %v3556
      %v3571 = vadd.f32 %v3446, %v3561
      %v3572 = vrot.slane %v542, 4
      %v3573 = vrot.slane %v543, 4
      %v3574 = vsel %vm578, %v3572, %v3573
      %s3575 = scalar_lea.vmem %s3, 456
      %v3576 = vld [vmem:[%s3575] sm:$0xff]
      %v3577 = vld [vmem:[%s3575 + $0x8] sm:$0xff]
      %v3578 = vld [vmem:[%s3575 + $0x10] sm:$0xf]
      %v3579 = vsel %vm553, %v3574, 0
      %v3582 = vsel %vm578, %v3578, 0
      %3584 = vmatprep.subr.mxu0 0.0
      %3585 = vmatpush1.msra.mxu0 0.0
      %3586 = vmatprep.subr.mxu0 0.0
      %3587 = vmatpush1.msra.mxu0 0.0
      %3588 = vmatprep.subr.mxu0 0.0
      %3589 = vmatpush1.msra.mxu0 0.0
      %3590 = vmatprep.subr.mxu0 0.0
      %3591 = vmatpush1.msra.mxu0 0.0
      %3592 = vmatprep.subr.mxu0 0.0
      %3593 = vmatpush1.msra.mxu0 0.0
      %3594 = vmatprep.subr.mxu0 0.0
      %3595 = vmatpush1.msra.mxu0 0.0
      %3596 = vmatprep.subr.mxu0 0.0
      %3597 = vmatpush1.msra.mxu0 0.0
      %3598 = vmatprep.subr.mxu0 0.0
      %3599 = vmatpush1.msra.mxu0 0.0
      %3600 = vmatprep.subr.mxu0 0.0
      %3601 = vmatpush1.msra.mxu0 0.0
      %3602 = vmatprep.subr.mxu0 0.0
      %3603 = vmatpush1.msra.mxu0 0.0
      %3604 = vmatprep.subr.mxu0 0.0
      %3605 = vmatpush1.msra.mxu0 0.0
      %3606 = vmatprep.subr.mxu0 0.0
      %3607 = vmatpush1.msra.mxu0 0.0
      %3608 = vmatprep.subr.mxu0 0.0
      %3609 = vmatpush1.msra.mxu0 0.0
      %3610 = vmatprep.subr.mxu0 0.0
      %3611 = vmatpush1.msra.mxu0 %v3582
      %3612 = vmatprep.subr.mxu0 0.0
      %3613 = vmatpush1.msra.mxu0 %v3577
      %3614 = vmatprep.subr.mxu0 0.0
      %3615 = vmatpush1.msra.mxu0 %v3576
      %3616 = vmatprep.subr.mxu0 0.0
      %3617 = vmatpush2.msra.mxu0 0.0
      %3618 = vmatprep.subr.mxu0 0.0
      %3619 = vmatpush2.msra.mxu0 0.0
      %3620 = vmatprep.subr.mxu0 0.0
      %3621 = vmatpush2.msra.mxu0 0.0
      %3622 = vmatprep.subr.mxu0 0.0
      %3623 = vmatpush2.msra.mxu0 0.0
      %3624 = vmatprep.subr.mxu0 0.0
      %3625 = vmatpush2.msra.mxu0 0.0
      %3626 = vmatprep.subr.mxu0 0.0
      %3627 = vmatpush2.msra.mxu0 0.0
      %3628 = vmatprep.subr.mxu0 0.0
      %3629 = vmatpush2.msra.mxu0 0.0
      %3630 = vmatprep.subr.mxu0 0.0
      %3631 = vmatpush2.msra.mxu0 0.0
      %3632 = vmatprep.subr.mxu0 0.0
      %3633 = vmatpush2.msra.mxu0 0.0
      %3634 = vmatprep.subr.mxu0 0.0
      %3635 = vmatpush2.msra.mxu0 0.0
      %3636 = vmatprep.subr.mxu0 0.0
      %3637 = vmatpush2.msra.mxu0 0.0
      %3638 = vmatprep.subr.mxu0 0.0
      %3639 = vmatpush2.msra.mxu0 0.0
      %3640 = vmatprep.subr.mxu0 0.0
      %3641 = vmatpush2.msra.mxu0 0.0
      %3642 = vmatprep.subr.mxu0 0.0
      %3643 = vmatpush2.msra.mxu0 0.0
      %3644 = vmatprep.subr.mxu0 0.0
      %3645 = vmatpush2.msra.mxu0 0.0
      %3646 = vmatprep.subr.mxu0 0.0
      %3647 = vmatpush2.msra.mxu0 0.0
      %3648 = vmatprep.mubr.f32.mxu0 0.0
      %3649 = vmatmul.mubr.f32.gmra.mxu0 %v3196
      %v3650 = vpop.f32.mrf.mxu0
      %v3651 = vadd.f32 0.0, %v3650
      %v3652 = vpop.f32.mrf.mxu0
      %3653 = vmatprep.mubr.f32.mxu0 0.0
      %3654 = vmatmul.mubr.f32.gmra.mxu0 %v3198
      %v3655 = vpop.f32.mrf.mxu0
      %v3656 = vadd.f32 0.0, %v3655
      %v3657 = vpop.f32.mrf.mxu0
      %3658 = vmatprep.mubr.f32.mxu0 0.0
      %3659 = vmatmul.mubr.f32.gmra.mxu0 %v3200
      %v3660 = vpop.f32.mrf.mxu0
      %v3661 = vadd.f32 0.0, %v3660
      %v3662 = vpop.f32.mrf.mxu0
      %3663 = vmatprep.mubr.f32.mxu0 0.0
      %3664 = vmatmul.mubr.f32.gmra.mxu0 %v3202
      %v3665 = vpop.f32.mrf.mxu0
      %v3666 = vadd.f32 0.0, %v3665
      %v3667 = vpop.f32.mrf.mxu0
      %3668 = vmatprep.mubr.f32.mxu0 0.0
      %3669 = vmatmul.mubr.f32.gmra.mxu0 %v3204
      %v3670 = vpop.f32.mrf.mxu0
      %v3671 = vadd.f32 0.0, %v3670
      %v3672 = vpop.f32.mrf.mxu0
      %3673 = vmatprep.mubr.f32.mxu0 0.0
      %3674 = vmatmul.mubr.f32.gmra.mxu0 %v3329
      %v3675 = vpop.f32.mrf.mxu0
      %v3676 = vadd.f32 0.0, %v3675
      %v3677 = vpop.f32.mrf.mxu0
      %3678 = vmatprep.mubr.f32.mxu0 0.0
      %3679 = vmatmul.mubr.f32.gmra.mxu0 %v3454
      %v3680 = vpop.f32.mrf.mxu0
      %v3681 = vadd.f32 0.0, %v3680
      %v3682 = vpop.f32.mrf.mxu0
      %3683 = vmatprep.mubr.f32.mxu0 0.0
      %3684 = vmatmul.mubr.f32.gmra.mxu0 %v3579
      %v3685 = vpop.f32.mrf.mxu0
      %v3686 = vadd.f32 0.0, %v3685
      %v3687 = vpop.f32.mrf.mxu0
      %3688 = vdwg.mxu0
      %v3689 = vadd.f32 %v3564, %v3651
      %v3690 = vadd.f32 %v3565, %v3656
      %v3691 = vadd.f32 %v3566, %v3661
      %v3692 = vadd.f32 %v3567, %v3666
      %v3693 = vadd.f32 %v3568, %v3671
      %v3694 = vadd.f32 %v3569, %v3676
      %v3695 = vadd.f32 %v3570, %v3681
      %v3696 = vadd.f32 %v3571, %v3686
      %v3697 = vrot.slane %v544, 4
      %v3698 = vrot.slane %v545, 4
      %v3699 = vsel %vm578, %v3697, %v3698
      %s3700 = scalar_lea.vmem %s3, 576
      %v3701 = vld [vmem:[%s3700] sm:$0xff]
      %v3702 = vld [vmem:[%s3700 + $0x8] sm:$0xff]
      %v3703 = vld [vmem:[%s3700 + $0x10] sm:$0xf]
      %v3704 = vsel %vm553, %v3699, 0
      %v3707 = vsel %vm578, %v3703, 0
      %3709 = vmatprep.subr.mxu0 0.0
      %3710 = vmatpush1.msra.mxu0 0.0
      %3711 = vmatprep.subr.mxu0 0.0
      %3712 = vmatpush1.msra.mxu0 0.0
      %3713 = vmatprep.subr.mxu0 0.0
      %3714 = vmatpush1.msra.mxu0 0.0
      %3715 = vmatprep.subr.mxu0 0.0
      %3716 = vmatpush1.msra.mxu0 0.0
      %3717 = vmatprep.subr.mxu0 0.0
      %3718 = vmatpush1.msra.mxu0 0.0
      %3719 = vmatprep.subr.mxu0 0.0
      %3720 = vmatpush1.msra.mxu0 0.0
      %3721 = vmatprep.subr.mxu0 0.0
      %3722 = vmatpush1.msra.mxu0 0.0
      %3723 = vmatprep.subr.mxu0 0.0
      %3724 = vmatpush1.msra.mxu0 0.0
      %3725 = vmatprep.subr.mxu0 0.0
      %3726 = vmatpush1.msra.mxu0 0.0
      %3727 = vmatprep.subr.mxu0 0.0
      %3728 = vmatpush1.msra.mxu0 0.0
      %3729 = vmatprep.subr.mxu0 0.0
      %3730 = vmatpush1.msra.mxu0 0.0
      %3731 = vmatprep.subr.mxu0 0.0
      %3732 = vmatpush1.msra.mxu0 0.0
      %3733 = vmatprep.subr.mxu0 0.0
      %3734 = vmatpush1.msra.mxu0 0.0
      %3735 = vmatprep.subr.mxu0 0.0
      %3736 = vmatpush1.msra.mxu0 %v3707
      %3737 = vmatprep.subr.mxu0 0.0
      %3738 = vmatpush1.msra.mxu0 %v3702
      %3739 = vmatprep.subr.mxu0 0.0
      %3740 = vmatpush1.msra.mxu0 %v3701
      %3741 = vmatprep.subr.mxu0 0.0
      %3742 = vmatpush2.msra.mxu0 0.0
      %3743 = vmatprep.subr.mxu0 0.0
      %3744 = vmatpush2.msra.mxu0 0.0
      %3745 = vmatprep.subr.mxu0 0.0
      %3746 = vmatpush2.msra.mxu0 0.0
      %3747 = vmatprep.subr.mxu0 0.0
      %3748 = vmatpush2.msra.mxu0 0.0
      %3749 = vmatprep.subr.mxu0 0.0
      %3750 = vmatpush2.msra.mxu0 0.0
      %3751 = vmatprep.subr.mxu0 0.0
      %3752 = vmatpush2.msra.mxu0 0.0
      %3753 = vmatprep.subr.mxu0 0.0
      %3754 = vmatpush2.msra.mxu0 0.0
      %3755 = vmatprep.subr.mxu0 0.0
      %3756 = vmatpush2.msra.mxu0 0.0
      %3757 = vmatprep.subr.mxu0 0.0
      %3758 = vmatpush2.msra.mxu0 0.0
      %3759 = vmatprep.subr.mxu0 0.0
      %3760 = vmatpush2.msra.mxu0 0.0
      %3761 = vmatprep.subr.mxu0 0.0
      %3762 = vmatpush2.msra.mxu0 0.0
      %3763 = vmatprep.subr.mxu0 0.0
      %3764 = vmatpush2.msra.mxu0 0.0
      %3765 = vmatprep.subr.mxu0 0.0
      %3766 = vmatpush2.msra.mxu0 0.0
      %3767 = vmatprep.subr.mxu0 0.0
      %3768 = vmatpush2.msra.mxu0 0.0
      %3769 = vmatprep.subr.mxu0 0.0
      %3770 = vmatpush2.msra.mxu0 0.0
      %3771 = vmatprep.subr.mxu0 0.0
      %3772 = vmatpush2.msra.mxu0 0.0
      %3773 = vmatprep.mubr.f32.mxu0 0.0
      %3774 = vmatmul.mubr.f32.gmra.mxu0 %v3198
      %v3775 = vpop.f32.mrf.mxu0
      %v3776 = vadd.f32 0.0, %v3775
      %v3777 = vpop.f32.mrf.mxu0
      %3778 = vmatprep.mubr.f32.mxu0 0.0
      %3779 = vmatmul.mubr.f32.gmra.mxu0 %v3200
      %v3780 = vpop.f32.mrf.mxu0
      %v3781 = vadd.f32 0.0, %v3780
      %v3782 = vpop.f32.mrf.mxu0
      %3783 = vmatprep.mubr.f32.mxu0 0.0
      %3784 = vmatmul.mubr.f32.gmra.mxu0 %v3202
      %v3785 = vpop.f32.mrf.mxu0
      %v3786 = vadd.f32 0.0, %v3785
      %v3787 = vpop.f32.mrf.mxu0
      %3788 = vmatprep.mubr.f32.mxu0 0.0
      %3789 = vmatmul.mubr.f32.gmra.mxu0 %v3204
      %v3790 = vpop.f32.mrf.mxu0
      %v3791 = vadd.f32 0.0, %v3790
      %v3792 = vpop.f32.mrf.mxu0
      %3793 = vmatprep.mubr.f32.mxu0 0.0
      %3794 = vmatmul.mubr.f32.gmra.mxu0 %v3329
      %v3795 = vpop.f32.mrf.mxu0
      %v3796 = vadd.f32 0.0, %v3795
      %v3797 = vpop.f32.mrf.mxu0
      %3798 = vmatprep.mubr.f32.mxu0 0.0
      %3799 = vmatmul.mubr.f32.gmra.mxu0 %v3454
      %v3800 = vpop.f32.mrf.mxu0
      %v3801 = vadd.f32 0.0, %v3800
      %v3802 = vpop.f32.mrf.mxu0
      %3803 = vmatprep.mubr.f32.mxu0 0.0
      %3804 = vmatmul.mubr.f32.gmra.mxu0 %v3579
      %v3805 = vpop.f32.mrf.mxu0
      %v3806 = vadd.f32 0.0, %v3805
      %v3807 = vpop.f32.mrf.mxu0
      %3808 = vmatprep.mubr.f32.mxu0 0.0
      %3809 = vmatmul.mubr.f32.gmra.mxu0 %v3704
      %v3810 = vpop.f32.mrf.mxu0
      %v3811 = vadd.f32 0.0, %v3810
      %v3812 = vpop.f32.mrf.mxu0
      %3813 = vdwg.mxu0
      %v3814 = vadd.f32 %v3689, %v3776
      %v3815 = vadd.f32 %v3690, %v3781
      %v3816 = vadd.f32 %v3691, %v3786
      %v3817 = vadd.f32 %v3692, %v3791
      %v3818 = vadd.f32 %v3693, %v3796
      %v3819 = vadd.f32 %v3694, %v3801
      %v3820 = vadd.f32 %v3695, %v3806
      %v3821 = vadd.f32 %v3696, %v3811
      %v3822 = vld [vmem:[%s4] sm:$0x1]
      %v3824 = vlaneseq
      %v3825 = vshrl.u32 %v3824, 7
      %v3826 = vsub.s32 0, %v3825
      %v3827 = vrot.slane %v3822, %v3826
      %v3829 = vadd.f32 %v3814, %v3827
      %v3830 = vadd.f32 %v3815, %v3827
      %v3831 = vadd.f32 %v3816, %v3827
      %v3832 = vadd.f32 %v3817, %v3827
      %v3833 = vadd.f32 %v3818, %v3827
      %v3834 = vadd.f32 %v3819, %v3827
      %v3835 = vadd.f32 %v3820, %v3827
      %v3836 = vadd.f32 %v3821, %v3827
      %v3837 = vmax.f32 %v3829, 0.0
      %v3838 = vmax.f32 %v3830, 0.0
      %v3839 = vmax.f32 %v3831, 0.0
      %v3840 = vmax.f32 %v3832, 0.0
      %v3841 = vmax.f32 %v3833, 0.0
      %v3842 = vmax.f32 %v3834, 0.0
      %v3843 = vmax.f32 %v3835, 0.0
      %v3844 = vmax.f32 %v3836, 0.0
      %3845 = vxpose.xlu0.b32.start [1/16] %v3837, 128
      %3846 = vxpose.xlu0.b32.cont [2/16] %v3838, 128
      %3847 = vxpose.xlu0.b32.cont [3/16] %v3839, 128
      %3848 = vxpose.xlu0.b32.cont [4/16] %v3840, 128
      %3849 = vxpose.xlu0.b32.cont [5/16] %v3841, 128
      %3850 = vxpose.xlu0.b32.cont [6/16] %v3842, 128
      %3851 = vxpose.xlu0.b32.cont [7/16] %v3843, 128
      %3852 = vxpose.xlu0.b32.cont [8/16] %v3844, 128
      %3853 = vxpose.xlu0.b32.cont [9/16] 0.0, 128
      %3854 = vxpose.xlu0.b32.cont [10/16] 0.0, 128
      %3855 = vxpose.xlu0.b32.cont [11/16] 0.0, 128
      %3856 = vxpose.xlu0.b32.cont [12/16] 0.0, 128
      %3857 = vxpose.xlu0.b32.cont [13/16] 0.0, 128
      %3858 = vxpose.xlu0.b32.cont [14/16] 0.0, 128
      %3859 = vxpose.xlu0.b32.cont [15/16] 0.0, 128
      %3860 = vxpose.xlu0.b32.end [16/16] 0.0, 128
      %v3861 = vpop.trf.xlu0
      %v3862 = vpop.trf.xlu0
      %v3863 = vpop.trf.xlu0
      %v3864 = vpop.trf.xlu0
      %v3865 = vpop.trf.xlu0
      %v3866 = vpop.trf.xlu0
      %v3867 = vpop.trf.xlu0
      %v3868 = vpop.trf.xlu0
      %v3869 = vpop.trf.xlu0
      %v3870 = vpop.trf.xlu0
      %v3871 = vpop.trf.xlu0
      %v3872 = vpop.trf.xlu0
      %v3873 = vpop.trf.xlu0
      %v3874 = vpop.trf.xlu0
      %v3875 = vpop.trf.xlu0
      %v3876 = vpop.trf.xlu0
      %vm3877 = vcmask 523264
      %3878 = vst.msk [vmem:[%s224] sm:$0xff] %vm3877, %v3861
      %3879 = vst.msk [vmem:[%s224 + $0x8] sm:$0xff] %vm3877, %v3862
      %vm3880 = vcmask 519168
      %3881 = vst.msk [vmem:[%s224 + $0x10] sm:$0xf] %vm3880, %v3863
      %p3882 = scmp.lt.s32.totalorder %s16, 1
      %s3883 = scalar_select %p3882, %s16, 1
      %s3884 = smul.addr %s3883, 3
      %s3885 = smul.addr %s3884, 8
      %s3886 = scalar_lea.vmem %s5, %s3885
      // Predicated region
      $region41: #{my_model_forward_impl.1} parent=39 // pred_check
        %p3887 = pneg %p144
      $region42: #{my_model_forward_impl.1} parent=39 // pred_check_branch
        %3889 = sbr.rel (%p3887) target = $region44
      $region43: #{my_model_forward_impl.1} parent=39 // pred_region
        _
      $region44: #{my_model_forward_impl.1} parent=39 // pred_fallthru
        _
    $region40: #{my_model_forward_impl.1} parent=5 // pred_fallthru
      _
    %p3890 = scmp.le.s32.totalorder 2, %s11
    // Predicated region
    $region45: #{my_model_forward_impl.1} parent=5 // pred_check
      %p3891 = pneg %p3890
    $region46: #{my_model_forward_impl.1} parent=5 // pred_check_branch
      %3893 = sbr.rel (%p3891) target = $region48
    $region47: #{my_model_forward_impl.1} parent=5 // pred_region
      %s3894 = ssub.s32 %s11, 2
      // Predicated region
      $region49: #{my_model_forward_impl.1} parent=47 // pred_check
        %p3895 = pneg %p150
      $region50: #{my_model_forward_impl.1} parent=47 // pred_check_branch
        %3897 = sbr.rel (%p3895) target = $region52
      $region51: #{my_model_forward_impl.1} parent=47 // pred_region
        %p3898 = scmp.lt.s32.totalorder %s17, 1
        %s3899 = scalar_select %p3898, %s17, 1
        %s3900 = smul.addr %s3899, 3
        %s3901 = smul.addr %s3900, 8
        %s3902 = scalar_lea.vmem %s5, %s3901
      $region52: #{my_model_forward_impl.1} parent=47 // pred_fallthru
        _
    $region48: #{my_model_forward_impl.1} parent=5 // pred_fallthru
      _
  $region6: #{my_model_forward_impl.1} parent=0 // loop_footer
    %s15 = sadd.s32 1, %s11
  $region7: #{my_model_forward_impl.1} parent=0 // loop_footer_branch
    %10 = sbr.rel target = $region3
  $region8: #{my_model_forward_impl.1} parent=0 // loop_exit
    _

</llo_original>
